<compile_context>
chip_gen: v7x
topology: tpu7x:2x2x1
jax: 0.10.0
libtpu: 0.0.40
codegen_flags: <defaults>
</compile_context>

<pallas_src>
import functools
import math

import jax
import jax.numpy as jnp
from jax.experimental import pallas as pl
from jax.experimental.pallas import tpu as pltpu


# -----------------------------------------------------------------------------
# Text-token embedding kernel: the only real (K = 300) embedding matmul.
# The image-token projection (K = C = 3) is pure VPU work and stays in JAX.
# -----------------------------------------------------------------------------
def _text_embed_kernel(txt_ref, w_ref, b_ref, o_ref):
    t = txt_ref[...].astype(jnp.bfloat16)
    e = jnp.dot(t, w_ref[...], preferred_element_type=jnp.float32) + b_ref[...]
    o_ref[...] = e.astype(o_ref.dtype)


def pallas_text_embed(txt2d, w_txt, b_txt):
    M, K = txt2d.shape
    dim = w_txt.shape[1]
    return pl.pallas_call(
        _text_embed_kernel,
        out_shape=jax.ShapeDtypeStruct((M, dim), jnp.float32),
        grid=(1,),
        in_specs=[pl.BlockSpec((M, K), lambda i: (0, 0)),
                  pl.BlockSpec(w_txt.shape, lambda i: (0, 0)),
                  pl.BlockSpec(b_txt.shape, lambda i: (0, 0))],
        out_specs=pl.BlockSpec((M, dim), lambda i: (0, 0)),
        compiler_params=pltpu.CompilerParams(
            dimension_semantics=("arbitrary",),
            vmem_limit_bytes=32 * 1024 * 1024),
    )(txt2d, w_txt, b_txt)


# -----------------------------------------------------------------------------
# Fused encoder STACK kernel: grid = (batch_tiles, depth).  Depth-stacked
# weights are streamed (double-buffered) over the inner "arbitrary" axis while
# the residual stream stays resident in VMEM scratch; HBM writeback only on
# the last layer of each batch tile.
# -----------------------------------------------------------------------------
def _layernorm(x, g, b, eps=1e-5):
    mu = jnp.mean(x, axis=-1, keepdims=True)
    xc = x - mu
    var = jnp.mean(xc * xc, axis=-1, keepdims=True)
    return xc * jax.lax.rsqrt(var + eps) * g + b


def _encoder_stack_kernel(
    x_ref, mask_ref,
    wqkv_ref, bqkv_ref, wo_ref, bo_ref,
    g1_ref, be1_ref, w1_ref, b1_ref, w2_ref, b2_ref, g2_ref, be2_ref,
    o_ref, resid_ref, *, tb, N, heads, head_dim,
):
    D = heads * head_dim
    M = tb * N
    layer = pl.program_id(1)

    # First layer of this batch tile: load the assembled token stream into the
    # resident residual-stream scratch.
    @pl.when(layer == 0)
    def _():
        resid_ref[...] = x_ref[...]

    x = resid_ref[...]                                         # (M, D) f32

    # ---- fused QKV projection: one lane-dense (M, D) @ (D, 3D) bf16 matmul
    qkv = (jnp.dot(x.astype(jnp.bfloat16), wqkv_ref[...],
                   preferred_element_type=jnp.float32) + bqkv_ref[...])
    scale = 1.0 / math.sqrt(head_dim)
    q = (qkv[:, :D] * scale).astype(jnp.bfloat16)
    k = qkv[:, D:2 * D].astype(jnp.bfloat16)
    v = qkv[:, 2 * D:].astype(jnp.bfloat16)

    mask = mask_ref[...].reshape(1, 1, N)                      # additive key mask

    # ---- per-(head) attention; output projection folded into an f32 accumulator
    attn = jnp.zeros((M, D), jnp.float32)
    for h in range(heads):
        sl = slice(h * head_dim, (h + 1) * head_dim)
        qh = q[:, sl].reshape(tb, N, head_dim)
        kh = k[:, sl].reshape(tb, N, head_dim)
        vh = v[:, sl].reshape(tb, N, head_dim)
        s = jax.lax.dot_general(qh, kh, (((2,), (2,)), ((0,), (0,))),
                                preferred_element_type=jnp.float32)   # (tb,N,N)
        s = s + mask
        s = s - jnp.max(s, axis=-1, keepdims=True)
        p = jnp.exp(s)
        p = p * pl.reciprocal(jnp.sum(p, axis=-1, keepdims=True), approx=True)
        oh = jax.lax.dot_general(p.astype(jnp.bfloat16), vh,
                                 (((2,), (1,)), ((0,), (0,))),
                                 preferred_element_type=jnp.float32)  # (tb,N,hd)
        attn = attn + jnp.dot(oh.reshape(M, head_dim).astype(jnp.bfloat16),
                              wo_ref[sl, :],
                              preferred_element_type=jnp.float32)
    attn = attn + bo_ref[...]

    # ---- residual + norm1 ----------------------------------------------------
    y = _layernorm(x + attn, g1_ref[...], be1_ref[...])
    # ---- feed forward (ReLU), bf16 matmuls / f32 accumulation ----------------
    h1 = jnp.maximum(
        jnp.dot(y.astype(jnp.bfloat16), w1_ref[...],
                preferred_element_type=jnp.float32) + b1_ref[...], 0.0)
    ff = (jnp.dot(h1.astype(jnp.bfloat16), w2_ref[...],
                  preferred_element_type=jnp.float32) + b2_ref[...])
    # ---- residual + norm2 ----------------------------------------------------
    z = _layernorm(y + ff, g2_ref[...], be2_ref[...])

    resid_ref[...] = z                                         # stays in VMEM

    @pl.when(layer == pl.num_programs(1) - 1)
    def _():
        o_ref[...] = z.astype(o_ref.dtype)                     # HBM writeback once


def _pick_batch_tile(B, n_pad, dim, mlp_dim, vmem_budget=24 * 1024 * 1024):
    """Largest batch tile (divisor of B) whose rough f32 working set fits the
    per-core VMEM budget; keep >= 2 tiles when possible so the second
    TensorCore (megacore / v7x) has work."""
    def ws_bytes(tb):
        m = tb * n_pad
        return 4 * (m * dim * 6 + 2 * tb * n_pad * n_pad + m * mlp_dim)
    divisors = [d for d in range(1, B + 1) if B % d == 0]
    fitting = [d for d in divisors if ws_bytes(d) <= vmem_budget] or [1]
    tb = max(fitting)
    if B >= 2 and tb == B:
        smaller = [d for d in fitting if d < B]
        if smaller:
            tb = max(smaller)
    return tb


def pallas_encoder_stack(x2d, key_mask, sp, *, heads, tb):
    """x2d: (B*N_pad, D) f32 residual stream, key_mask: (1, N_pad) additive."""
    BM, D = x2d.shape
    N = key_mask.shape[-1]
    B = BM // N
    assert B % tb == 0
    Mtile = tb * N
    head_dim = D // heads
    depth = sp["wqkv"].shape[0]
    F = sp["w1"].shape[-1]

    weights = [sp["wqkv"], sp["bqkv"], sp["wo"], sp["bo"],
               sp["g1"], sp["be1"], sp["w1"], sp["b1"],
               sp["w2"], sp["b2"], sp["g2"], sp["be2"]]

    xmap = lambda i, j: (i, 0)          # constant over depth -> fetched once/tile
    wmap = lambda i, j: (j, 0, 0)       # streamed over the depth axis

    in_specs = [pl.BlockSpec((Mtile, D), xmap),
                pl.BlockSpec(key_mask.shape, lambda i, j: (0, 0))]
    in_specs += [pl.BlockSpec((None,) + tuple(w.shape[1:]), wmap) for w in weights]

    flops_layer = (2 * B * N * D * 3 * D          # fused QKV
                   + 4 * B * N * N * D            # scores + P@V (all heads)
                   + 2 * B * N * D * D            # out projection
                   + 4 * B * N * D * F)           # FFN
    weight_bytes = sum(int(w.size) * w.dtype.itemsize for w in weights)
    cost = pl.CostEstimate(
        flops=int(depth * flops_layer),
        transcendentals=int(depth * B * heads * N * N),
        bytes_accessed=int(2 * x2d.size * 4 + weight_bytes))

    return pl.pallas_call(
        functools.partial(_encoder_stack_kernel,
                          tb=tb, N=N, heads=heads, head_dim=head_dim),
        out_shape=jax.ShapeDtypeStruct((BM, D), jnp.float32),
        grid=(B // tb, depth),
        in_specs=in_specs,
        out_specs=pl.BlockSpec((Mtile, D), xmap),
        scratch_shapes=[pltpu.VMEM((Mtile, D), jnp.float32)],
        compiler_params=pltpu.CompilerParams(
            dimension_semantics=("parallel", "arbitrary"),
            vmem_limit_bytes=32 * 1024 * 1024),
        cost_estimate=cost,
    )(x2d, key_mask, *weights)


# -----------------------------------------------------------------------------
# Full forward pass.
# -----------------------------------------------------------------------------
def context_transformer_forward(pp, img, txt, *, heads, batch_tile=None):
    B, C, H, W = img.shape
    dim = pp["cls_token"].shape[-1]
    T = txt.shape[1]
    mlp_dim = pp["w1"].shape[-1]

    # TODO(synk): frozen pretrained ResNet50 backbone replaced by a stub
    # (adaptive 8x8 average pool); its frozen channel projection is folded
    # into cnn_feature_to_embedding (w_img below).
    pooled = img.reshape(B, C, 8, H // 8, 8, W // 8).mean(axis=(3, 5))      # (B,C,8,8)
    pooled = pooled.transpose(0, 2, 3, 1).reshape(B, 64, C)                 # 'b d h w -> b (h w) d'
    # Image-token projection: K = C (=3) -> plain-JAX VPU work, no MXU kernel.
    img_e = pooled @ pp["w_img"] + pp["b_img"]                              # (B,64,dim)

    # Text-token embedding: the K=300 matmul runs in a Pallas kernel.
    txt_e = pallas_text_embed(txt.astype(jnp.float32).reshape(B * T, -1),
                              pp["w_txt"], pp["b_txt"]).reshape(B, T, dim)

    # Token assembly (tiny plain-JAX glue): cls + pos, concat text, pad to 128k.
    cls = jnp.broadcast_to(pp["cls_token"], (B, 1, dim))
    x = jnp.concatenate([cls, img_e], axis=1) + pp["pos_embedding"]         # (B,65,dim)
    x = jnp.concatenate([x, txt_e], axis=1)                                 # (B,65+T,dim)
    n_tok = x.shape[1]
    n_pad = ((n_tok + 127) // 128) * 128        # lane-aligned sequence length
    x = jnp.pad(x, ((0, 0), (0, n_pad - n_tok), (0, 0)))
    key_mask = jnp.where(jnp.arange(n_pad) < n_tok, 0.0,
                         -1e30).astype(jnp.float32)[None, :]

    # Whole encoder stack as ONE pallas_call, 2-D residual stream (B*N, D).
    tb = batch_tile or _pick_batch_tile(B, n_pad, dim, mlp_dim)
    x2d = x.reshape(B * n_pad, dim)
    x2d = pallas_encoder_stack(x2d, key_mask, pp, heads=heads, tb=tb)

    # mlp_head on the cls token: a few hundred FLOPs -> plain JAX (exact erf GELU).
    # TODO(synk): exact erf-GELU stays outside Mosaic (no clean erf lowering).
    x_cls = x2d.reshape(B, n_pad, dim)[:, 0]
    h = jax.nn.gelu(x_cls @ pp["w_h1"] + pp["b_h1"], approximate=False)
    return h @ pp["w_h2"] + pp["b_h2"]


# -----------------------------------------------------------------------------
# Parameter initialization (PyTorch-layout) and kernel-ready preparation.
# -----------------------------------------------------------------------------
def init_params(key, *, dim, depth, heads, mlp_dim, num_classes, channels):
    del heads  # head count does not change parameter shapes
    keys = iter(jax.random.split(key, 16 + 16 * depth))

    def nrm(shape, scale=0.02):
        return (scale * jax.random.normal(next(keys), shape)).astype(jnp.float32)

    params = dict(
        # stub backbone projection C -> 2048 (frozen)
        w_stub=nrm((channels, 2048)), b_stub=nrm((2048,)),
        # cnn_feature_to_embedding: Linear(2048, dim)
        w_cnn=nrm((2048, dim)), b_cnn=nrm((dim,)),
        # fasttext_feature_to_embedding: Linear(300, dim)
        w_txt=nrm((300, dim)), b_txt=nrm((dim,)),
        # cls token / pos embedding (torch.randn)
        cls_token=jax.random.normal(next(keys), (1, 1, dim), jnp.float32),
        pos_embedding=jax.random.normal(next(keys), (1, 64 + 1, dim), jnp.float32),
        # mlp_head: Linear(dim, mlp_dim) -> GELU -> Linear(mlp_dim, num_classes)
        w_h1=nrm((dim, mlp_dim)), b_h1=nrm((mlp_dim,)),
        w_h2=nrm((mlp_dim, num_classes)), b_h2=nrm((num_classes,)),
        layers=[],
    )
    for _ in range(depth):
        params["layers"].append(dict(
            wqkv=nrm((dim, 3 * dim)), bqkv=nrm((3 * dim,)),
            wo=nrm((dim, dim)), bo=nrm((dim,)),
            g1=jnp.ones((dim,), jnp.float32), be1=jnp.zeros((dim,), jnp.float32),
            w1=nrm((dim, mlp_dim)), b1=nrm((mlp_dim,)),
            w2=nrm((mlp_dim, dim)), b2=nrm((dim,)),
            g2=jnp.ones((dim,), jnp.float32), be2=jnp.zeros((dim,), jnp.float32),
        ))
    return params


def prepare_params(params):
    """PyTorch-layout params -> kernel-ready layouts.

    * folds the frozen stub-backbone projection into cnn_feature_to_embedding
    * stacks per-layer weights along a leading depth axis (depth-grid streaming)
    * casts MXU matmul weights to bfloat16 (f32 accumulation in-kernel)
    """
    dim = params["cls_token"].shape[-1]
    L = params["layers"]
    depth = len(L)
    F = L[0]["w1"].shape[1]
    stack = lambda k: jnp.stack([lp[k] for lp in L])

    pp = dict(
        cls_token=params["cls_token"],
        pos_embedding=params["pos_embedding"],
        w_h1=params["w_h1"], b_h1=params["b_h1"],
        w_h2=params["w_h2"], b_h2=params["b_h2"],
        # folded (stub backbone) @ (cnn_feature_to_embedding): (C, dim), f32 (K=C)
        w_img=params["w_stub"] @ params["w_cnn"],
        b_img=params["b_stub"] @ params["w_cnn"] + params["b_cnn"],
        w_txt=params["w_txt"].astype(jnp.bfloat16),
        b_txt=params["b_txt"].reshape(1, dim),
        # depth-stacked encoder weights
        wqkv=stack("wqkv").astype(jnp.bfloat16),                 # (depth, dim, 3dim)
        bqkv=stack("bqkv").reshape(depth, 1, 3 * dim),
        wo=stack("wo").astype(jnp.bfloat16),                     # (depth, dim, dim)
        bo=stack("bo").reshape(depth, 1, dim),
        g1=stack("g1").reshape(depth, 1, dim),
        be1=stack("be1").reshape(depth, 1, dim),
        w1=stack("w1").astype(jnp.bfloat16),                     # (depth, dim, F)
        b1=stack("b1").reshape(depth, 1, F),
        w2=stack("w2").astype(jnp.bfloat16),                     # (depth, F, dim)
        b2=stack("b2").reshape(depth, 1, dim),
        g2=stack("g2").reshape(depth, 1, dim),
        be2=stack("be2").reshape(depth, 1, dim),
    )
    return pp


if __name__ == "__main__":
    # Small, module-consistent config.
    B, C, Himg, Wimg = 2, 3, 16, 16          # img: NCHW
    T = 8                                    # number of fasttext tokens
    dim, depth, heads, mlp_dim, num_classes = 32, 2, 4, 64, 5

    key = jax.random.PRNGKey(0)
    k_img, k_txt, k_par = jax.random.split(key, 3)
    img = jax.random.normal(k_img, (B, C, Himg, Wimg), jnp.float32)
    txt = jax.random.normal(k_txt, (B, T, 300), jnp.float32)

    params = init_params(
        k_par, dim=dim, depth=depth, heads=heads,
        mlp_dim=mlp_dim, num_classes=num_classes, channels=C,
    )
    pp = prepare_params(params)

    fwd = jax.jit(functools.partial(context_transformer_forward, heads=heads))
    logits = fwd(pp, img, txt)
    logits = jax.block_until_ready(logits)
    assert logits.shape == (B, num_classes)
    assert bool(jnp.all(jnp.isfinite(logits)))
    print("KERNEL_OK")
</pallas_src>

<mosaic_0001>
module attributes {stable_mosaic.version = 11 : i64} {
  func.func @_text_embed_kernel(%arg0: i32, %arg1: memref<16x300xf32, #tpu.memory_space<vmem>>, %arg2: memref<300x32xbf16, #tpu.memory_space<vmem>>, %arg3: memref<1x32xf32, #tpu.memory_space<vmem>>, %arg4: memref<16x32xf32, #tpu.memory_space<vmem>>) attributes {dimension_semantics = [#tpu.dimension_semantics<arbitrary>], iteration_bounds = array<i64: 1>, scalar_prefetch = 0 : i64, scratch_operands = 0 : i64, tpu.core_type = #tpu.core_type<tc>, window_params = [{pipeline_mode = #tpu.pipeline_mode<synchronous>, transform_indices = @transform_0, window_bounds = array<i64: 16, 300>}, {pipeline_mode = #tpu.pipeline_mode<synchronous>, transform_indices = @transform_1, window_bounds = array<i64: 300, 32>}, {pipeline_mode = #tpu.pipeline_mode<synchronous>, transform_indices = @transform_2, window_bounds = array<i64: 1, 32>}, {pipeline_mode = #tpu.pipeline_mode<synchronous>, transform_indices = @transform_3, window_bounds = array<i64: 16, 32>}]} {
    %c0 = arith.constant 0 : index
    %c0_0 = arith.constant 0 : index
    %0 = vector.load %arg1[%c0, %c0_0] : memref<16x300xf32, #tpu.memory_space<vmem>>, vector<16x300xf32>
    %1 = arith.truncf %0 : vector<16x300xf32> to vector<16x300xbf16>
    %c0_1 = arith.constant 0 : index
    %c0_2 = arith.constant 0 : index
    %2 = vector.load %arg2[%c0_1, %c0_2] : memref<300x32xbf16, #tpu.memory_space<vmem>>, vector<300x32xbf16>
    %cst = arith.constant dense<0.000000e+00> : vector<16x32xf32>
    %3 = tpu.matmul %1, %2, %cst {dimension_numbers = #tpu.dot_dimension_numbers<[1], [0], [0], [1], [0, 0, 1, 1], [], []>} : vector<16x300xbf16>, vector<300x32xbf16>, vector<16x32xf32> -> vector<16x32xf32>
    %c0_3 = arith.constant 0 : index
    %c0_4 = arith.constant 0 : index
    %4 = vector.load %arg3[%c0_3, %c0_4] : memref<1x32xf32, #tpu.memory_space<vmem>>, vector<1x32xf32>
    %5 = vector.broadcast %4 : vector<1x32xf32> to vector<16x32xf32>
    %6 = arith.addf %3, %5 : vector<16x32xf32>
    %c0_5 = arith.constant 0 : index
    %c0_6 = arith.constant 0 : index
    %7 = vector.load %arg4[%c0_5, %c0_6] : memref<16x32xf32, #tpu.memory_space<vmem>>, vector<16x32xf32>
    tpu.vector_store %arg4[%c0_5, %c0_6], %6 {strides = array<i32>} : memref<16x32xf32, #tpu.memory_space<vmem>>, vector<16x32xf32>,
    return
  }
  func.func @transform_0(%arg0: i32) -> (i32, i32) {
    %c0_i32 = arith.constant 0 : i32
    %c0_i32_0 = arith.constant 0 : i32
    %c0_i32_1 = arith.constant 0 : i32
    return %c0_i32, %c0_i32_0 : i32, i32
  }
  func.func @transform_1(%arg0: i32) -> (i32, i32) {
    %c0_i32 = arith.constant 0 : i32
    %c0_i32_0 = arith.constant 0 : i32
    %c0_i32_1 = arith.constant 0 : i32
    return %c0_i32, %c0_i32_0 : i32, i32
  }
  func.func @transform_2(%arg0: i32) -> (i32, i32) {
    %c0_i32 = arith.constant 0 : i32
    %c0_i32_0 = arith.constant 0 : i32
    %c0_i32_1 = arith.constant 0 : i32
    return %c0_i32, %c0_i32_0 : i32, i32
  }
  func.func @transform_3(%arg0: i32) -> (i32, i32) {
    %c0_i32 = arith.constant 0 : i32
    %c0_i32_0 = arith.constant 0 : i32
    %c0_i32_1 = arith.constant 0 : i32
    return %c0_i32, %c0_i32_0 : i32, i32
  }
}

module attributes {stable_mosaic.version = 11 : i64} {
  func.func @_encoder_stack_kernel(%arg0: i32, %arg1: i32, %arg2: memref<128x32xf32, #tpu.memory_space<vmem>>, %arg3: memref<1x128xf32, #tpu.memory_space<vmem>>, %arg4: memref<1x32x96xbf16, #tpu.memory_space<vmem>>, %arg5: memref<1x1x96xf32, #tpu.memory_space<vmem>>, %arg6: memref<1x32x32xbf16, #tpu.memory_space<vmem>>, %arg7: memref<1x1x32xf32, #tpu.memory_space<vmem>>, %arg8: memref<1x1x32xf32, #tpu.memory_space<vmem>>, %arg9: memref<1x1x32xf32, #tpu.memory_space<vmem>>, %arg10: memref<1x32x64xbf16, #tpu.memory_space<vmem>>, %arg11: memref<1x1x64xf32, #tpu.memory_space<vmem>>, %arg12: memref<1x64x32xbf16, #tpu.memory_space<vmem>>, %arg13: memref<1x1x32xf32, #tpu.memory_space<vmem>>, %arg14: memref<1x1x32xf32, #tpu.memory_space<vmem>>, %arg15: memref<1x1x32xf32, #tpu.memory_space<vmem>>, %arg16: memref<128x32xf32, #tpu.memory_space<vmem>>, %arg17: memref<128x32xf32, #tpu.memory_space<vmem>>) attributes {dimension_semantics = [#tpu.dimension_semantics<parallel>, #tpu.dimension_semantics<arbitrary>], iteration_bounds = array<i64: 2, 2>, scalar_prefetch = 0 : i64, scratch_operands = 1 : i64, tpu.core_type = #tpu.core_type<tc>, window_params = [{transform_indices = @transform_0, window_bounds = array<i64: 128, 32>}, {pipeline_mode = #tpu.pipeline_mode<synchronous>, transform_indices = @transform_1, window_bounds = array<i64: 1, 128>}, {transform_indices = @transform_2, window_bounds = array<i64: 1, 32, 96>}, {transform_indices = @transform_3, window_bounds = array<i64: 1, 1, 96>}, {transform_indices = @transform_4, window_bounds = array<i64: 1, 32, 32>}, {transform_indices = @transform_5, window_bounds = array<i64: 1, 1, 32>}, {transform_indices = @transform_6, window_bounds = array<i64: 1, 1, 32>}, {transform_indices = @transform_7, window_bounds = array<i64: 1, 1, 32>}, {transform_indices = @transform_8, window_bounds = array<i64: 1, 32, 64>}, {transform_indices = @transform_9, window_bounds = array<i64: 1, 1, 64>}, {transform_indices = @transform_10, window_bounds = array<i64: 1, 64, 32>}, {transform_indices = @transform_11, window_bounds = array<i64: 1, 1, 32>}, {transform_indices = @transform_12, window_bounds = array<i64: 1, 1, 32>}, {transform_indices = @transform_13, window_bounds = array<i64: 1, 1, 32>}, {transform_indices = @transform_14, window_bounds = array<i64: 128, 32>}]} {
    %c0_i32 = arith.constant 0 : i32
    %0 = arith.cmpi eq, %arg1, %c0_i32 : i32
    %1 = arith.extui %0 : i1 to i32
    %c0_i32_0 = arith.constant 0 : i32
    %2 = arith.cmpi ne, %1, %c0_i32_0 : i32
    scf.if %2 {
      %c0_84 = arith.constant 0 : index
      %c0_85 = arith.constant 0 : index
      %207 = vector.load %arg2[%c0_84, %c0_85] : memref<128x32xf32, #tpu.memory_space<vmem>>, vector<128x32xf32>
      %c0_86 = arith.constant 0 : index
      %c0_87 = arith.constant 0 : index
      %208 = vector.load %arg17[%c0_86, %c0_87] : memref<128x32xf32, #tpu.memory_space<vmem>>, vector<128x32xf32>
      tpu.vector_store %arg17[%c0_86, %c0_87], %207 {strides = array<i32>} : memref<128x32xf32, #tpu.memory_space<vmem>>, vector<128x32xf32>,
    } else {
    }
    %c0 = arith.constant 0 : index
    %c0_1 = arith.constant 0 : index
    %3 = vector.load %arg17[%c0, %c0_1] : memref<128x32xf32, #tpu.memory_space<vmem>>, vector<128x32xf32>
    %4 = arith.truncf %3 : vector<128x32xf32> to vector<128x32xbf16>
    %c0_2 = arith.constant 0 : index
    %c0_3 = arith.constant 0 : index
    %c0_4 = arith.constant 0 : index
    %5 = vector.load %arg4[%c0_2, %c0_3, %c0_4] : memref<1x32x96xbf16, #tpu.memory_space<vmem>>, vector<1x32x96xbf16>
    %6 = vector.shape_cast %5 : vector<1x32x96xbf16> to vector<32x96xbf16>
    %cst = arith.constant dense<0.000000e+00> : vector<128x96xf32>
    %7 = tpu.matmul %4, %6, %cst {dimension_numbers = #tpu.dot_dimension_numbers<[1], [0], [0], [1], [0, 0, 1, 1], [], []>} : vector<128x32xbf16>, vector<32x96xbf16>, vector<128x96xf32> -> vector<128x96xf32>
    %c0_5 = arith.constant 0 : index
    %c0_6 = arith.constant 0 : index
    %c0_7 = arith.constant 0 : index
    %8 = vector.load %arg5[%c0_5, %c0_6, %c0_7] : memref<1x1x96xf32, #tpu.memory_space<vmem>>, vector<1x1x96xf32>
    %9 = vector.shape_cast %8 : vector<1x1x96xf32> to vector<1x96xf32>
    %10 = vector.broadcast %9 : vector<1x96xf32> to vector<128x96xf32>
    %11 = arith.addf %7, %10 : vector<128x96xf32>
    %12 = vector.extract_strided_slice %11 {offsets = [0, 0], sizes = [128, 32], strides = [1, 1]} : vector<128x96xf32> to vector<128x32xf32>
    %cst_8 = arith.constant 0.353553385 : f32
    %13 = vector.broadcast %cst_8 : f32 to vector<128x32xf32>
    %14 = arith.mulf %12, %13 : vector<128x32xf32>
    %15 = arith.truncf %14 : vector<128x32xf32> to vector<128x32xbf16>
    %16 = vector.extract_strided_slice %11 {offsets = [0, 32], sizes = [128, 32], strides = [1, 1]} : vector<128x96xf32> to vector<128x32xf32>
    %17 = arith.truncf %16 : vector<128x32xf32> to vector<128x32xbf16>
    %18 = vector.extract_strided_slice %11 {offsets = [0, 64], sizes = [128, 32], strides = [1, 1]} : vector<128x96xf32> to vector<128x32xf32>
    %19 = arith.truncf %18 : vector<128x32xf32> to vector<128x32xbf16>
    %c0_9 = arith.constant 0 : index
    %c0_10 = arith.constant 0 : index
    %20 = vector.load %arg3[%c0_9, %c0_10] : memref<1x128xf32, #tpu.memory_space<vmem>>, vector<1x128xf32>
    %21 = vector.shape_cast %20 : vector<1x128xf32> to vector<1x1x128xf32>
    %cst_11 = arith.constant 0.000000e+00 : f32
    %22 = vector.broadcast %cst_11 : f32 to vector<128x32xf32>
    %23 = vector.extract_strided_slice %15 {offsets = [0, 0], sizes = [128, 8], strides = [1, 1]} : vector<128x32xbf16> to vector<128x8xbf16>
    %24 = vector.shape_cast %23 : vector<128x8xbf16> to vector<1x128x8xbf16>
    %25 = vector.extract_strided_slice %17 {offsets = [0, 0], sizes = [128, 8], strides = [1, 1]} : vector<128x32xbf16> to vector<128x8xbf16>
    %26 = vector.shape_cast %25 : vector<128x8xbf16> to vector<1x128x8xbf16>
    %27 = vector.extract_strided_slice %19 {offsets = [0, 0], sizes = [128, 8], strides = [1, 1]} : vector<128x32xbf16> to vector<128x8xbf16>
    %28 = vector.shape_cast %27 : vector<128x8xbf16> to vector<1x128x8xbf16>
    %cst_12 = arith.constant dense<0.000000e+00> : vector<1x128x128xf32>
    %29 = tpu.matmul %24, %26, %cst_12 {dimension_numbers = #tpu.dot_dimension_numbers<[2], [2], [1], [1], [0, 0, 0, 1, 1, 1], [0], [0]>} : vector<1x128x8xbf16>, vector<1x128x8xbf16>, vector<1x128x128xf32> -> vector<1x128x128xf32>
    %30 = vector.broadcast %21 : vector<1x1x128xf32> to vector<1x128x128xf32>
    %31 = arith.addf %29, %30 : vector<1x128x128xf32>
    %cst_13 = arith.constant dense<0xFF800000> : vector<1x128xf32>
    %32 = vector.multi_reduction <maximumf>, %31, %cst_13 [2] : vector<1x128x128xf32> to vector<1x128xf32>
    %33 = vector.shape_cast %32 : vector<1x128xf32> to vector<1x128x1xf32>
    %34 = vector.broadcast %33 : vector<1x128x1xf32> to vector<1x128x128xf32>
    %35 = arith.subf %31, %34 : vector<1x128x128xf32>
    %36 = math.exp %35 : vector<1x128x128xf32>
    %cst_14 = arith.constant dense<0.000000e+00> : vector<1x128xf32>
    %37 = vector.multi_reduction <add>, %36, %cst_14 [2] : vector<1x128x128xf32> to vector<1x128xf32>
    %38 = vector.shape_cast %37 : vector<1x128xf32> to vector<1x128x1xf32>
    %39 = tpu.reciprocal %38 {approx = true} : vector<1x128x1xf32> -> vector<1x128x1xf32>
    %40 = vector.broadcast %39 : vector<1x128x1xf32> to vector<1x128x128xf32>
    %41 = arith.mulf %36, %40 : vector<1x128x128xf32>
    %42 = arith.truncf %41 : vector<1x128x128xf32> to vector<1x128x128xbf16>
    %cst_15 = arith.constant dense<0.000000e+00> : vector<1x128x8xf32>
    %43 = tpu.matmul %42, %28, %cst_15 {dimension_numbers = #tpu.dot_dimension_numbers<[2], [1], [1], [2], [0, 0, 0, 1, 1, 2], [0], [0]>} : vector<1x128x128xbf16>, vector<1x128x8xbf16>, vector<1x128x8xf32> -> vector<1x128x8xf32>
    %44 = vector.shape_cast %43 : vector<1x128x8xf32> to vector<128x8xf32>
    %45 = arith.truncf %44 : vector<128x8xf32> to vector<128x8xbf16>
    %c0_16 = arith.constant 0 : index
    %c0_17 = arith.constant 0 : index
    %c0_18 = arith.constant 0 : index
    %46 = vector.load %arg6[%c0_16, %c0_17, %c0_18] : memref<1x32x32xbf16, #tpu.memory_space<vmem>>, vector<1x8x32xbf16>
    %47 = vector.shape_cast %46 : vector<1x8x32xbf16> to vector<8x32xbf16>
    %cst_19 = arith.constant dense<0.000000e+00> : vector<128x32xf32>
    %48 = tpu.matmul %45, %47, %cst_19 {dimension_numbers = #tpu.dot_dimension_numbers<[1], [0], [0], [1], [0, 0, 1, 1], [], []>} : vector<128x8xbf16>, vector<8x32xbf16>, vector<128x32xf32> -> vector<128x32xf32>
    %49 = arith.addf %22, %48 : vector<128x32xf32>
    %50 = vector.extract_strided_slice %15 {offsets = [0, 8], sizes = [128, 8], strides = [1, 1]} : vector<128x32xbf16> to vector<128x8xbf16>
    %51 = vector.shape_cast %50 : vector<128x8xbf16> to vector<1x128x8xbf16>
    %52 = vector.extract_strided_slice %17 {offsets = [0, 8], sizes = [128, 8], strides = [1, 1]} : vector<128x32xbf16> to vector<128x8xbf16>
    %53 = vector.shape_cast %52 : vector<128x8xbf16> to vector<1x128x8xbf16>
    %54 = vector.extract_strided_slice %19 {offsets = [0, 8], sizes = [128, 8], strides = [1, 1]} : vector<128x32xbf16> to vector<128x8xbf16>
    %55 = vector.shape_cast %54 : vector<128x8xbf16> to vector<1x128x8xbf16>
    %cst_20 = arith.constant dense<0.000000e+00> : vector<1x128x128xf32>
    %56 = tpu.matmul %51, %53, %cst_20 {dimension_numbers = #tpu.dot_dimension_numbers<[2], [2], [1], [1], [0, 0, 0, 1, 1, 1], [0], [0]>} : vector<1x128x8xbf16>, vector<1x128x8xbf16>, vector<1x128x128xf32> -> vector<1x128x128xf32>
    %57 = vector.broadcast %21 : vector<1x1x128xf32> to vector<1x128x128xf32>
    %58 = arith.addf %56, %57 : vector<1x128x128xf32>
    %cst_21 = arith.constant dense<0xFF800000> : vector<1x128xf32>
    %59 = vector.multi_reduction <maximumf>, %58, %cst_21 [2] : vector<1x128x128xf32> to vector<1x128xf32>
    %60 = vector.shape_cast %59 : vector<1x128xf32> to vector<1x128x1xf32>
    %61 = vector.broadcast %60 : vector<1x128x1xf32> to vector<1x128x128xf32>
    %62 = arith.subf %58, %61 : vector<1x128x128xf32>
    %63 = math.exp %62 : vector<1x128x128xf32>
    %cst_22 = arith.constant dense<0.000000e+00> : vector<1x128xf32>
    %64 = vector.multi_reduction <add>, %63, %cst_22 [2] : vector<1x128x128xf32> to vector<1x128xf32>
    %65 = vector.shape_cast %64 : vector<1x128xf32> to vector<1x128x1xf32>
    %66 = tpu.reciprocal %65 {approx = true} : vector<1x128x1xf32> -> vector<1x128x1xf32>
    %67 = vector.broadcast %66 : vector<1x128x1xf32> to vector<1x128x128xf32>
    %68 = arith.mulf %63, %67 : vector<1x128x128xf32>
    %69 = arith.truncf %68 : vector<1x128x128xf32> to vector<1x128x128xbf16>
    %cst_23 = arith.constant dense<0.000000e+00> : vector<1x128x8xf32>
    %70 = tpu.matmul %69, %55, %cst_23 {dimension_numbers = #tpu.dot_dimension_numbers<[2], [1], [1], [2], [0, 0, 0, 1, 1, 2], [0], [0]>} : vector<1x128x128xbf16>, vector<1x128x8xbf16>, vector<1x128x8xf32> -> vector<1x128x8xf32>
    %71 = vector.shape_cast %70 : vector<1x128x8xf32> to vector<128x8xf32>
    %72 = arith.truncf %71 : vector<128x8xf32> to vector<128x8xbf16>
    %c0_24 = arith.constant 0 : index
    %c8 = arith.constant 8 : index
    %c0_25 = arith.constant 0 : index
    %73 = vector.load %arg6[%c0_24, %c8, %c0_25] : memref<1x32x32xbf16, #tpu.memory_space<vmem>>, vector<1x8x32xbf16>
    %74 = vector.shape_cast %73 : vector<1x8x32xbf16> to vector<8x32xbf16>
    %cst_26 = arith.constant dense<0.000000e+00> : vector<128x32xf32>
    %75 = tpu.matmul %72, %74, %cst_26 {dimension_numbers = #tpu.dot_dimension_numbers<[1], [0], [0], [1], [0, 0, 1, 1], [], []>} : vector<128x8xbf16>, vector<8x32xbf16>, vector<128x32xf32> -> vector<128x32xf32>
    %76 = arith.addf %49, %75 : vector<128x32xf32>
    %77 = vector.extract_strided_slice %15 {offsets = [0, 16], sizes = [128, 8], strides = [1, 1]} : vector<128x32xbf16> to vector<128x8xbf16>
    %78 = vector.shape_cast %77 : vector<128x8xbf16> to vector<1x128x8xbf16>
    %79 = vector.extract_strided_slice %17 {offsets = [0, 16], sizes = [128, 8], strides = [1, 1]} : vector<128x32xbf16> to vector<128x8xbf16>
    %80 = vector.shape_cast %79 : vector<128x8xbf16> to vector<1x128x8xbf16>
    %81 = vector.extract_strided_slice %19 {offsets = [0, 16], sizes = [128, 8], strides = [1, 1]} : vector<128x32xbf16> to vector<128x8xbf16>
    %82 = vector.shape_cast %81 : vector<128x8xbf16> to vector<1x128x8xbf16>
    %cst_27 = arith.constant dense<0.000000e+00> : vector<1x128x128xf32>
    %83 = tpu.matmul %78, %80, %cst_27 {dimension_numbers = #tpu.dot_dimension_numbers<[2], [2], [1], [1], [0, 0, 0, 1, 1, 1], [0], [0]>} : vector<1x128x8xbf16>, vector<1x128x8xbf16>, vector<1x128x128xf32> -> vector<1x128x128xf32>
    %84 = vector.broadcast %21 : vector<1x1x128xf32> to vector<1x128x128xf32>
    %85 = arith.addf %83, %84 : vector<1x128x128xf32>
    %cst_28 = arith.constant dense<0xFF800000> : vector<1x128xf32>
    %86 = vector.multi_reduction <maximumf>, %85, %cst_28 [2] : vector<1x128x128xf32> to vector<1x128xf32>
    %87 = vector.shape_cast %86 : vector<1x128xf32> to vector<1x128x1xf32>
    %88 = vector.broadcast %87 : vector<1x128x1xf32> to vector<1x128x128xf32>
    %89 = arith.subf %85, %88 : vector<1x128x128xf32>
    %90 = math.exp %89 : vector<1x128x128xf32>
    %cst_29 = arith.constant dense<0.000000e+00> : vector<1x128xf32>
    %91 = vector.multi_reduction <add>, %90, %cst_29 [2] : vector<1x128x128xf32> to vector<1x128xf32>
    %92 = vector.shape_cast %91 : vector<1x128xf32> to vector<1x128x1xf32>
    %93 = tpu.reciprocal %92 {approx = true} : vector<1x128x1xf32> -> vector<1x128x1xf32>
    %94 = vector.broadcast %93 : vector<1x128x1xf32> to vector<1x128x128xf32>
    %95 = arith.mulf %90, %94 : vector<1x128x128xf32>
    %96 = arith.truncf %95 : vector<1x128x128xf32> to vector<1x128x128xbf16>
    %cst_30 = arith.constant dense<0.000000e+00> : vector<1x128x8xf32>
    %97 = tpu.matmul %96, %82, %cst_30 {dimension_numbers = #tpu.dot_dimension_numbers<[2], [1], [1], [2], [0, 0, 0, 1, 1, 2], [0], [0]>} : vector<1x128x128xbf16>, vector<1x128x8xbf16>, vector<1x128x8xf32> -> vector<1x128x8xf32>
    %98 = vector.shape_cast %97 : vector<1x128x8xf32> to vector<128x8xf32>
    %99 = arith.truncf %98 : vector<128x8xf32> to vector<128x8xbf16>
    %c0_31 = arith.constant 0 : index
    %c16 = arith.constant 16 : index
    %c0_32 = arith.constant 0 : index
    %100 = vector.load %arg6[%c0_31, %c16, %c0_32] : memref<1x32x32xbf16, #tpu.memory_space<vmem>>, vector<1x8x32xbf16>
    %101 = vector.shape_cast %100 : vector<1x8x32xbf16> to vector<8x32xbf16>
    %cst_33 = arith.constant dense<0.000000e+00> : vector<128x32xf32>
    %102 = tpu.matmul %99, %101, %cst_33 {dimension_numbers = #tpu.dot_dimension_numbers<[1], [0], [0], [1], [0, 0, 1, 1], [], []>} : vector<128x8xbf16>, vector<8x32xbf16>, vector<128x32xf32> -> vector<128x32xf32>
    %103 = arith.addf %76, %102 : vector<128x32xf32>
    %104 = vector.extract_strided_slice %15 {offsets = [0, 24], sizes = [128, 8], strides = [1, 1]} : vector<128x32xbf16> to vector<128x8xbf16>
    %105 = vector.shape_cast %104 : vector<128x8xbf16> to vector<1x128x8xbf16>
    %106 = vector.extract_strided_slice %17 {offsets = [0, 24], sizes = [128, 8], strides = [1, 1]} : vector<128x32xbf16> to vector<128x8xbf16>
    %107 = vector.shape_cast %106 : vector<128x8xbf16> to vector<1x128x8xbf16>
    %108 = vector.extract_strided_slice %19 {offsets = [0, 24], sizes = [128, 8], strides = [1, 1]} : vector<128x32xbf16> to vector<128x8xbf16>
    %109 = vector.shape_cast %108 : vector<128x8xbf16> to vector<1x128x8xbf16>
    %cst_34 = arith.constant dense<0.000000e+00> : vector<1x128x128xf32>
    %110 = tpu.matmul %105, %107, %cst_34 {dimension_numbers = #tpu.dot_dimension_numbers<[2], [2], [1], [1], [0, 0, 0, 1, 1, 1], [0], [0]>} : vector<1x128x8xbf16>, vector<1x128x8xbf16>, vector<1x128x128xf32> -> vector<1x128x128xf32>
    %111 = vector.broadcast %21 : vector<1x1x128xf32> to vector<1x128x128xf32>
    %112 = arith.addf %110, %111 : vector<1x128x128xf32>
    %cst_35 = arith.constant dense<0xFF800000> : vector<1x128xf32>
    %113 = vector.multi_reduction <maximumf>, %112, %cst_35 [2] : vector<1x128x128xf32> to vector<1x128xf32>
    %114 = vector.shape_cast %113 : vector<1x128xf32> to vector<1x128x1xf32>
    %115 = vector.broadcast %114 : vector<1x128x1xf32> to vector<1x128x128xf32>
    %116 = arith.subf %112, %115 : vector<1x128x128xf32>
    %117 = math.exp %116 : vector<1x128x128xf32>
    %cst_36 = arith.constant dense<0.000000e+00> : vector<1x128xf32>
    %118 = vector.multi_reduction <add>, %117, %cst_36 [2] : vector<1x128x128xf32> to vector<1x128xf32>
    %119 = vector.shape_cast %118 : vector<1x128xf32> to vector<1x128x1xf32>
    %120 = tpu.reciprocal %119 {approx = true} : vector<1x128x1xf32> -> vector<1x128x1xf32>
    %121 = vector.broadcast %120 : vector<1x128x1xf32> to vector<1x128x128xf32>
    %122 = arith.mulf %117, %121 : vector<1x128x128xf32>
    %123 = arith.truncf %122 : vector<1x128x128xf32> to vector<1x128x128xbf16>
    %cst_37 = arith.constant dense<0.000000e+00> : vector<1x128x8xf32>
    %124 = tpu.matmul %123, %109, %cst_37 {dimension_numbers = #tpu.dot_dimension_numbers<[2], [1], [1], [2], [0, 0, 0, 1, 1, 2], [0], [0]>} : vector<1x128x128xbf16>, vector<1x128x8xbf16>, vector<1x128x8xf32> -> vector<1x128x8xf32>
    %125 = vector.shape_cast %124 : vector<1x128x8xf32> to vector<128x8xf32>
    %126 = arith.truncf %125 : vector<128x8xf32> to vector<128x8xbf16>
    %c0_38 = arith.constant 0 : index
    %c24 = arith.constant 24 : index
    %c0_39 = arith.constant 0 : index
    %127 = vector.load %arg6[%c0_38, %c24, %c0_39] : memref<1x32x32xbf16, #tpu.memory_space<vmem>>, vector<1x8x32xbf16>
    %128 = vector.shape_cast %127 : vector<1x8x32xbf16> to vector<8x32xbf16>
    %cst_40 = arith.constant dense<0.000000e+00> : vector<128x32xf32>
    %129 = tpu.matmul %126, %128, %cst_40 {dimension_numbers = #tpu.dot_dimension_numbers<[1], [0], [0], [1], [0, 0, 1, 1], [], []>} : vector<128x8xbf16>, vector<8x32xbf16>, vector<128x32xf32> -> vector<128x32xf32>
    %130 = arith.addf %103, %129 : vector<128x32xf32>
    %c0_41 = arith.constant 0 : index
    %c0_42 = arith.constant 0 : index
    %c0_43 = arith.constant 0 : index
    %131 = vector.load %arg7[%c0_41, %c0_42, %c0_43] : memref<1x1x32xf32, #tpu.memory_space<vmem>>, vector<1x1x32xf32>
    %132 = vector.shape_cast %131 : vector<1x1x32xf32> to vector<1x32xf32>
    %133 = vector.broadcast %132 : vector<1x32xf32> to vector<128x32xf32>
    %134 = arith.addf %130, %133 : vector<128x32xf32>
    %135 = arith.addf %3, %134 : vector<128x32xf32>
    %c0_44 = arith.constant 0 : index
    %c0_45 = arith.constant 0 : index
    %c0_46 = arith.constant 0 : index
    %136 = vector.load %arg8[%c0_44, %c0_45, %c0_46] : memref<1x1x32xf32, #tpu.memory_space<vmem>>, vector<1x1x32xf32>
    %137 = vector.shape_cast %136 : vector<1x1x32xf32> to vector<1x32xf32>
    %c0_47 = arith.constant 0 : index
    %c0_48 = arith.constant 0 : index
    %c0_49 = arith.constant 0 : index
    %138 = vector.load %arg9[%c0_47, %c0_48, %c0_49] : memref<1x1x32xf32, #tpu.memory_space<vmem>>, vector<1x1x32xf32>
    %139 = vector.shape_cast %138 : vector<1x1x32xf32> to vector<1x32xf32>
    %cst_50 = arith.constant dense<0.000000e+00> : vector<128xf32>
    %140 = vector.multi_reduction <add>, %135, %cst_50 [1] : vector<128x32xf32> to vector<128xf32>
    %141 = vector.shape_cast %140 : vector<128xf32> to vector<128x1xf32>
    %cst_51 = arith.constant 3.200000e+01 : f32
    %142 = vector.broadcast %cst_51 : f32 to vector<128x1xf32>
    %143 = arith.divf %141, %142 : vector<128x1xf32>
    %144 = vector.broadcast %143 : vector<128x1xf32> to vector<128x32xf32>
    %145 = arith.subf %135, %144 : vector<128x32xf32>
    %146 = arith.mulf %145, %145 : vector<128x32xf32>
    %cst_52 = arith.constant dense<0.000000e+00> : vector<128xf32>
    %147 = vector.multi_reduction <add>, %146, %cst_52 [1] : vector<128x32xf32> to vector<128xf32>
    %148 = vector.shape_cast %147 : vector<128xf32> to vector<128x1xf32>
    %cst_53 = arith.constant 3.200000e+01 : f32
    %149 = vector.broadcast %cst_53 : f32 to vector<128x1xf32>
    %150 = arith.divf %148, %149 : vector<128x1xf32>
    %cst_54 = arith.constant 9.99999974E-6 : f32
    %151 = vector.broadcast %cst_54 : f32 to vector<128x1xf32>
    %152 = arith.addf %150, %151 : vector<128x1xf32>
    %153 = math.rsqrt %152 : vector<128x1xf32>
    %154 = vector.broadcast %153 : vector<128x1xf32> to vector<128x32xf32>
    %155 = arith.mulf %145, %154 : vector<128x32xf32>
    %156 = vector.broadcast %137 : vector<1x32xf32> to vector<128x32xf32>
    %157 = arith.mulf %155, %156 : vector<128x32xf32>
    %158 = vector.broadcast %139 : vector<1x32xf32> to vector<128x32xf32>
    %159 = arith.addf %157, %158 : vector<128x32xf32>
    %160 = arith.truncf %159 : vector<128x32xf32> to vector<128x32xbf16>
    %c0_55 = arith.constant 0 : index
    %c0_56 = arith.constant 0 : index
    %c0_57 = arith.constant 0 : index
    %161 = vector.load %arg10[%c0_55, %c0_56, %c0_57] : memref<1x32x64xbf16, #tpu.memory_space<vmem>>, vector<1x32x64xbf16>
    %162 = vector.shape_cast %161 : vector<1x32x64xbf16> to vector<32x64xbf16>
    %cst_58 = arith.constant dense<0.000000e+00> : vector<128x64xf32>
    %163 = tpu.matmul %160, %162, %cst_58 {dimension_numbers = #tpu.dot_dimension_numbers<[1], [0], [0], [1], [0, 0, 1, 1], [], []>} : vector<128x32xbf16>, vector<32x64xbf16>, vector<128x64xf32> -> vector<128x64xf32>
    %c0_59 = arith.constant 0 : index
    %c0_60 = arith.constant 0 : index
    %c0_61 = arith.constant 0 : index
    %164 = vector.load %arg11[%c0_59, %c0_60, %c0_61] : memref<1x1x64xf32, #tpu.memory_space<vmem>>, vector<1x1x64xf32>
    %165 = vector.shape_cast %164 : vector<1x1x64xf32> to vector<1x64xf32>
    %166 = vector.broadcast %165 : vector<1x64xf32> to vector<128x64xf32>
    %167 = arith.addf %163, %166 : vector<128x64xf32>
    %cst_62 = arith.constant 0.000000e+00 : f32
    %168 = vector.broadcast %cst_62 : f32 to vector<128x64xf32>
    %169 = arith.maximumf %167, %168 : vector<128x64xf32>
    %170 = arith.truncf %169 : vector<128x64xf32> to vector<128x64xbf16>
    %c0_63 = arith.constant 0 : index
    %c0_64 = arith.constant 0 : index
    %c0_65 = arith.constant 0 : index
    %171 = vector.load %arg12[%c0_63, %c0_64, %c0_65] : memref<1x64x32xbf16, #tpu.memory_space<vmem>>, vector<1x64x32xbf16>
    %172 = vector.shape_cast %171 : vector<1x64x32xbf16> to vector<64x32xbf16>
    %cst_66 = arith.constant dense<0.000000e+00> : vector<128x32xf32>
    %173 = tpu.matmul %170, %172, %cst_66 {dimension_numbers = #tpu.dot_dimension_numbers<[1], [0], [0], [1], [0, 0, 1, 1], [], []>} : vector<128x64xbf16>, vector<64x32xbf16>, vector<128x32xf32> -> vector<128x32xf32>
    %c0_67 = arith.constant 0 : index
    %c0_68 = arith.constant 0 : index
    %c0_69 = arith.constant 0 : index
    %174 = vector.load %arg13[%c0_67, %c0_68, %c0_69] : memref<1x1x32xf32, #tpu.memory_space<vmem>>, vector<1x1x32xf32>
    %175 = vector.shape_cast %174 : vector<1x1x32xf32> to vector<1x32xf32>
    %176 = vector.broadcast %175 : vector<1x32xf32> to vector<128x32xf32>
    %177 = arith.addf %173, %176 : vector<128x32xf32>
    %178 = arith.addf %159, %177 : vector<128x32xf32>
    %c0_70 = arith.constant 0 : index
    %c0_71 = arith.constant 0 : index
    %c0_72 = arith.constant 0 : index
    %179 = vector.load %arg14[%c0_70, %c0_71, %c0_72] : memref<1x1x32xf32, #tpu.memory_space<vmem>>, vector<1x1x32xf32>
    %180 = vector.shape_cast %179 : vector<1x1x32xf32> to vector<1x32xf32>
    %c0_73 = arith.constant 0 : index
    %c0_74 = arith.constant 0 : index
    %c0_75 = arith.constant 0 : index
    %181 = vector.load %arg15[%c0_73, %c0_74, %c0_75] : memref<1x1x32xf32, #tpu.memory_space<vmem>>, vector<1x1x32xf32>
    %182 = vector.shape_cast %181 : vector<1x1x32xf32> to vector<1x32xf32>
    %cst_76 = arith.constant dense<0.000000e+00> : vector<128xf32>
    %183 = vector.multi_reduction <add>, %178, %cst_76 [1] : vector<128x32xf32> to vector<128xf32>
    %184 = vector.shape_cast %183 : vector<128xf32> to vector<128x1xf32>
    %cst_77 = arith.constant 3.200000e+01 : f32
    %185 = vector.broadcast %cst_77 : f32 to vector<128x1xf32>
    %186 = arith.divf %184, %185 : vector<128x1xf32>
    %187 = vector.broadcast %186 : vector<128x1xf32> to vector<128x32xf32>
    %188 = arith.subf %178, %187 : vector<128x32xf32>
    %189 = arith.mulf %188, %188 : vector<128x32xf32>
    %cst_78 = arith.constant dense<0.000000e+00> : vector<128xf32>
    %190 = vector.multi_reduction <add>, %189, %cst_78 [1] : vector<128x32xf32> to vector<128xf32>
    %191 = vector.shape_cast %190 : vector<128xf32> to vector<128x1xf32>
    %cst_79 = arith.constant 3.200000e+01 : f32
    %192 = vector.broadcast %cst_79 : f32 to vector<128x1xf32>
    %193 = arith.divf %191, %192 : vector<128x1xf32>
    %cst_80 = arith.constant 9.99999974E-6 : f32
    %194 = vector.broadcast %cst_80 : f32 to vector<128x1xf32>
    %195 = arith.addf %193, %194 : vector<128x1xf32>
    %196 = math.rsqrt %195 : vector<128x1xf32>
    %197 = vector.broadcast %196 : vector<128x1xf32> to vector<128x32xf32>
    %198 = arith.mulf %188, %197 : vector<128x32xf32>
    %199 = vector.broadcast %180 : vector<1x32xf32> to vector<128x32xf32>
    %200 = arith.mulf %198, %199 : vector<128x32xf32>
    %201 = vector.broadcast %182 : vector<1x32xf32> to vector<128x32xf32>
    %202 = arith.addf %200, %201 : vector<128x32xf32>
    %c0_81 = arith.constant 0 : index
    %c0_82 = arith.constant 0 : index
    %203 = vector.load %arg17[%c0_81, %c0_82] : memref<128x32xf32, #tpu.memory_space<vmem>>, vector<128x32xf32>
    tpu.vector_store %arg17[%c0_81, %c0_82], %202 {strides = array<i32>} : memref<128x32xf32, #tpu.memory_space<vmem>>, vector<128x32xf32>,
    %c1_i32 = arith.constant 1 : i32
    %204 = arith.cmpi eq, %arg1, %c1_i32 : i32
    %205 = arith.extui %204 : i1 to i32
    %c0_i32_83 = arith.constant 0 : i32
    %206 = arith.cmpi ne, %205, %c0_i32_83 : i32
    scf.if %206 {
      %c0_84 = arith.constant 0 : index
      %c0_85 = arith.constant 0 : index
      %207 = vector.load %arg16[%c0_84, %c0_85] : memref<128x32xf32, #tpu.memory_space<vmem>>, vector<128x32xf32>
      tpu.vector_store %arg16[%c0_84, %c0_85], %202 {strides = array<i32>} : memref<128x32xf32, #tpu.memory_space<vmem>>, vector<128x32xf32>,
    } else {
    }
    return
  }
  func.func @transform_0(%arg0: i32, %arg1: i32) -> (i32, i32) {
    %c0_i32 = arith.constant 0 : i32
    %c0_i32_0 = arith.constant 0 : i32
    return %arg0, %c0_i32 : i32, i32
  }
  func.func @transform_1(%arg0: i32, %arg1: i32) -> (i32, i32) {
    %c0_i32 = arith.constant 0 : i32
    %c0_i32_0 = arith.constant 0 : i32
    %c0_i32_1 = arith.constant 0 : i32
    return %c0_i32, %c0_i32_0 : i32, i32
  }
  func.func @transform_2(%arg0: i32, %arg1: i32) -> (i32, i32, i32) {
    %c0_i32 = arith.constant 0 : i32
    %c0_i32_0 = arith.constant 0 : i32
    %c0_i32_1 = arith.constant 0 : i32
    return %arg1, %c0_i32, %c0_i32_0 : i32, i32, i32
  }
  func.func @transform_3(%arg0: i32, %arg1: i32) -> (i32, i32, i32) {
    %c0_i32 = arith.constant 0 : i32
    %c0_i32_0 = arith.constant 0 : i32
    %c0_i32_1 = arith.constant 0 : i32
    return %arg1, %c0_i32, %c0_i32_0 : i32, i32, i32
  }
  func.func @transform_4(%arg0: i32, %arg1: i32) -> (i32, i32, i32) {
    %c0_i32 = arith.constant 0 : i32
    %c0_i32_0 = arith.constant 0 : i32
    %c0_i32_1 = arith.constant 0 : i32
    return %arg1, %c0_i32, %c0_i32_0 : i32, i32, i32
  }
  func.func @transform_5(%arg0: i32, %arg1: i32) -> (i32, i32, i32) {
    %c0_i32 = arith.constant 0 : i32
    %c0_i32_0 = arith.constant 0 : i32
    %c0_i32_1 = arith.constant 0 : i32
    return %arg1, %c0_i32, %c0_i32_0 : i32, i32, i32
  }
  func.func @transform_6(%arg0: i32, %arg1: i32) -> (i32, i32, i32) {
    %c0_i32 = arith.constant 0 : i32
    %c0_i32_0 = arith.constant 0 : i32
    %c0_i32_1 = arith.constant 0 : i32
    return %arg1, %c0_i32, %c0_i32_0 : i32, i32, i32
  }
  func.func @transform_7(%arg0: i32, %arg1: i32) -> (i32, i32, i32) {
    %c0_i32 = arith.constant 0 : i32
    %c0_i32_0 = arith.constant 0 : i32
    %c0_i32_1 = arith.constant 0 : i32
    return %arg1, %c0_i32, %c0_i32_0 : i32, i32, i32
  }
  func.func @transform_8(%arg0: i32, %arg1: i32) -> (i32, i32, i32) {
    %c0_i32 = arith.constant 0 : i32
    %c0_i32_0 = arith.constant 0 : i32
    %c0_i32_1 = arith.constant 0 : i32
    return %arg1, %c0_i32, %c0_i32_0 : i32, i32, i32
  }
  func.func @transform_9(%arg0: i32, %arg1: i32) -> (i32, i32, i32) {
    %c0_i32 = arith.constant 0 : i32
    %c0_i32_0 = arith.constant 0 : i32
    %c0_i32_1 = arith.constant 0 : i32
    return %arg1, %c0_i32, %c0_i32_0 : i32, i32, i32
  }
  func.func @transform_10(%arg0: i32, %arg1: i32) -> (i32, i32, i32) {
    %c0_i32 = arith.constant 0 : i32
    %c0_i32_0 = arith.constant 0 : i32
    %c0_i32_1 = arith.constant 0 : i32
    return %arg1, %c0_i32, %c0_i32_0 : i32, i32, i32
  }
  func.func @transform_11(%arg0: i32, %arg1: i32) -> (i32, i32, i32) {
    %c0_i32 = arith.constant 0 : i32
    %c0_i32_0 = arith.constant 0 : i32
    %c0_i32_1 = arith.constant 0 : i32
    return %arg1, %c0_i32, %c0_i32_0 : i32, i32, i32
  }
  func.func @transform_12(%arg0: i32, %arg1: i32) -> (i32, i32, i32) {
    %c0_i32 = arith.constant 0 : i32
    %c0_i32_0 = arith.constant 0 : i32
    %c0_i32_1 = arith.constant 0 : i32
    return %arg1, %c0_i32, %c0_i32_0 : i32, i32, i32
  }
  func.func @transform_13(%arg0: i32, %arg1: i32) -> (i32, i32, i32) {
    %c0_i32 = arith.constant 0 : i32
    %c0_i32_0 = arith.constant 0 : i32
    %c0_i32_1 = arith.constant 0 : i32
    return %arg1, %c0_i32, %c0_i32_0 : i32, i32, i32
  }
  func.func @transform_14(%arg0: i32, %arg1: i32) -> (i32, i32) {
    %c0_i32 = arith.constant 0 : i32
    %c0_i32_0 = arith.constant 0 : i32
    return %arg0, %c0_i32 : i32, i32
  }
}

</mosaic_0001>

<llo_original>
// kernel: context_transformer_forward.2
$region0: #{context_transformer_forward.2}
  #allocation0 [shape = 'u32[]', space=smem, size = 0x4, offset = 0x4, fixed_abs, tag = 'smem constant byte address 0x4 - core index']
  #allocation1 [shape = 'u32[144,128]{1,0:T(1,128)}', space=vmem, size = 0x12000, scoped, tag = 'internal scratch']
  %s0 = inlined_call_operand.vmem [shape: f32[16,300], index: 0, kind: input, shape index: {}]
  %s1 = inlined_call_operand.vmem [shape: bf16[300,32], index: 1, kind: input, shape index: {}]
  %s2 = inlined_call_operand.vmem [shape: f32[1,32], index: 2, kind: input, shape index: {}]
  %s3 = inlined_call_operand.vmem [shape: f32[16,32], index: 3, kind: output, shape index: {}]
  %s4 = sld [smem:[#allocation0]]
  $region22: #{context_transformer_forward.2} parent=0
    _
  %s6 = ssub.s32 1, %s4
  %s7 = scalar_select 0, %s6, %s4
  // Predicated region
  $region2: #{context_transformer_forward.2} parent=0 // pred_check
    _
  $region3: #{context_transformer_forward.2} parent=0 // pred_check_branch
    %9 = sbr.rel (0) target = $region5
  $region4: #{context_transformer_forward.2} parent=0 // pred_region
    _
  $region5: #{context_transformer_forward.2} parent=0 // pred_fallthru
    _
  // Predicated region
  $region6: #{context_transformer_forward.2} parent=0 // pred_check
    _
  $region7: #{context_transformer_forward.2} parent=0 // pred_check_branch
    %11 = sbr.rel (0) target = $region9
  $region8: #{context_transformer_forward.2} parent=0 // pred_region
    _
  $region9: #{context_transformer_forward.2} parent=0 // pred_fallthru
    _
  // Predicated region
  $region10: #{context_transformer_forward.2} parent=0 // pred_check
    _
  $region11: #{context_transformer_forward.2} parent=0 // pred_check_branch
    %13 = sbr.rel (0) target = $region13
  $region12: #{context_transformer_forward.2} parent=0 // pred_region
    _
  $region13: #{context_transformer_forward.2} parent=0 // pred_fallthru
    _
  %v15 = vld [vmem:[%s0] sm:$0xff]
  %v16 = vld [vmem:[%s0 + $0x8] sm:$0xff]
  %v17 = vld [vmem:[%s0 + $0x10] sm:$0xff]
  %v18 = vld [vmem:[%s0 + $0x18] sm:$0xff]
  %v19 = vld [vmem:[%s0 + $0x20] sm:$0xff]
  %v20 = vld [vmem:[%s0 + $0x28] sm:$0xff]
  %v21 = vpack.c.bf16 %v18, %v15
  %v22 = vpack.c.bf16 %v19, %v16
  %v23 = vpack.c.bf16 %v20, %v17
  %v24 = vld [vmem:[%s1] sm:$0xf]
  %v25 = vld [vmem:[%s1 + $0x4] sm:$0xf]
  %v26 = vld [vmem:[%s1 + $0x8] sm:$0xf]
  %v27 = vld [vmem:[%s1 + $0xc] sm:$0xf]
  %v28 = vld [vmem:[%s1 + $0x10] sm:$0xf]
  %v29 = vld [vmem:[%s1 + $0x14] sm:$0xf]
  %v30 = vld [vmem:[%s1 + $0x18] sm:$0xf]
  %v31 = vld [vmem:[%s1 + $0x1c] sm:$0xf]
  %v32 = vld [vmem:[%s1 + $0x20] sm:$0xf]
  %v33 = vld [vmem:[%s1 + $0x24] sm:$0xf]
  %v34 = vld [vmem:[%s1 + $0x28] sm:$0xf]
  %v35 = vld [vmem:[%s1 + $0x2c] sm:$0xf]
  %v36 = vld [vmem:[%s1 + $0x30] sm:$0xf]
  %v37 = vld [vmem:[%s1 + $0x34] sm:$0xf]
  %v38 = vld [vmem:[%s1 + $0x38] sm:$0xf]
  %v39 = vld [vmem:[%s1 + $0x3c] sm:$0xf]
  %v40 = vld [vmem:[%s1 + $0x40] sm:$0xf]
  %v41 = vld [vmem:[%s1 + $0x44] sm:$0xf]
  %v42 = vld [vmem:[%s1 + $0x48] sm:$0xf]
  %v43 = vld [vmem:[%s1 + $0x4c] sm:$0xf]
  %v44 = vld [vmem:[%s1 + $0x50] sm:$0xf]
  %v45 = vld [vmem:[%s1 + $0x54] sm:$0xf]
  %v46 = vld [vmem:[%s1 + $0x58] sm:$0xf]
  %v47 = vld [vmem:[%s1 + $0x5c] sm:$0xf]
  %v48 = vld [vmem:[%s1 + $0x60] sm:$0xf]
  %v49 = vld [vmem:[%s1 + $0x64] sm:$0xf]
  %v50 = vld [vmem:[%s1 + $0x68] sm:$0xf]
  %v51 = vld [vmem:[%s1 + $0x6c] sm:$0xf]
  %v52 = vld [vmem:[%s1 + $0x70] sm:$0xf]
  %v53 = vld [vmem:[%s1 + $0x74] sm:$0xf]
  %v54 = vld [vmem:[%s1 + $0x78] sm:$0xf]
  %v55 = vld [vmem:[%s1 + $0x7c] sm:$0xf]
  %v56 = vld [vmem:[%s1 + $0x80] sm:$0xf]
  %v57 = vld [vmem:[%s1 + $0x84] sm:$0xf]
  %v58 = vld [vmem:[%s1 + $0x88] sm:$0xf]
  %v59 = vld [vmem:[%s1 + $0x8c] sm:$0xf]
  %v60 = vld [vmem:[%s1 + $0x90] sm:$0xf]
  %v61 = vld [vmem:[%s1 + $0x94] sm:$0x3]
  %v62 = vld [vmem:[%s2] sm:$0x1]
  %v64 = vlaneseq
  %v65 = vshrl.u32 %v64, 7
  %v66 = vsub.s32 0, %v65
  %v67 = vrot.slane %v62, %v66
  %v107 = vunpack.c.l.b16 %v24
  %v108 = vunpack.c.l.b16 %v25
  %v109 = vunpack.c.l.b16 %v26
  %v110 = vunpack.c.l.b16 %v27
  %v111 = vunpack.c.l.b16 %v28
  %v112 = vunpack.c.l.b16 %v29
  %v113 = vunpack.c.l.b16 %v30
  %v114 = vunpack.c.l.b16 %v31
  %v115 = vunpack.c.l.b16 %v32
  %v116 = vunpack.c.l.b16 %v33
  %v117 = vunpack.c.l.b16 %v34
  %v118 = vunpack.c.l.b16 %v35
  %v119 = vunpack.c.l.b16 %v36
  %v120 = vunpack.c.l.b16 %v37
  %v121 = vunpack.c.l.b16 %v38
  %v122 = vunpack.c.l.b16 %v39
  %v123 = vunpack.c.l.b16 %v40
  %v124 = vunpack.c.l.b16 %v41
  %v125 = vunpack.c.l.b16 %v42
  %v126 = vunpack.c.l.b16 %v43
  %v127 = vunpack.c.l.b16 %v44
  %v128 = vunpack.c.l.b16 %v45
  %v129 = vunpack.c.l.b16 %v46
  %v130 = vunpack.c.l.b16 %v47
  %v131 = vunpack.c.l.b16 %v48
  %v132 = vunpack.c.l.b16 %v49
  %v133 = vunpack.c.l.b16 %v50
  %v134 = vunpack.c.l.b16 %v51
  %v135 = vunpack.c.l.b16 %v52
  %v136 = vunpack.c.l.b16 %v53
  %v137 = vunpack.c.l.b16 %v54
  %v138 = vunpack.c.l.b16 %v55
  %v139 = vunpack.c.l.b16 %v56
  %v140 = vunpack.c.l.b16 %v57
  %v141 = vunpack.c.l.b16 %v58
  %v142 = vunpack.c.l.b16 %v59
  %v143 = vunpack.c.l.b16 %v60
  %v144 = vunpack.c.l.b16 %v61
  %v145 = vpack.c.b16 %v108, %v107
  %v146 = vpack.c.b16 %v110, %v109
  %v147 = vpack.c.b16 %v112, %v111
  %v148 = vpack.c.b16 %v114, %v113
  %v149 = vpack.c.b16 %v116, %v115
  %v150 = vpack.c.b16 %v118, %v117
  %v151 = vpack.c.b16 %v120, %v119
  %v152 = vpack.c.b16 %v122, %v121
  %v153 = vpack.c.b16 %v124, %v123
  %v154 = vpack.c.b16 %v126, %v125
  %v155 = vpack.c.b16 %v128, %v127
  %v156 = vpack.c.b16 %v130, %v129
  %v157 = vpack.c.b16 %v132, %v131
  %v158 = vpack.c.b16 %v134, %v133
  %v159 = vpack.c.b16 %v136, %v135
  %v160 = vpack.c.b16 %v138, %v137
  %v161 = vpack.c.b16 %v140, %v139
  %v162 = vpack.c.b16 %v142, %v141
  %v163 = vpack.c.b16 %v144, %v143
  %vm182 = vcmask 359424
  %v184 = vsel %vm182, %v23, 0
  %vm186 = vcmask 1045504
  %v188 = vsel %vm186, %v163, 0
  %190 = vmatprep.subr.bf16.mxu0 0
  %191 = vmatpush1.bf16.msra.mxu0 %v145
  %192 = vmatprep.subr.bf16.mxu0 0
  %193 = vmatpush1.bf16.msra.mxu0 %v146
  %194 = vmatprep.subr.bf16.mxu0 0
  %195 = vmatpush1.bf16.msra.mxu0 %v147
  %196 = vmatprep.subr.bf16.mxu0 0
  %197 = vmatpush1.bf16.msra.mxu0 %v148
  %198 = vmatprep.subr.bf16.mxu0 0
  %199 = vmatpush1.bf16.msra.mxu0 %v149
  %200 = vmatprep.subr.bf16.mxu0 0
  %201 = vmatpush1.bf16.msra.mxu0 %v150
  %202 = vmatprep.subr.bf16.mxu0 0
  %203 = vmatpush1.bf16.msra.mxu0 %v151
  %204 = vmatprep.subr.bf16.mxu0 0
  %205 = vmatpush1.bf16.msra.mxu0 %v152
  %206 = vmatprep.subr.bf16.mxu0 0
  %207 = vmatpush1.bf16.msra.mxu0 %v153
  %208 = vmatprep.subr.bf16.mxu0 0
  %209 = vmatpush1.bf16.msra.mxu0 %v154
  %210 = vmatprep.subr.bf16.mxu0 0
  %211 = vmatpush1.bf16.msra.mxu0 %v155
  %212 = vmatprep.subr.bf16.mxu0 0
  %213 = vmatpush1.bf16.msra.mxu0 %v156
  %214 = vmatprep.subr.bf16.mxu0 0
  %215 = vmatpush1.bf16.msra.mxu0 %v157
  %216 = vmatprep.subr.bf16.mxu0 0
  %217 = vmatpush1.bf16.msra.mxu0 %v158
  %218 = vmatprep.subr.bf16.mxu0 0
  %219 = vmatpush1.bf16.msra.mxu0 %v159
  %220 = vmatprep.subr.bf16.mxu0 0
  %221 = vmatpush1.bf16.msra.mxu0 %v160
  %222 = vmatprep.mubr.bf16.mxu0 %v22
  %223 = vmatmul.mubr.bf16.gmra.mrb[0].mxu0 %v21
  %v224 = vpop.f32.mrb[0].mxu0
  %v225 = vadd.f32 %v67, %v224
  %v226 = vpop.f32.mrb[0].mxu0
  %v227 = vpop.f32.mrb[0].mxu0
  %v228 = vadd.f32 %v67, %v227
  %v229 = vpop.f32.mrb[0].mxu0
  %230 = vdwg.mxu0
  %231 = vmatprep.subr.bf16.mxu0 0
  %232 = vmatpush1.bf16.msra.mxu0 %v161
  %233 = vmatprep.subr.bf16.mxu0 0
  %234 = vmatpush1.bf16.msra.mxu0 %v162
  %235 = vmatprep.subr.bf16.mxu0 0
  %236 = vmatpush1.bf16.msra.mxu0 %v188
  %237 = vmatprep.subr.bf16.mxu0 0
  %238 = vmatpush1.bf16.msra.mxu0 0
  %239 = vmatprep.subr.bf16.mxu0 0
  %240 = vmatpush1.bf16.msra.mxu0 0
  %241 = vmatprep.subr.bf16.mxu0 0
  %242 = vmatpush1.bf16.msra.mxu0 0
  %243 = vmatprep.subr.bf16.mxu0 0
  %244 = vmatpush1.bf16.msra.mxu0 0
  %245 = vmatprep.subr.bf16.mxu0 0
  %246 = vmatpush1.bf16.msra.mxu0 0
  %247 = vmatprep.subr.bf16.mxu0 0
  %248 = vmatpush1.bf16.msra.mxu0 0
  %249 = vmatprep.subr.bf16.mxu0 0
  %250 = vmatpush1.bf16.msra.mxu0 0
  %251 = vmatprep.subr.bf16.mxu0 0
  %252 = vmatpush1.bf16.msra.mxu0 0
  %253 = vmatprep.subr.bf16.mxu0 0
  %254 = vmatpush1.bf16.msra.mxu0 0
  %255 = vmatprep.subr.bf16.mxu0 0
  %256 = vmatpush1.bf16.msra.mxu0 0
  %257 = vmatprep.subr.bf16.mxu0 0
  %258 = vmatpush1.bf16.msra.mxu0 0
  %259 = vmatprep.subr.bf16.mxu0 0
  %260 = vmatpush1.bf16.msra.mxu0 0
  %261 = vmatprep.subr.bf16.mxu0 0
  %262 = vmatpush1.bf16.msra.mxu0 0
  %263 = vmatprep.mubr.bf16.mxu0 0
  %264 = vmatmul.mubr.bf16.gmra.mrb[0].mxu0 %v184
  %v265 = vpop.f32.mrb[0].mxu0
  %v266 = vadd.f32 %v225, %v265
  %v267 = vpop.f32.mrb[0].mxu0
  %v268 = vpop.f32.mrb[0].mxu0
  %v269 = vadd.f32 %v228, %v268
  %v270 = vpop.f32.mrb[0].mxu0
  %271 = vdwg.mxu0
  %vm272 = vcmask 261120
  %273 = vst.msk [vmem:[%s3] sm:$0xff] %vm272, %v266
  %274 = vst.msk [vmem:[%s3 + $0x8] sm:$0xff] %vm272, %v269
  // Predicated region
  $region14: #{context_transformer_forward.2} parent=0 // pred_check
    _
  $region15: #{context_transformer_forward.2} parent=0 // pred_check_branch
    %276 = sbr.rel (0) target = $region17
  $region16: #{context_transformer_forward.2} parent=0 // pred_region
    _
  $region17: #{context_transformer_forward.2} parent=0 // pred_fallthru
    _
  // Predicated region
  $region18: #{context_transformer_forward.2} parent=0 // pred_check
    _
  $region19: #{context_transformer_forward.2} parent=0 // pred_check_branch
    %278 = sbr.rel (0) target = $region21
  $region20: #{context_transformer_forward.2} parent=0 // pred_region
    _
  $region21: #{context_transformer_forward.2} parent=0 // pred_fallthru
    _

// kernel: context_transformer_forward.3
$region0: #{context_transformer_forward.3}
  #allocation0 [shape = 'u32[]', space=smem, size = 0x4, offset = 0x4, fixed_abs, tag = 'smem constant byte address 0x4 - core index']
  #allocation1 [shape = 'u32[144,128]{1,0:T(1,128)}', space=vmem, size = 0x12000, scoped, tag = 'internal scratch']
  #allocation2 [shape = 'f32[128,32]{1,0:T(8,128)}', space=vmem, size = 0x10000, scoped, tag = 'scratch operand']
  %s0 = inlined_call_operand.vmem [shape: f32[256,32], index: 0, kind: input, shape index: {}]
  %s1 = inlined_call_operand.vmem [shape: f32[1,128], index: 1, kind: input, shape index: {}]
  %s2 = inlined_call_operand.vmem [shape: bf16[2,32,96], index: 2, kind: input, shape index: {}]
  %s3 = inlined_call_operand.vmem [shape: f32[2,1,96], index: 3, kind: input, shape index: {}]
  %s4 = inlined_call_operand.vmem [shape: bf16[2,32,32], index: 4, kind: input, shape index: {}]
  %s5 = inlined_call_operand.vmem [shape: f32[2,1,32], index: 5, kind: input, shape index: {}]
  %s6 = inlined_call_operand.vmem [shape: f32[2,1,32], index: 6, kind: input, shape index: {}]
  %s7 = inlined_call_operand.vmem [shape: f32[2,1,32], index: 7, kind: input, shape index: {}]
  %s8 = inlined_call_operand.vmem [shape: bf16[2,32,64], index: 8, kind: input, shape index: {}]
  %s9 = inlined_call_operand.vmem [shape: f32[2,1,64], index: 9, kind: input, shape index: {}]
  %s10 = inlined_call_operand.vmem [shape: bf16[2,64,32], index: 10, kind: input, shape index: {}]
  %s11 = inlined_call_operand.vmem [shape: f32[2,1,32], index: 11, kind: input, shape index: {}]
  %s12 = inlined_call_operand.vmem [shape: f32[2,1,32], index: 12, kind: input, shape index: {}]
  %s13 = inlined_call_operand.vmem [shape: f32[2,1,32], index: 13, kind: input, shape index: {}]
  %s14 = inlined_call_operand.vmem [shape: f32[256,32], index: 14, kind: output, shape index: {}]
  %s15 = sld [smem:[#allocation0]]
  $region97: #{context_transformer_forward.3} parent=0
    _
  %s17 = ssub.s32 1, %s15
  %s18 = scalar_select 0, %s17, %s15
  loop: start=0, step=1, limit=6
  $region2: #{context_transformer_forward.3} parent=0 // loop_pre_header
    _
  $region3: #{context_transformer_forward.3} parent=0 // loop_header
    %s20 = sphi 0, %s24
    %p21 = scmp.ge.s32.totalorder %s20, 6
    %s27 = sphi 0, %s39
    %s28 = sphi 0, %s35
    %s29 = sphi 0, %s27
    %s30 = sphi 0, %s28
    %s31 = sphi 0, %s29
    %s32 = sphi 0, %s30
    %s42 = sphi 0, %s44
    %s45 = sphi 0, %s42
    %s46 = sphi 0, %s45
    %s62 = sphi 0, %s46
    %s66 = sphi 0, %s66
    %s68 = sphi 0, %s66
    %s69 = sphi 0, %s68
    %s83 = sphi 0, %s69
    %s89 = sphi 0, %s91
    %s92 = sphi 0, %s89
    %s93 = sphi 0, %s92
    %s109 = sphi 0, %s93
    %s115 = sphi 0, %s117
    %s118 = sphi 0, %s115
    %s119 = sphi 0, %s118
    %s135 = sphi 0, %s119
    %s141 = sphi 0, %s143
    %s144 = sphi 0, %s141
    %s145 = sphi 0, %s144
    %s161 = sphi 0, %s145
    %s167 = sphi 0, %s169
    %s170 = sphi 0, %s167
    %s171 = sphi 0, %s170
    %s187 = sphi 0, %s171
    %s193 = sphi 0, %s195
    %s196 = sphi 0, %s193
    %s197 = sphi 0, %s196
    %s213 = sphi 0, %s197
    %s219 = sphi 0, %s221
    %s222 = sphi 0, %s219
    %s223 = sphi 0, %s222
    %s239 = sphi 0, %s223
    %s245 = sphi 0, %s247
    %s248 = sphi 0, %s245
    %s249 = sphi 0, %s248
    %s265 = sphi 0, %s249
    %s271 = sphi 0, %s273
    %s274 = sphi 0, %s271
    %s275 = sphi 0, %s274
    %s291 = sphi 0, %s275
    %s297 = sphi 0, %s299
    %s300 = sphi 0, %s297
    %s301 = sphi 0, %s300
    %s317 = sphi 0, %s301
    %s323 = sphi 0, %s325
    %s326 = sphi 0, %s323
    %s327 = sphi 0, %s326
    %s343 = sphi 0, %s327
    %s349 = sphi 0, %s351
    %s352 = sphi 0, %s349
    %s353 = sphi 0, %s352
    %s369 = sphi 0, %s353
    %s375 = sphi 0, %s377
    %s378 = sphi 0, %s375
    %s379 = sphi 0, %s378
    %s395 = sphi 0, %s379
    %s401 = sphi 0, %s403
    %s404 = sphi 0, %s401
    %s405 = sphi 0, %s404
    %s421 = sphi 0, %s405
  $region4: #{context_transformer_forward.3} parent=0 // loop_header_branch
    %23 = sbr.rel (%p21) target = $region8
  $region5: #{context_transformer_forward.3} parent=0 // loop_body
    %s25 = ssub.s32 %s20, 1
    %s26 = ssub.s32 %s20, 2
    %s33 = sadd.s32 1, %s28
    %p34 = scmp.ge.s32.totalorder %s33, 2
    %s35 = scalar_select %p34, 0, %s33
    %s36 = sadd.s32 1, %s27
    %s37 = scalar_select %p34, %s36, %s27
    %p38 = scmp.ge.s32.totalorder %s37, 2
    %s39 = scalar_select %p38, 0, %s37
    %s40 = ssub.s32 %s27, %s39
    %p41 = scmp.eq.s32.totalorder %s40, 0
    %s43 = sadd.s32 %s42, 1
    %s44 = scalar_select %p41, %s42, %s43
    %p47 = pneg %p41
    %p48 = scmp.eq.s32.totalorder %s20, 3
    %p49 = por %p47, %p48
    %p50 = scmp.ne.s32.totalorder %s42, %s45
    %p51 = scmp.eq.s32.totalorder %s20, 0
    %p52 = por %p50, %p51
    %p53 = scmp.ne.s32.totalorder %s42, %s45
    %p54 = scmp.eq.s32.totalorder %s25, 3
    %p55 = por %p53, %p54
    %p56 = scmp.ne.s32.totalorder %s45, %s46
    %p57 = scmp.eq.s32.totalorder %s25, 0
    %p58 = por %p56, %p57
    %p59 = scmp.ne.s32.totalorder %s45, %s46
    %p60 = scmp.eq.s32.totalorder %s26, 3
    %p61 = por %p59, %p60
    %p63 = scmp.ne.s32.totalorder %s46, %s62
    %p64 = scmp.eq.s32.totalorder %s26, 0
    %p65 = por %p63, %p64
    %s67 = sadd.s32 %s66, 1
    %p70 = scmp.eq.s32.totalorder %s20, 3
    %p71 = scmp.ne.s32.totalorder %s66, %s68
    %p72 = scmp.eq.s32.totalorder %s20, 0
    %p73 = por %p71, %p72
    %p74 = scmp.ne.s32.totalorder %s66, %s68
    %p75 = scmp.eq.s32.totalorder %s25, 3
    %p76 = por %p74, %p75
    %p77 = scmp.ne.s32.totalorder %s68, %s69
    %p78 = scmp.eq.s32.totalorder %s25, 0
    %p79 = por %p77, %p78
    %p80 = scmp.ne.s32.totalorder %s68, %s69
    %p81 = scmp.eq.s32.totalorder %s26, 3
    %p82 = por %p80, %p81
    %p84 = scmp.ne.s32.totalorder %s69, %s83
    %p85 = scmp.eq.s32.totalorder %s26, 0
    %p86 = por %p84, %p85
    %s87 = ssub.s32 %s28, %s35
    %p88 = scmp.eq.s32.totalorder %s87, 0
    %s90 = sadd.s32 %s89, 1
    %s91 = scalar_select %p88, %s89, %s90
    %p94 = pneg %p88
    %p95 = scmp.eq.s32.totalorder %s20, 3
    %p96 = por %p94, %p95
    %p97 = scmp.ne.s32.totalorder %s89, %s92
    %p98 = scmp.eq.s32.totalorder %s20, 0
    %p99 = por %p97, %p98
    %p100 = scmp.ne.s32.totalorder %s89, %s92
    %p101 = scmp.eq.s32.totalorder %s25, 3
    %p102 = por %p100, %p101
    %p103 = scmp.ne.s32.totalorder %s92, %s93
    %p104 = scmp.eq.s32.totalorder %s25, 0
    %p105 = por %p103, %p104
    %p106 = scmp.ne.s32.totalorder %s92, %s93
    %p107 = scmp.eq.s32.totalorder %s26, 3
    %p108 = por %p106, %p107
    %p110 = scmp.ne.s32.totalorder %s93, %s109
    %p111 = scmp.eq.s32.totalorder %s26, 0
    %p112 = por %p110, %p111
    %s113 = ssub.s32 %s28, %s35
    %p114 = scmp.eq.s32.totalorder %s113, 0
    %s116 = sadd.s32 %s115, 1
    %s117 = scalar_select %p114, %s115, %s116
    %p120 = pneg %p114
    %p121 = scmp.eq.s32.totalorder %s20, 3
    %p122 = por %p120, %p121
    %p123 = scmp.ne.s32.totalorder %s115, %s118
    %p124 = scmp.eq.s32.totalorder %s20, 0
    %p125 = por %p123, %p124
    %p126 = scmp.ne.s32.totalorder %s115, %s118
    %p127 = scmp.eq.s32.totalorder %s25, 3
    %p128 = por %p126, %p127
    %p129 = scmp.ne.s32.totalorder %s118, %s119
    %p130 = scmp.eq.s32.totalorder %s25, 0
    %p131 = por %p129, %p130
    %p132 = scmp.ne.s32.totalorder %s118, %s119
    %p133 = scmp.eq.s32.totalorder %s26, 3
    %p134 = por %p132, %p133
    %p136 = scmp.ne.s32.totalorder %s119, %s135
    %p137 = scmp.eq.s32.totalorder %s26, 0
    %p138 = por %p136, %p137
    %s139 = ssub.s32 %s28, %s35
    %p140 = scmp.eq.s32.totalorder %s139, 0
    %s142 = sadd.s32 %s141, 1
    %s143 = scalar_select %p140, %s141, %s142
    %p146 = pneg %p140
    %p147 = scmp.eq.s32.totalorder %s20, 3
    %p148 = por %p146, %p147
    %p149 = scmp.ne.s32.totalorder %s141, %s144
    %p150 = scmp.eq.s32.totalorder %s20, 0
    %p151 = por %p149, %p150
    %p152 = scmp.ne.s32.totalorder %s141, %s144
    %p153 = scmp.eq.s32.totalorder %s25, 3
    %p154 = por %p152, %p153
    %p155 = scmp.ne.s32.totalorder %s144, %s145
    %p156 = scmp.eq.s32.totalorder %s25, 0
    %p157 = por %p155, %p156
    %p158 = scmp.ne.s32.totalorder %s144, %s145
    %p159 = scmp.eq.s32.totalorder %s26, 3
    %p160 = por %p158, %p159
    %p162 = scmp.ne.s32.totalorder %s145, %s161
    %p163 = scmp.eq.s32.totalorder %s26, 0
    %p164 = por %p162, %p163
    %s165 = ssub.s32 %s28, %s35
    %p166 = scmp.eq.s32.totalorder %s165, 0
    %s168 = sadd.s32 %s167, 1
    %s169 = scalar_select %p166, %s167, %s168
    %p172 = pneg %p166
    %p173 = scmp.eq.s32.totalorder %s20, 3
    %p174 = por %p172, %p173
    %p175 = scmp.ne.s32.totalorder %s167, %s170
    %p176 = scmp.eq.s32.totalorder %s20, 0
    %p177 = por %p175, %p176
    %p178 = scmp.ne.s32.totalorder %s167, %s170
    %p179 = scmp.eq.s32.totalorder %s25, 3
    %p180 = por %p178, %p179
    %p181 = scmp.ne.s32.totalorder %s170, %s171
    %p182 = scmp.eq.s32.totalorder %s25, 0
    %p183 = por %p181, %p182
    %p184 = scmp.ne.s32.totalorder %s170, %s171
    %p185 = scmp.eq.s32.totalorder %s26, 3
    %p186 = por %p184, %p185
    %p188 = scmp.ne.s32.totalorder %s171, %s187
    %p189 = scmp.eq.s32.totalorder %s26, 0
    %p190 = por %p188, %p189
    %s191 = ssub.s32 %s28, %s35
    %p192 = scmp.eq.s32.totalorder %s191, 0
    %s194 = sadd.s32 %s193, 1
    %s195 = scalar_select %p192, %s193, %s194
    %p198 = pneg %p192
    %p199 = scmp.eq.s32.totalorder %s20, 3
    %p200 = por %p198, %p199
    %p201 = scmp.ne.s32.totalorder %s193, %s196
    %p202 = scmp.eq.s32.totalorder %s20, 0
    %p203 = por %p201, %p202
    %p204 = scmp.ne.s32.totalorder %s193, %s196
    %p205 = scmp.eq.s32.totalorder %s25, 3
    %p206 = por %p204, %p205
    %p207 = scmp.ne.s32.totalorder %s196, %s197
    %p208 = scmp.eq.s32.totalorder %s25, 0
    %p209 = por %p207, %p208
    %p210 = scmp.ne.s32.totalorder %s196, %s197
    %p211 = scmp.eq.s32.totalorder %s26, 3
    %p212 = por %p210, %p211
    %p214 = scmp.ne.s32.totalorder %s197, %s213
    %p215 = scmp.eq.s32.totalorder %s26, 0
    %p216 = por %p214, %p215
    %s217 = ssub.s32 %s28, %s35
    %p218 = scmp.eq.s32.totalorder %s217, 0
    %s220 = sadd.s32 %s219, 1
    %s221 = scalar_select %p218, %s219, %s220
    %p224 = pneg %p218
    %p225 = scmp.eq.s32.totalorder %s20, 3
    %p226 = por %p224, %p225
    %p227 = scmp.ne.s32.totalorder %s219, %s222
    %p228 = scmp.eq.s32.totalorder %s20, 0
    %p229 = por %p227, %p228
    %p230 = scmp.ne.s32.totalorder %s219, %s222
    %p231 = scmp.eq.s32.totalorder %s25, 3
    %p232 = por %p230, %p231
    %p233 = scmp.ne.s32.totalorder %s222, %s223
    %p234 = scmp.eq.s32.totalorder %s25, 0
    %p235 = por %p233, %p234
    %p236 = scmp.ne.s32.totalorder %s222, %s223
    %p237 = scmp.eq.s32.totalorder %s26, 3
    %p238 = por %p236, %p237
    %p240 = scmp.ne.s32.totalorder %s223, %s239
    %p241 = scmp.eq.s32.totalorder %s26, 0
    %p242 = por %p240, %p241
    %s243 = ssub.s32 %s28, %s35
    %p244 = scmp.eq.s32.totalorder %s243, 0
    %s246 = sadd.s32 %s245, 1
    %s247 = scalar_select %p244, %s245, %s246
    %p250 = pneg %p244
    %p251 = scmp.eq.s32.totalorder %s20, 3
    %p252 = por %p250, %p251
    %p253 = scmp.ne.s32.totalorder %s245, %s248
    %p254 = scmp.eq.s32.totalorder %s20, 0
    %p255 = por %p253, %p254
    %p256 = scmp.ne.s32.totalorder %s245, %s248
    %p257 = scmp.eq.s32.totalorder %s25, 3
    %p258 = por %p256, %p257
    %p259 = scmp.ne.s32.totalorder %s248, %s249
    %p260 = scmp.eq.s32.totalorder %s25, 0
    %p261 = por %p259, %p260
    %p262 = scmp.ne.s32.totalorder %s248, %s249
    %p263 = scmp.eq.s32.totalorder %s26, 3
    %p264 = por %p262, %p263
    %p266 = scmp.ne.s32.totalorder %s249, %s265
    %p267 = scmp.eq.s32.totalorder %s26, 0
    %p268 = por %p266, %p267
    %s269 = ssub.s32 %s28, %s35
    %p270 = scmp.eq.s32.totalorder %s269, 0
    %s272 = sadd.s32 %s271, 1
    %s273 = scalar_select %p270, %s271, %s272
    %p276 = pneg %p270
    %p277 = scmp.eq.s32.totalorder %s20, 3
    %p278 = por %p276, %p277
    %p279 = scmp.ne.s32.totalorder %s271, %s274
    %p280 = scmp.eq.s32.totalorder %s20, 0
    %p281 = por %p279, %p280
    %p282 = scmp.ne.s32.totalorder %s271, %s274
    %p283 = scmp.eq.s32.totalorder %s25, 3
    %p284 = por %p282, %p283
    %p285 = scmp.ne.s32.totalorder %s274, %s275
    %p286 = scmp.eq.s32.totalorder %s25, 0
    %p287 = por %p285, %p286
    %p288 = scmp.ne.s32.totalorder %s274, %s275
    %p289 = scmp.eq.s32.totalorder %s26, 3
    %p290 = por %p288, %p289
    %p292 = scmp.ne.s32.totalorder %s275, %s291
    %p293 = scmp.eq.s32.totalorder %s26, 0
    %p294 = por %p292, %p293
    %s295 = ssub.s32 %s28, %s35
    %p296 = scmp.eq.s32.totalorder %s295, 0
    %s298 = sadd.s32 %s297, 1
    %s299 = scalar_select %p296, %s297, %s298
    %p302 = pneg %p296
    %p303 = scmp.eq.s32.totalorder %s20, 3
    %p304 = por %p302, %p303
    %p305 = scmp.ne.s32.totalorder %s297, %s300
    %p306 = scmp.eq.s32.totalorder %s20, 0
    %p307 = por %p305, %p306
    %p308 = scmp.ne.s32.totalorder %s297, %s300
    %p309 = scmp.eq.s32.totalorder %s25, 3
    %p310 = por %p308, %p309
    %p311 = scmp.ne.s32.totalorder %s300, %s301
    %p312 = scmp.eq.s32.totalorder %s25, 0
    %p313 = por %p311, %p312
    %p314 = scmp.ne.s32.totalorder %s300, %s301
    %p315 = scmp.eq.s32.totalorder %s26, 3
    %p316 = por %p314, %p315
    %p318 = scmp.ne.s32.totalorder %s301, %s317
    %p319 = scmp.eq.s32.totalorder %s26, 0
    %p320 = por %p318, %p319
    %s321 = ssub.s32 %s28, %s35
    %p322 = scmp.eq.s32.totalorder %s321, 0
    %s324 = sadd.s32 %s323, 1
    %s325 = scalar_select %p322, %s323, %s324
    %p328 = pneg %p322
    %p329 = scmp.eq.s32.totalorder %s20, 3
    %p330 = por %p328, %p329
    %p331 = scmp.ne.s32.totalorder %s323, %s326
    %p332 = scmp.eq.s32.totalorder %s20, 0
    %p333 = por %p331, %p332
    %p334 = scmp.ne.s32.totalorder %s323, %s326
    %p335 = scmp.eq.s32.totalorder %s25, 3
    %p336 = por %p334, %p335
    %p337 = scmp.ne.s32.totalorder %s326, %s327
    %p338 = scmp.eq.s32.totalorder %s25, 0
    %p339 = por %p337, %p338
    %p340 = scmp.ne.s32.totalorder %s326, %s327
    %p341 = scmp.eq.s32.totalorder %s26, 3
    %p342 = por %p340, %p341
    %p344 = scmp.ne.s32.totalorder %s327, %s343
    %p345 = scmp.eq.s32.totalorder %s26, 0
    %p346 = por %p344, %p345
    %s347 = ssub.s32 %s28, %s35
    %p348 = scmp.eq.s32.totalorder %s347, 0
    %s350 = sadd.s32 %s349, 1
    %s351 = scalar_select %p348, %s349, %s350
    %p354 = pneg %p348
    %p355 = scmp.eq.s32.totalorder %s20, 3
    %p356 = por %p354, %p355
    %p357 = scmp.ne.s32.totalorder %s349, %s352
    %p358 = scmp.eq.s32.totalorder %s20, 0
    %p359 = por %p357, %p358
    %p360 = scmp.ne.s32.totalorder %s349, %s352
    %p361 = scmp.eq.s32.totalorder %s25, 3
    %p362 = por %p360, %p361
    %p363 = scmp.ne.s32.totalorder %s352, %s353
    %p364 = scmp.eq.s32.totalorder %s25, 0
    %p365 = por %p363, %p364
    %p366 = scmp.ne.s32.totalorder %s352, %s353
    %p367 = scmp.eq.s32.totalorder %s26, 3
    %p368 = por %p366, %p367
    %p370 = scmp.ne.s32.totalorder %s353, %s369
    %p371 = scmp.eq.s32.totalorder %s26, 0
    %p372 = por %p370, %p371
    %s373 = ssub.s32 %s28, %s35
    %p374 = scmp.eq.s32.totalorder %s373, 0
    %s376 = sadd.s32 %s375, 1
    %s377 = scalar_select %p374, %s375, %s376
    %p380 = pneg %p374
    %p381 = scmp.eq.s32.totalorder %s20, 3
    %p382 = por %p380, %p381
    %p383 = scmp.ne.s32.totalorder %s375, %s378
    %p384 = scmp.eq.s32.totalorder %s20, 0
    %p385 = por %p383, %p384
    %p386 = scmp.ne.s32.totalorder %s375, %s378
    %p387 = scmp.eq.s32.totalorder %s25, 3
    %p388 = por %p386, %p387
    %p389 = scmp.ne.s32.totalorder %s378, %s379
    %p390 = scmp.eq.s32.totalorder %s25, 0
    %p391 = por %p389, %p390
    %p392 = scmp.ne.s32.totalorder %s378, %s379
    %p393 = scmp.eq.s32.totalorder %s26, 3
    %p394 = por %p392, %p393
    %p396 = scmp.ne.s32.totalorder %s379, %s395
    %p397 = scmp.eq.s32.totalorder %s26, 0
    %p398 = por %p396, %p397
    %s399 = ssub.s32 %s27, %s39
    %p400 = scmp.eq.s32.totalorder %s399, 0
    %s402 = sadd.s32 %s401, 1
    %s403 = scalar_select %p400, %s401, %s402
    %p406 = pneg %p400
    %p407 = scmp.eq.s32.totalorder %s20, 3
    %p408 = por %p406, %p407
    %p409 = scmp.ne.s32.totalorder %s401, %s404
    %p410 = scmp.eq.s32.totalorder %s20, 0
    %p411 = por %p409, %p410
    %p412 = scmp.ne.s32.totalorder %s401, %s404
    %p413 = scmp.eq.s32.totalorder %s25, 3
    %p414 = por %p412, %p413
    %p415 = scmp.ne.s32.totalorder %s404, %s405
    %p416 = scmp.eq.s32.totalorder %s25, 0
    %p417 = por %p415, %p416
    %p418 = scmp.ne.s32.totalorder %s404, %s405
    %p419 = scmp.eq.s32.totalorder %s26, 3
    %p420 = por %p418, %p419
    %p422 = scmp.ne.s32.totalorder %s405, %s421
    %p423 = scmp.eq.s32.totalorder %s26, 0
    %p424 = por %p422, %p423
    %p425 = scmp.le.s32.totalorder 1, %s20
    %p426 = scmp.lt.s32.totalorder %s20, 5
    %p427 = pnand %p425, %p426
    %p428 = pneg %p427
    // Predicated region
    $region9: #{context_transformer_forward.3} parent=5 // pred_check
      _
    $region10: #{context_transformer_forward.3} parent=5 // pred_check_branch
      %430 = sbr.rel (%p427) target = $region12
    $region11: #{context_transformer_forward.3} parent=5 // pred_region
      %s431 = ssub.s32 %s20, 1
      // Predicated region
      $region13: #{context_transformer_forward.3} parent=11 // pred_check
        %p432 = pneg %p79
      $region14: #{context_transformer_forward.3} parent=11 // pred_check_branch
        %434 = sbr.rel (%p432) target = $region16
      $region15: #{context_transformer_forward.3} parent=11 // pred_region
        _
      $region16: #{context_transformer_forward.3} parent=11 // pred_fallthru
        _
    $region12: #{context_transformer_forward.3} parent=5 // pred_fallthru
      _
    %p435 = scmp.lt.s32.totalorder %s20, 4
    // Predicated region
    $region17: #{context_transformer_forward.3} parent=5 // pred_check
      %p436 = pneg %p435
    $region18: #{context_transformer_forward.3} parent=5 // pred_check_branch
      %438 = sbr.rel (%p436) target = $region20
    $region19: #{context_transformer_forward.3} parent=5 // pred_region
      // Predicated region
      $region21: #{context_transformer_forward.3} parent=19 // pred_check
        %p439 = pneg %p52
      $region22: #{context_transformer_forward.3} parent=19 // pred_check_branch
        %441 = sbr.rel (%p439) target = $region24
      $region23: #{context_transformer_forward.3} parent=19 // pred_region
        %s442 = smul.u32 16, %s27
        %p443 = scmp.lt.s32.totalorder %s442, 31
        %s444 = scalar_select %p443, %s442, 31
        %s445 = smul.addr %s444, 8
        %s446 = scalar_lea.vmem %s0, %s445
        %s447 = smul.u32 16, %s27
      $region24: #{context_transformer_forward.3} parent=19 // pred_fallthru
        _
      // Predicated region
      $region25: #{context_transformer_forward.3} parent=19 // pred_check
        %p448 = pneg %p99
      $region26: #{context_transformer_forward.3} parent=19 // pred_check_branch
        %450 = sbr.rel (%p448) target = $region28
      $region27: #{context_transformer_forward.3} parent=19 // pred_region
        %p451 = scmp.lt.s32.totalorder %s28, 1
        %s452 = scalar_select %p451, %s28, 1
        %s453 = smul.addr %s452, 4
        %s454 = smul.addr %s453, 4
        %s455 = scalar_lea.vmem %s2, %s454
      $region28: #{context_transformer_forward.3} parent=19 // pred_fallthru
        _
      // Predicated region
      $region29: #{context_transformer_forward.3} parent=19 // pred_check
        %p456 = pneg %p125
      $region30: #{context_transformer_forward.3} parent=19 // pred_check_branch
        %458 = sbr.rel (%p456) target = $region32
      $region31: #{context_transformer_forward.3} parent=19 // pred_region
        %p459 = scmp.lt.s32.totalorder %s28, 1
        %s460 = scalar_select %p459, %s28, 1
        %s461 = scalar_lea.vmem %s3, %s460
      $region32: #{context_transformer_forward.3} parent=19 // pred_fallthru
        _
      // Predicated region
      $region33: #{context_transformer_forward.3} parent=19 // pred_check
        %p462 = pneg %p151
      $region34: #{context_transformer_forward.3} parent=19 // pred_check_branch
        %464 = sbr.rel (%p462) target = $region36
      $region35: #{context_transformer_forward.3} parent=19 // pred_region
        %p465 = scmp.lt.s32.totalorder %s28, 1
        %s466 = scalar_select %p465, %s28, 1
        %s467 = smul.addr %s466, 4
        %s468 = smul.addr %s467, 4
        %s469 = scalar_lea.vmem %s4, %s468
      $region36: #{context_transformer_forward.3} parent=19 // pred_fallthru
        _
      // Predicated region
      $region37: #{context_transformer_forward.3} parent=19 // pred_check
        %p470 = pneg %p177
      $region38: #{context_transformer_forward.3} parent=19 // pred_check_branch
        %472 = sbr.rel (%p470) target = $region40
      $region39: #{context_transformer_forward.3} parent=19 // pred_region
        %p473 = scmp.lt.s32.totalorder %s28, 1
        %s474 = scalar_select %p473, %s28, 1
        %s475 = scalar_lea.vmem %s5, %s474
      $region40: #{context_transformer_forward.3} parent=19 // pred_fallthru
        _
      // Predicated region
      $region41: #{context_transformer_forward.3} parent=19 // pred_check
        %p476 = pneg %p203
      $region42: #{context_transformer_forward.3} parent=19 // pred_check_branch
        %478 = sbr.rel (%p476) target = $region44
      $region43: #{context_transformer_forward.3} parent=19 // pred_region
        %p479 = scmp.lt.s32.totalorder %s28, 1
        %s480 = scalar_select %p479, %s28, 1
        %s481 = scalar_lea.vmem %s6, %s480
      $region44: #{context_transformer_forward.3} parent=19 // pred_fallthru
        _
      // Predicated region
      $region45: #{context_transformer_forward.3} parent=19 // pred_check
        %p482 = pneg %p229
      $region46: #{context_transformer_forward.3} parent=19 // pred_check_branch
        %484 = sbr.rel (%p482) target = $region48
      $region47: #{context_transformer_forward.3} parent=19 // pred_region
        %p485 = scmp.lt.s32.totalorder %s28, 1
        %s486 = scalar_select %p485, %s28, 1
        %s487 = scalar_lea.vmem %s7, %s486
      $region48: #{context_transformer_forward.3} parent=19 // pred_fallthru
        _
      // Predicated region
      $region49: #{context_transformer_forward.3} parent=19 // pred_check
        %p488 = pneg %p255
      $region50: #{context_transformer_forward.3} parent=19 // pred_check_branch
        %490 = sbr.rel (%p488) target = $region52
      $region51: #{context_transformer_forward.3} parent=19 // pred_region
        %p491 = scmp.lt.s32.totalorder %s28, 1
        %s492 = scalar_select %p491, %s28, 1
        %s493 = smul.addr %s492, 4
        %s494 = smul.addr %s493, 4
        %s495 = scalar_lea.vmem %s8, %s494
      $region52: #{context_transformer_forward.3} parent=19 // pred_fallthru
        _
      // Predicated region
      $region53: #{context_transformer_forward.3} parent=19 // pred_check
        %p496 = pneg %p281
      $region54: #{context_transformer_forward.3} parent=19 // pred_check_branch
        %498 = sbr.rel (%p496) target = $region56
      $region55: #{context_transformer_forward.3} parent=19 // pred_region
        %p499 = scmp.lt.s32.totalorder %s28, 1
        %s500 = scalar_select %p499, %s28, 1
        %s501 = scalar_lea.vmem %s9, %s500
      $region56: #{context_transformer_forward.3} parent=19 // pred_fallthru
        _
      // Predicated region
      $region57: #{context_transformer_forward.3} parent=19 // pred_check
        %p502 = pneg %p307
      $region58: #{context_transformer_forward.3} parent=19 // pred_check_branch
        %504 = sbr.rel (%p502) target = $region60
      $region59: #{context_transformer_forward.3} parent=19 // pred_region
        %p505 = scmp.lt.s32.totalorder %s28, 1
        %s506 = scalar_select %p505, %s28, 1
        %s507 = smul.addr %s506, 8
        %s508 = smul.addr %s507, 4
        %s509 = scalar_lea.vmem %s10, %s508
      $region60: #{context_transformer_forward.3} parent=19 // pred_fallthru
        _
      // Predicated region
      $region61: #{context_transformer_forward.3} parent=19 // pred_check
        %p510 = pneg %p333
      $region62: #{context_transformer_forward.3} parent=19 // pred_check_branch
        %512 = sbr.rel (%p510) target = $region64
      $region63: #{context_transformer_forward.3} parent=19 // pred_region
        %p513 = scmp.lt.s32.totalorder %s28, 1
        %s514 = scalar_select %p513, %s28, 1
        %s515 = scalar_lea.vmem %s11, %s514
      $region64: #{context_transformer_forward.3} parent=19 // pred_fallthru
        _
      // Predicated region
      $region65: #{context_transformer_forward.3} parent=19 // pred_check
        %p516 = pneg %p359
      $region66: #{context_transformer_forward.3} parent=19 // pred_check_branch
        %518 = sbr.rel (%p516) target = $region68
      $region67: #{context_transformer_forward.3} parent=19 // pred_region
        %p519 = scmp.lt.s32.totalorder %s28, 1
        %s520 = scalar_select %p519, %s28, 1
        %s521 = scalar_lea.vmem %s12, %s520
      $region68: #{context_transformer_forward.3} parent=19 // pred_fallthru
        _
      // Predicated region
      $region69: #{context_transformer_forward.3} parent=19 // pred_check
        %p522 = pneg %p385
      $region70: #{context_transformer_forward.3} parent=19 // pred_check_branch
        %524 = sbr.rel (%p522) target = $region72
      $region71: #{context_transformer_forward.3} parent=19 // pred_region
        %p525 = scmp.lt.s32.totalorder %s28, 1
        %s526 = scalar_select %p525, %s28, 1
        %s527 = scalar_lea.vmem %s13, %s526
      $region72: #{context_transformer_forward.3} parent=19 // pred_fallthru
        _
    $region20: #{context_transformer_forward.3} parent=5 // pred_fallthru
      _
    %p528 = scmp.le.s32.totalorder 1, %s20
    %p529 = scmp.lt.s32.totalorder %s20, 5
    %p530 = pnand %p528, %p529
    %p531 = pneg %p530
    // Predicated region
    $region73: #{context_transformer_forward.3} parent=5 // pred_check
      _
    $region74: #{context_transformer_forward.3} parent=5 // pred_check_branch
      %533 = sbr.rel (%p530) target = $region76
    $region75: #{context_transformer_forward.3} parent=5 // pred_region
      %s534 = ssub.s32 %s20, 1
      %s535 = smul.u32 16, %s29
      %p536 = scmp.lt.s32.totalorder %s535, 31
      %s537 = scalar_select %p536, %s535, 31
      %s538 = smul.addr %s537, 8
      %s539 = scalar_lea.vmem %s0, %s538
      %p540 = pneg %p58
      %p541 = pneg %p55
      %p542 = pneg %p79
      %p543 = pneg %p76
      %p544 = scmp.lt.s32.totalorder %s30, 1
      %s545 = scalar_select %p544, %s30, 1
      %s546 = smul.addr %s545, 4
      %s547 = smul.addr %s546, 4
      %s548 = scalar_lea.vmem %s2, %s547
      %p549 = pneg %p105
      %p550 = pneg %p102
      %p551 = scmp.lt.s32.totalorder %s30, 1
      %s552 = scalar_select %p551, %s30, 1
      %s553 = scalar_lea.vmem %s3, %s552
      %p554 = pneg %p131
      %p555 = pneg %p128
      %p556 = scmp.lt.s32.totalorder %s30, 1
      %s557 = scalar_select %p556, %s30, 1
      %s558 = smul.addr %s557, 4
      %s559 = smul.addr %s558, 4
      %s560 = scalar_lea.vmem %s4, %s559
      %p561 = pneg %p157
      %p562 = pneg %p154
      %p563 = scmp.lt.s32.totalorder %s30, 1
      %s564 = scalar_select %p563, %s30, 1
      %s565 = scalar_lea.vmem %s5, %s564
      %p566 = pneg %p183
      %p567 = pneg %p180
      %p568 = scmp.lt.s32.totalorder %s30, 1
      %s569 = scalar_select %p568, %s30, 1
      %s570 = scalar_lea.vmem %s6, %s569
      %p571 = pneg %p209
      %p572 = pneg %p206
      %p573 = scmp.lt.s32.totalorder %s30, 1
      %s574 = scalar_select %p573, %s30, 1
      %s575 = scalar_lea.vmem %s7, %s574
      %p576 = pneg %p235
      %p577 = pneg %p232
      %p578 = scmp.lt.s32.totalorder %s30, 1
      %s579 = scalar_select %p578, %s30, 1
      %s580 = smul.addr %s579, 4
      %s581 = smul.addr %s580, 4
      %s582 = scalar_lea.vmem %s8, %s581
      %p583 = pneg %p261
      %p584 = pneg %p258
      %p585 = scmp.lt.s32.totalorder %s30, 1
      %s586 = scalar_select %p585, %s30, 1
      %s587 = scalar_lea.vmem %s9, %s586
      %p588 = pneg %p287
      %p589 = pneg %p284
      %p590 = scmp.lt.s32.totalorder %s30, 1
      %s591 = scalar_select %p590, %s30, 1
      %s592 = smul.addr %s591, 8
      %s593 = smul.addr %s592, 4
      %s594 = scalar_lea.vmem %s10, %s593
      %p595 = pneg %p313
      %p596 = pneg %p310
      %p597 = scmp.lt.s32.totalorder %s30, 1
      %s598 = scalar_select %p597, %s30, 1
      %s599 = scalar_lea.vmem %s11, %s598
      %p600 = pneg %p339
      %p601 = pneg %p336
      %p602 = scmp.lt.s32.totalorder %s30, 1
      %s603 = scalar_select %p602, %s30, 1
      %s604 = scalar_lea.vmem %s12, %s603
      %p605 = pneg %p365
      %p606 = pneg %p362
      %p607 = scmp.lt.s32.totalorder %s30, 1
      %s608 = scalar_select %p607, %s30, 1
      %s609 = scalar_lea.vmem %s13, %s608
      %p610 = pneg %p391
      %p611 = pneg %p388
      %p612 = pneg %p417
      %p613 = pneg %p414
      %s614 = smul.u32 16, %s29
      %p615 = scmp.lt.s32.totalorder %s614, 31
      %s616 = scalar_select %p615, %s614, 31
      %s617 = smul.addr %s616, 8
      %s618 = scalar_lea.vmem %s14, %s617
      %s619 = smul.u32 16, %s29
      %p620 = scmp.lt.s32.totalorder %s619, 31
      %s621 = scalar_select %p620, %s619, 31
      %s622 = smul.addr %s621, 8
      %s623 = scalar_lea.vmem %s0, %s622
      %s624 = smul.u32 16, %s29
      %p625 = scmp.lt.s32.totalorder %s30, 1
      %s626 = scalar_select %p625, %s30, 1
      %s627 = smul.addr %s626, 4
      %s628 = smul.addr %s627, 4
      %s629 = scalar_lea.vmem %s2, %s628
      %p630 = scmp.lt.s32.totalorder %s30, 1
      %s631 = scalar_select %p630, %s30, 1
      %s632 = scalar_lea.vmem %s3, %s631
      %p633 = scmp.lt.s32.totalorder %s30, 1
      %s634 = scalar_select %p633, %s30, 1
      %s635 = smul.addr %s634, 4
      %s636 = smul.addr %s635, 4
      %s637 = scalar_lea.vmem %s4, %s636
      %p638 = scmp.lt.s32.totalorder %s30, 1
      %s639 = scalar_select %p638, %s30, 1
      %s640 = scalar_lea.vmem %s5, %s639
      %p641 = scmp.lt.s32.totalorder %s30, 1
      %s642 = scalar_select %p641, %s30, 1
      %s643 = scalar_lea.vmem %s6, %s642
      %p644 = scmp.lt.s32.totalorder %s30, 1
      %s645 = scalar_select %p644, %s30, 1
      %s646 = scalar_lea.vmem %s7, %s645
      %p647 = scmp.lt.s32.totalorder %s30, 1
      %s648 = scalar_select %p647, %s30, 1
      %s649 = smul.addr %s648, 4
      %s650 = smul.addr %s649, 4
      %s651 = scalar_lea.vmem %s8, %s650
      %p652 = scmp.lt.s32.totalorder %s30, 1
      %s653 = scalar_select %p652, %s30, 1
      %s654 = scalar_lea.vmem %s9, %s653
      %p655 = scmp.lt.s32.totalorder %s30, 1
      %s656 = scalar_select %p655, %s30, 1
      %s657 = smul.addr %s656, 8
      %s658 = smul.addr %s657, 4
      %s659 = scalar_lea.vmem %s10, %s658
      %p660 = scmp.lt.s32.totalorder %s30, 1
      %s661 = scalar_select %p660, %s30, 1
      %s662 = scalar_lea.vmem %s11, %s661
      %p663 = scmp.lt.s32.totalorder %s30, 1
      %s664 = scalar_select %p663, %s30, 1
      %s665 = scalar_lea.vmem %s12, %s664
      %p666 = scmp.lt.s32.totalorder %s30, 1
      %s667 = scalar_select %p666, %s30, 1
      %s668 = scalar_lea.vmem %s13, %s667
      %s669 = smul.u32 16, %s29
      %p670 = scmp.lt.s32.totalorder %s669, 31
      %s671 = scalar_select %p670, %s669, 31
      %s672 = smul.addr %s671, 8
      %s673 = scalar_lea.vmem %s14, %s672
      %s674 = smul.u32 16, %s29
      %p676 = scmp.eq.s32.totalorder %s30, 0
      // Predicated region
      $region77: #{context_transformer_forward.3} parent=75 // pred_check
        %p677 = pneg %p676
      $region78: #{context_transformer_forward.3} parent=75 // pred_check_branch
        %679 = sbr.rel (%p677) target = $region80
      $region79: #{context_transformer_forward.3} parent=75 // pred_region
        %v680 = vld [vmem:[%s623] sm:$0xff]
        %v681 = vld [vmem:[%s623 + $0x8] sm:$0xff]
        %v682 = vld [vmem:[%s623 + $0x10] sm:$0xff]
        %v683 = vld [vmem:[%s623 + $0x18] sm:$0xff]
        %v684 = vld [vmem:[%s623 + $0x20] sm:$0xff]
        %v685 = vld [vmem:[%s623 + $0x28] sm:$0xff]
        %v686 = vld [vmem:[%s623 + $0x30] sm:$0xff]
        %v687 = vld [vmem:[%s623 + $0x38] sm:$0xff]
        %v688 = vld [vmem:[%s623 + $0x40] sm:$0xff]
        %v689 = vld [vmem:[%s623 + $0x48] sm:$0xff]
        %v690 = vld [vmem:[%s623 + $0x50] sm:$0xff]
        %v691 = vld [vmem:[%s623 + $0x58] sm:$0xff]
        %v692 = vld [vmem:[%s623 + $0x60] sm:$0xff]
        %v693 = vld [vmem:[%s623 + $0x68] sm:$0xff]
        %v694 = vld [vmem:[%s623 + $0x70] sm:$0xff]
        %v695 = vld [vmem:[%s623 + $0x78] sm:$0xff]
        %vm696 = vcmask 261120
        %697 = vst.msk [vmem:[#allocation2] sm:$0xff] %vm696, %v680
        %698 = vst.msk [vmem:[#allocation2 + $0x8] sm:$0xff] %vm696, %v681
        %699 = vst.msk [vmem:[#allocation2 + $0x10] sm:$0xff] %vm696, %v682
        %700 = vst.msk [vmem:[#allocation2 + $0x18] sm:$0xff] %vm696, %v683
        %701 = vst.msk [vmem:[#allocation2 + $0x20] sm:$0xff] %vm696, %v684
        %702 = vst.msk [vmem:[#allocation2 + $0x28] sm:$0xff] %vm696, %v685
        %703 = vst.msk [vmem:[#allocation2 + $0x30] sm:$0xff] %vm696, %v686
        %704 = vst.msk [vmem:[#allocation2 + $0x38] sm:$0xff] %vm696, %v687
        %705 = vst.msk [vmem:[#allocation2 + $0x40] sm:$0xff] %vm696, %v688
        %706 = vst.msk [vmem:[#allocation2 + $0x48] sm:$0xff] %vm696, %v689
        %707 = vst.msk [vmem:[#allocation2 + $0x50] sm:$0xff] %vm696, %v690
        %708 = vst.msk [vmem:[#allocation2 + $0x58] sm:$0xff] %vm696, %v691
        %709 = vst.msk [vmem:[#allocation2 + $0x60] sm:$0xff] %vm696, %v692
        %710 = vst.msk [vmem:[#allocation2 + $0x68] sm:$0xff] %vm696, %v693
        %711 = vst.msk [vmem:[#allocation2 + $0x70] sm:$0xff] %vm696, %v694
        %712 = vst.msk [vmem:[#allocation2 + $0x78] sm:$0xff] %vm696, %v695
      $region80: #{context_transformer_forward.3} parent=75 // pred_fallthru
        _
      %v713 = vld [vmem:[#allocation2] sm:$0xff]
      %v714 = vld [vmem:[#allocation2 + $0x8] sm:$0xff]
      %v715 = vld [vmem:[#allocation2 + $0x10] sm:$0xff]
      %v716 = vld [vmem:[#allocation2 + $0x18] sm:$0xff]
      %v717 = vld [vmem:[#allocation2 + $0x20] sm:$0xff]
      %v718 = vld [vmem:[#allocation2 + $0x28] sm:$0xff]
      %v719 = vld [vmem:[#allocation2 + $0x30] sm:$0xff]
      %v720 = vld [vmem:[#allocation2 + $0x38] sm:$0xff]
      %v721 = vld [vmem:[#allocation2 + $0x40] sm:$0xff]
      %v722 = vld [vmem:[#allocation2 + $0x48] sm:$0xff]
      %v723 = vld [vmem:[#allocation2 + $0x50] sm:$0xff]
      %v724 = vld [vmem:[#allocation2 + $0x58] sm:$0xff]
      %v725 = vld [vmem:[#allocation2 + $0x60] sm:$0xff]
      %v726 = vld [vmem:[#allocation2 + $0x68] sm:$0xff]
      %v727 = vld [vmem:[#allocation2 + $0x70] sm:$0xff]
      %v728 = vld [vmem:[#allocation2 + $0x78] sm:$0xff]
      %v729 = vpack.c.bf16 %v714, %v713
      %v730 = vpack.c.bf16 %v716, %v715
      %v731 = vpack.c.bf16 %v718, %v717
      %v732 = vpack.c.bf16 %v720, %v719
      %v733 = vpack.c.bf16 %v722, %v721
      %v734 = vpack.c.bf16 %v724, %v723
      %v735 = vpack.c.bf16 %v726, %v725
      %v736 = vpack.c.bf16 %v728, %v727
      %v737 = vld [vmem:[%s629] sm:$0xf]
      %v738 = vld [vmem:[%s629 + $0x4] sm:$0xf]
      %v739 = vld [vmem:[%s629 + $0x8] sm:$0xf]
      %v740 = vld [vmem:[%s629 + $0xc] sm:$0xf]
      %v741 = vld [vmem:[%s632] sm:$0x1]
      %v743 = vlaneseq
      %v744 = vshrl.u32 %v743, 7
      %v745 = vsub.s32 0, %v744
      %v746 = vrot.slane %v741, %v745
      %v752 = vunpack.c.l.b16 %v737
      %v753 = vunpack.c.l.b16 %v738
      %v754 = vunpack.c.l.b16 %v739
      %v755 = vunpack.c.l.b16 %v740
      %v756 = vpack.c.b16 %v753, %v752
      %v757 = vpack.c.b16 %v755, %v754
      %vm760 = vcmask 261120
      %v762 = vsel %vm760, %v729, 0
      %v765 = vsel %vm760, %v730, 0
      %v768 = vsel %vm760, %v731, 0
      %v771 = vsel %vm760, %v732, 0
      %v774 = vsel %vm760, %v733, 0
      %v777 = vsel %vm760, %v734, 0
      %v780 = vsel %vm760, %v735, 0
      %v783 = vsel %vm760, %v736, 0
      %785 = vmatprep.subr.bf16.mxu0 0
      %786 = vmatpush1.bf16.msra.mxu0 %v756
      %787 = vmatprep.subr.bf16.mxu0 0
      %788 = vmatpush1.bf16.msra.mxu0 %v757
      %789 = vmatprep.subr.bf16.mxu0 0
      %790 = vmatpush1.bf16.msra.mxu0 0
      %791 = vmatprep.subr.bf16.mxu0 0
      %792 = vmatpush1.bf16.msra.mxu0 0
      %793 = vmatprep.subr.bf16.mxu0 0
      %794 = vmatpush1.bf16.msra.mxu0 0
      %795 = vmatprep.subr.bf16.mxu0 0
      %796 = vmatpush1.bf16.msra.mxu0 0
      %797 = vmatprep.subr.bf16.mxu0 0
      %798 = vmatpush1.bf16.msra.mxu0 0
      %799 = vmatprep.subr.bf16.mxu0 0
      %800 = vmatpush1.bf16.msra.mxu0 0
      %801 = vmatprep.subr.bf16.mxu0 0
      %802 = vmatpush1.bf16.msra.mxu0 0
      %803 = vmatprep.subr.bf16.mxu0 0
      %804 = vmatpush1.bf16.msra.mxu0 0
      %805 = vmatprep.subr.bf16.mxu0 0
      %806 = vmatpush1.bf16.msra.mxu0 0
      %807 = vmatprep.subr.bf16.mxu0 0
      %808 = vmatpush1.bf16.msra.mxu0 0
      %809 = vmatprep.subr.bf16.mxu0 0
      %810 = vmatpush1.bf16.msra.mxu0 0
      %811 = vmatprep.subr.bf16.mxu0 0
      %812 = vmatpush1.bf16.msra.mxu0 0
      %813 = vmatprep.subr.bf16.mxu0 0
      %814 = vmatpush1.bf16.msra.mxu0 0
      %815 = vmatprep.subr.bf16.mxu0 0
      %816 = vmatpush1.bf16.msra.mxu0 0
      %817 = vmatprep.mubr.bf16.mxu0 0
      %818 = vmatmul.mubr.bf16.gmra.mrb[0].mxu0 %v762
      %v819 = vpop.f32.mrb[0].mxu0
      %v820 = vadd.f32 %v746, %v819
      %v821 = vpop.f32.mrb[0].mxu0
      %v822 = vpop.f32.mrb[0].mxu0
      %v823 = vadd.f32 %v746, %v822
      %v824 = vpop.f32.mrb[0].mxu0
      %825 = vmatprep.mubr.bf16.mxu0 0
      %826 = vmatmul.mubr.bf16.gmra.mrb[0].mxu0 %v765
      %v827 = vpop.f32.mrb[0].mxu0
      %v828 = vadd.f32 %v746, %v827
      %v829 = vpop.f32.mrb[0].mxu0
      %v830 = vpop.f32.mrb[0].mxu0
      %v831 = vadd.f32 %v746, %v830
      %v832 = vpop.f32.mrb[0].mxu0
      %833 = vmatprep.mubr.bf16.mxu0 0
      %834 = vmatmul.mubr.bf16.gmra.mrb[0].mxu0 %v768
      %v835 = vpop.f32.mrb[0].mxu0
      %v836 = vadd.f32 %v746, %v835
      %v837 = vpop.f32.mrb[0].mxu0
      %v838 = vpop.f32.mrb[0].mxu0
      %v839 = vadd.f32 %v746, %v838
      %v840 = vpop.f32.mrb[0].mxu0
      %841 = vmatprep.mubr.bf16.mxu0 0
      %842 = vmatmul.mubr.bf16.gmra.mrb[0].mxu0 %v771
      %v843 = vpop.f32.mrb[0].mxu0
      %v844 = vadd.f32 %v746, %v843
      %v845 = vpop.f32.mrb[0].mxu0
      %v846 = vpop.f32.mrb[0].mxu0
      %v847 = vadd.f32 %v746, %v846
      %v848 = vpop.f32.mrb[0].mxu0
      %849 = vmatprep.mubr.bf16.mxu0 0
      %850 = vmatmul.mubr.bf16.gmra.mrb[0].mxu0 %v774
      %v851 = vpop.f32.mrb[0].mxu0
      %v852 = vadd.f32 %v746, %v851
      %v853 = vpop.f32.mrb[0].mxu0
      %v854 = vpop.f32.mrb[0].mxu0
      %v855 = vadd.f32 %v746, %v854
      %v856 = vpop.f32.mrb[0].mxu0
      %857 = vmatprep.mubr.bf16.mxu0 0
      %858 = vmatmul.mubr.bf16.gmra.mrb[0].mxu0 %v777
      %v859 = vpop.f32.mrb[0].mxu0
      %v860 = vadd.f32 %v746, %v859
      %v861 = vpop.f32.mrb[0].mxu0
      %v862 = vpop.f32.mrb[0].mxu0
      %v863 = vadd.f32 %v746, %v862
      %v864 = vpop.f32.mrb[0].mxu0
      %865 = vmatprep.mubr.bf16.mxu0 0
      %866 = vmatmul.mubr.bf16.gmra.mrb[0].mxu0 %v780
      %v867 = vpop.f32.mrb[0].mxu0
      %v868 = vadd.f32 %v746, %v867
      %v869 = vpop.f32.mrb[0].mxu0
      %v870 = vpop.f32.mrb[0].mxu0
      %v871 = vadd.f32 %v746, %v870
      %v872 = vpop.f32.mrb[0].mxu0
      %873 = vmatprep.mubr.bf16.mxu0 0
      %874 = vmatmul.mubr.bf16.gmra.mrb[0].mxu0 %v783
      %v875 = vpop.f32.mrb[0].mxu0
      %v876 = vadd.f32 %v746, %v875
      %v877 = vpop.f32.mrb[0].mxu0
      %v878 = vpop.f32.mrb[0].mxu0
      %v879 = vadd.f32 %v746, %v878
      %v880 = vpop.f32.mrb[0].mxu0
      %881 = vdwg.mxu0
      %v882 = vmul.f32 %v820, 0.35355338
      %v883 = vmul.f32 %v823, 0.35355338
      %v884 = vmul.f32 %v828, 0.35355338
      %v885 = vmul.f32 %v831, 0.35355338
      %v886 = vmul.f32 %v836, 0.35355338
      %v887 = vmul.f32 %v839, 0.35355338
      %v888 = vmul.f32 %v844, 0.35355338
      %v889 = vmul.f32 %v847, 0.35355338
      %v890 = vmul.f32 %v852, 0.35355338
      %v891 = vmul.f32 %v855, 0.35355338
      %v892 = vmul.f32 %v860, 0.35355338
      %v893 = vmul.f32 %v863, 0.35355338
      %v894 = vmul.f32 %v868, 0.35355338
      %v895 = vmul.f32 %v871, 0.35355338
      %v896 = vmul.f32 %v876, 0.35355338
      %v897 = vmul.f32 %v879, 0.35355338
      %v898 = vpack.c.bf16 %v883, %v882
      %v899 = vpack.c.bf16 %v885, %v884
      %v900 = vpack.c.bf16 %v887, %v886
      %v901 = vpack.c.bf16 %v889, %v888
      %v902 = vpack.c.bf16 %v891, %v890
      %v903 = vpack.c.bf16 %v893, %v892
      %v904 = vpack.c.bf16 %v895, %v894
      %v905 = vpack.c.bf16 %v897, %v896
      %v906 = vpack.c.bf16 %v823, %v820
      %v907 = vpack.c.bf16 %v831, %v828
      %v908 = vpack.c.bf16 %v839, %v836
      %v909 = vpack.c.bf16 %v847, %v844
      %v910 = vpack.c.bf16 %v855, %v852
      %v911 = vpack.c.bf16 %v863, %v860
      %v912 = vpack.c.bf16 %v871, %v868
      %v913 = vpack.c.bf16 %v879, %v876
      %v914 = vld [vmem:[%s1] sm:$0x1]
      %v916 = vlaneseq
      %v917 = vshrl.u32 %v916, 7
      %v918 = vsub.s32 0, %v917
      %v919 = vrot.slane %v914, %v918
      %929 = vrot.lane.b32.xlu0 %v906, 96
      %v930 = vpop.permute.xlu0 %929
      %931 = vrot.lane.b32.xlu0 %v907, 96
      %v932 = vpop.permute.xlu0 %931
      %933 = vrot.lane.b32.xlu0 %v908, 96
      %v934 = vpop.permute.xlu0 %933
      %935 = vrot.lane.b32.xlu0 %v909, 96
      %v936 = vpop.permute.xlu0 %935
      %937 = vrot.lane.b32.xlu0 %v910, 96
      %v938 = vpop.permute.xlu0 %937
      %939 = vrot.lane.b32.xlu0 %v911, 96
      %v940 = vpop.permute.xlu0 %939
      %941 = vrot.lane.b32.xlu0 %v912, 96
      %v942 = vpop.permute.xlu0 %941
      %943 = vrot.lane.b32.xlu0 %v913, 96
      %v944 = vpop.permute.xlu0 %943
      %vm945 = vcmask 64512
      %v947 = vsel %vm945, %v898, 0
      %v950 = vsel %vm945, %v899, 0
      %v953 = vsel %vm945, %v900, 0
      %v956 = vsel %vm945, %v901, 0
      %v959 = vsel %vm945, %v902, 0
      %v962 = vsel %vm945, %v903, 0
      %v965 = vsel %vm945, %v904, 0
      %v968 = vsel %vm945, %v905, 0
      %v971 = vsel %vm945, %v930, 0
      %v974 = vsel %vm945, %v932, 0
      %v977 = vsel %vm945, %v934, 0
      %v980 = vsel %vm945, %v936, 0
      %v983 = vsel %vm945, %v938, 0
      %v986 = vsel %vm945, %v940, 0
      %v989 = vsel %vm945, %v942, 0
      %v992 = vsel %vm945, %v944, 0
      %994 = vmatprep.subr.bf16.mxu0 0
      %995 = vmatpush1.bf16.xpose.msra.mxu0 %v971
      %996 = vmatprep.subr.bf16.mxu0 0
      %997 = vmatpush1.bf16.xpose.msra.mxu0 %v974
      %998 = vmatprep.subr.bf16.mxu0 0
      %999 = vmatpush1.bf16.xpose.msra.mxu0 %v977
      %1000 = vmatprep.subr.bf16.mxu0 0
      %1001 = vmatpush1.bf16.xpose.msra.mxu0 %v980
      %1002 = vmatprep.subr.bf16.mxu0 0
      %1003 = vmatpush1.bf16.xpose.msra.mxu0 %v983
      %1004 = vmatprep.subr.bf16.mxu0 0
      %1005 = vmatpush1.bf16.xpose.msra.mxu0 %v986
      %1006 = vmatprep.subr.bf16.mxu0 0
      %1007 = vmatpush1.bf16.xpose.msra.mxu0 %v989
      %1008 = vmatprep.subr.bf16.mxu0 0
      %1009 = vmatpush1.bf16.xpose.msra.mxu0 %v992
      %1010 = vmatprep.subr.bf16.mxu0 0
      %1011 = vmatpush1.bf16.xpose.msra.mxu0 0
      %1012 = vmatprep.subr.bf16.mxu0 0
      %1013 = vmatpush1.bf16.xpose.msra.mxu0 0
      %1014 = vmatprep.subr.bf16.mxu0 0
      %1015 = vmatpush1.bf16.xpose.msra.mxu0 0
      %1016 = vmatprep.subr.bf16.mxu0 0
      %1017 = vmatpush1.bf16.xpose.msra.mxu0 0
      %1018 = vmatprep.subr.bf16.mxu0 0
      %1019 = vmatpush1.bf16.xpose.msra.mxu0 0
      %1020 = vmatprep.subr.bf16.mxu0 0
      %1021 = vmatpush1.bf16.xpose.msra.mxu0 0
      %1022 = vmatprep.subr.bf16.mxu0 0
      %1023 = vmatpush1.bf16.xpose.msra.mxu0 0
      %1024 = vmatprep.subr.bf16.mxu0 0
      %1025 = vmatpush1.bf16.xpose.msra.mxu0 0
      %1026 = vmatprep.mubr.bf16.mxu0 0
      %1027 = vmatmul.mubr.bf16.gmra.mrb[0].mxu0 %v947
      %v1028 = vpop.f32.mrb[0].mxu0
      %v1029 = vadd.f32 %v919, %v1028
      %v1030 = vpop.f32.mrb[0].mxu0
      %v1031 = vpop.f32.mrb[0].mxu0
      %v1032 = vadd.f32 %v919, %v1031
      %v1033 = vpop.f32.mrb[0].mxu0
      %1034 = vmatprep.mubr.bf16.mxu0 0
      %1035 = vmatmul.mubr.bf16.gmra.mrb[0].mxu0 %v950
      %v1036 = vpop.f32.mrb[0].mxu0
      %v1037 = vadd.f32 %v919, %v1036
      %v1038 = vpop.f32.mrb[0].mxu0
      %v1039 = vpop.f32.mrb[0].mxu0
      %v1040 = vadd.f32 %v919, %v1039
      %v1041 = vpop.f32.mrb[0].mxu0
      %1042 = vmatprep.mubr.bf16.mxu0 0
      %1043 = vmatmul.mubr.bf16.gmra.mrb[0].mxu0 %v953
      %v1044 = vpop.f32.mrb[0].mxu0
      %v1045 = vadd.f32 %v919, %v1044
      %v1046 = vpop.f32.mrb[0].mxu0
      %v1047 = vpop.f32.mrb[0].mxu0
      %v1048 = vadd.f32 %v919, %v1047
      %v1049 = vpop.f32.mrb[0].mxu0
      %1050 = vmatprep.mubr.bf16.mxu0 0
      %1051 = vmatmul.mubr.bf16.gmra.mrb[0].mxu0 %v956
      %v1052 = vpop.f32.mrb[0].mxu0
      %v1053 = vadd.f32 %v919, %v1052
      %v1054 = vpop.f32.mrb[0].mxu0
      %v1055 = vpop.f32.mrb[0].mxu0
      %v1056 = vadd.f32 %v919, %v1055
      %v1057 = vpop.f32.mrb[0].mxu0
      %1058 = vmatprep.mubr.bf16.mxu0 0
      %1059 = vmatmul.mubr.bf16.gmra.mrb[0].mxu0 %v959
      %v1060 = vpop.f32.mrb[0].mxu0
      %v1061 = vadd.f32 %v919, %v1060
      %v1062 = vpop.f32.mrb[0].mxu0
      %v1063 = vpop.f32.mrb[0].mxu0
      %v1064 = vadd.f32 %v919, %v1063
      %v1065 = vpop.f32.mrb[0].mxu0
      %1066 = vmatprep.mubr.bf16.mxu0 0
      %1067 = vmatmul.mubr.bf16.gmra.mrb[0].mxu0 %v962
      %v1068 = vpop.f32.mrb[0].mxu0
      %v1069 = vadd.f32 %v919, %v1068
      %v1070 = vpop.f32.mrb[0].mxu0
      %v1071 = vpop.f32.mrb[0].mxu0
      %v1072 = vadd.f32 %v919, %v1071
      %v1073 = vpop.f32.mrb[0].mxu0
      %1074 = vmatprep.mubr.bf16.mxu0 0
      %1075 = vmatmul.mubr.bf16.gmra.mrb[0].mxu0 %v965
      %v1076 = vpop.f32.mrb[0].mxu0
      %v1077 = vadd.f32 %v919, %v1076
      %v1078 = vpop.f32.mrb[0].mxu0
      %v1079 = vpop.f32.mrb[0].mxu0
      %v1080 = vadd.f32 %v919, %v1079
      %v1081 = vpop.f32.mrb[0].mxu0
      %1082 = vmatprep.mubr.bf16.mxu0 0
      %1083 = vmatmul.mubr.bf16.gmra.mrb[0].mxu0 %v968
      %v1084 = vpop.f32.mrb[0].mxu0
      %v1085 = vadd.f32 %v919, %v1084
      %v1086 = vpop.f32.mrb[0].mxu0
      %v1087 = vpop.f32.mrb[0].mxu0
      %v1088 = vadd.f32 %v919, %v1087
      %v1089 = vpop.f32.mrb[0].mxu0
      %1090 = vdwg.mxu0
      %1091 = vmax.xlane.f32.xlu0 %v1029
      %v1092 = vpop.xlane.xlu0 %1091
      %1093 = vmax.xlane.f32.xlu0 %v1032
      %v1094 = vpop.xlane.xlu0 %1093
      %1095 = vmax.xlane.f32.xlu0 %v1037
      %v1096 = vpop.xlane.xlu0 %1095
      %1097 = vmax.xlane.f32.xlu0 %v1040
      %v1098 = vpop.xlane.xlu0 %1097
      %1099 = vmax.xlane.f32.xlu0 %v1045
      %v1100 = vpop.xlane.xlu0 %1099
      %1101 = vmax.xlane.f32.xlu0 %v1048
      %v1102 = vpop.xlane.xlu0 %1101
      %1103 = vmax.xlane.f32.xlu0 %v1053
      %v1104 = vpop.xlane.xlu0 %1103
      %1105 = vmax.xlane.f32.xlu0 %v1056
      %v1106 = vpop.xlane.xlu0 %1105
      %1107 = vmax.xlane.f32.xlu0 %v1061
      %v1108 = vpop.xlane.xlu0 %1107
      %1109 = vmax.xlane.f32.xlu0 %v1064
      %v1110 = vpop.xlane.xlu0 %1109
      %1111 = vmax.xlane.f32.xlu0 %v1069
      %v1112 = vpop.xlane.xlu0 %1111
      %1113 = vmax.xlane.f32.xlu0 %v1072
      %v1114 = vpop.xlane.xlu0 %1113
      %1115 = vmax.xlane.f32.xlu0 %v1077
      %v1116 = vpop.xlane.xlu0 %1115
      %1117 = vmax.xlane.f32.xlu0 %v1080
      %v1118 = vpop.xlane.xlu0 %1117
      %1119 = vmax.xlane.f32.xlu0 %v1085
      %v1120 = vpop.xlane.xlu0 %1119
      %1121 = vmax.xlane.f32.xlu0 %v1088
      %v1122 = vpop.xlane.xlu0 %1121
      %v1123 = vsub.f32 %v1029, %v1092
      %v1124 = vsub.f32 %v1032, %v1094
      %v1125 = vsub.f32 %v1037, %v1096
      %v1126 = vsub.f32 %v1040, %v1098
      %v1127 = vsub.f32 %v1045, %v1100
      %v1128 = vsub.f32 %v1048, %v1102
      %v1129 = vsub.f32 %v1053, %v1104
      %v1130 = vsub.f32 %v1056, %v1106
      %v1131 = vsub.f32 %v1061, %v1108
      %v1132 = vsub.f32 %v1064, %v1110
      %v1133 = vsub.f32 %v1069, %v1112
      %v1134 = vsub.f32 %v1072, %v1114
      %v1135 = vsub.f32 %v1077, %v1116
      %v1136 = vsub.f32 %v1080, %v1118
      %v1137 = vsub.f32 %v1085, %v1120
      %v1138 = vsub.f32 %v1088, %v1122
      %v1139 = vmul.f32 %v1123, 1.442695
      %v1140 = vpow.pop %v1139
      %v1141 = vmul.f32 %v1124, 1.442695
      %v1142 = vpow.pop %v1141
      %v1143 = vmul.f32 %v1125, 1.442695
      %v1144 = vpow.pop %v1143
      %v1145 = vmul.f32 %v1126, 1.442695
      %v1146 = vpow.pop %v1145
      %v1147 = vmul.f32 %v1127, 1.442695
      %v1148 = vpow.pop %v1147
      %v1149 = vmul.f32 %v1128, 1.442695
      %v1150 = vpow.pop %v1149
      %v1151 = vmul.f32 %v1129, 1.442695
      %v1152 = vpow.pop %v1151
      %v1153 = vmul.f32 %v1130, 1.442695
      %v1154 = vpow.pop %v1153
      %v1155 = vmul.f32 %v1131, 1.442695
      %v1156 = vpow.pop %v1155
      %v1157 = vmul.f32 %v1132, 1.442695
      %v1158 = vpow.pop %v1157
      %v1159 = vmul.f32 %v1133, 1.442695
      %v1160 = vpow.pop %v1159
      %v1161 = vmul.f32 %v1134, 1.442695
      %v1162 = vpow.pop %v1161
      %v1163 = vmul.f32 %v1135, 1.442695
      %v1164 = vpow.pop %v1163
      %v1165 = vmul.f32 %v1136, 1.442695
      %v1166 = vpow.pop %v1165
      %v1167 = vmul.f32 %v1137, 1.442695
      %v1168 = vpow.pop %v1167
      %v1169 = vmul.f32 %v1138, 1.442695
      %v1170 = vpow.pop %v1169
      %1171 = vadd.xlane.f32.xlu0 %v1140
      %v1172 = vpop.xlane.xlu0 %1171
      %1173 = vadd.xlane.f32.xlu0 %v1142
      %v1174 = vpop.xlane.xlu0 %1173
      %1175 = vadd.xlane.f32.xlu0 %v1144
      %v1176 = vpop.xlane.xlu0 %1175
      %1177 = vadd.xlane.f32.xlu0 %v1146
      %v1178 = vpop.xlane.xlu0 %1177
      %1179 = vadd.xlane.f32.xlu0 %v1148
      %v1180 = vpop.xlane.xlu0 %1179
      %1181 = vadd.xlane.f32.xlu0 %v1150
      %v1182 = vpop.xlane.xlu0 %1181
      %1183 = vadd.xlane.f32.xlu0 %v1152
      %v1184 = vpop.xlane.xlu0 %1183
      %1185 = vadd.xlane.f32.xlu0 %v1154
      %v1186 = vpop.xlane.xlu0 %1185
      %1187 = vadd.xlane.f32.xlu0 %v1156
      %v1188 = vpop.xlane.xlu0 %1187
      %1189 = vadd.xlane.f32.xlu0 %v1158
      %v1190 = vpop.xlane.xlu0 %1189
      %1191 = vadd.xlane.f32.xlu0 %v1160
      %v1192 = vpop.xlane.xlu0 %1191
      %1193 = vadd.xlane.f32.xlu0 %v1162
      %v1194 = vpop.xlane.xlu0 %1193
      %1195 = vadd.xlane.f32.xlu0 %v1164
      %v1196 = vpop.xlane.xlu0 %1195
      %1197 = vadd.xlane.f32.xlu0 %v1166
      %v1198 = vpop.xlane.xlu0 %1197
      %1199 = vadd.xlane.f32.xlu0 %v1168
      %v1200 = vpop.xlane.xlu0 %1199
      %1201 = vadd.xlane.f32.xlu0 %v1170
      %v1202 = vpop.xlane.xlu0 %1201
      %v1203 = vrcp.pop %v1172
      %v1204 = vrcp.pop %v1174
      %v1205 = vrcp.pop %v1176
      %v1206 = vrcp.pop %v1178
      %v1207 = vrcp.pop %v1180
      %v1208 = vrcp.pop %v1182
      %v1209 = vrcp.pop %v1184
      %v1210 = vrcp.pop %v1186
      %v1211 = vrcp.pop %v1188
      %v1212 = vrcp.pop %v1190
      %v1213 = vrcp.pop %v1192
      %v1214 = vrcp.pop %v1194
      %v1215 = vrcp.pop %v1196
      %v1216 = vrcp.pop %v1198
      %v1217 = vrcp.pop %v1200
      %v1218 = vrcp.pop %v1202
      %v1219 = vmul.f32 %v1140, %v1203
      %v1220 = vmul.f32 %v1142, %v1204
      %v1221 = vmul.f32 %v1144, %v1205
      %v1222 = vmul.f32 %v1146, %v1206
      %v1223 = vmul.f32 %v1148, %v1207
      %v1224 = vmul.f32 %v1150, %v1208
      %v1225 = vmul.f32 %v1152, %v1209
      %v1226 = vmul.f32 %v1154, %v1210
      %v1227 = vmul.f32 %v1156, %v1211
      %v1228 = vmul.f32 %v1158, %v1212
      %v1229 = vmul.f32 %v1160, %v1213
      %v1230 = vmul.f32 %v1162, %v1214
      %v1231 = vmul.f32 %v1164, %v1215
      %v1232 = vmul.f32 %v1166, %v1216
      %v1233 = vmul.f32 %v1168, %v1217
      %v1234 = vmul.f32 %v1170, %v1218
      %v1235 = vpack.c.bf16 %v1220, %v1219
      %v1236 = vpack.c.bf16 %v1222, %v1221
      %v1237 = vpack.c.bf16 %v1224, %v1223
      %v1238 = vpack.c.bf16 %v1226, %v1225
      %v1239 = vpack.c.bf16 %v1228, %v1227
      %v1240 = vpack.c.bf16 %v1230, %v1229
      %v1241 = vpack.c.bf16 %v1232, %v1231
      %v1242 = vpack.c.bf16 %v1234, %v1233
      %1243 = vrot.lane.b32.xlu0 %v906, 64
      %v1244 = vpop.permute.xlu0 %1243
      %1245 = vrot.lane.b32.xlu0 %v907, 64
      %v1246 = vpop.permute.xlu0 %1245
      %1247 = vrot.lane.b32.xlu0 %v908, 64
      %v1248 = vpop.permute.xlu0 %1247
      %1249 = vrot.lane.b32.xlu0 %v909, 64
      %v1250 = vpop.permute.xlu0 %1249
      %1251 = vrot.lane.b32.xlu0 %v910, 64
      %v1252 = vpop.permute.xlu0 %1251
      %1253 = vrot.lane.b32.xlu0 %v911, 64
      %v1254 = vpop.permute.xlu0 %1253
      %1255 = vrot.lane.b32.xlu0 %v912, 64
      %v1256 = vpop.permute.xlu0 %1255
      %1257 = vrot.lane.b32.xlu0 %v913, 64
      %v1258 = vpop.permute.xlu0 %1257
      %1267 = vmatprep.subr.bf16.mxu0 0
      %1268 = vmatpush1.bf16.msra.mxu0 %v1244
      %1269 = vmatprep.subr.bf16.mxu0 0
      %1270 = vmatpush1.bf16.msra.mxu0 %v1246
      %1271 = vmatprep.subr.bf16.mxu0 0
      %1272 = vmatpush1.bf16.msra.mxu0 %v1248
      %1273 = vmatprep.subr.bf16.mxu0 0
      %1274 = vmatpush1.bf16.msra.mxu0 %v1250
      %1275 = vmatprep.subr.bf16.mxu0 0
      %1276 = vmatpush1.bf16.msra.mxu0 %v1252
      %1277 = vmatprep.subr.bf16.mxu0 0
      %1278 = vmatpush1.bf16.msra.mxu0 %v1254
      %1279 = vmatprep.subr.bf16.mxu0 0
      %1280 = vmatpush1.bf16.msra.mxu0 %v1256
      %1281 = vmatprep.subr.bf16.mxu0 0
      %1282 = vmatpush1.bf16.msra.mxu0 %v1258
      %1283 = vmatprep.subr.bf16.mxu0 0
      %1284 = vmatpush1.bf16.msra.mxu0 0
      %1285 = vmatprep.subr.bf16.mxu0 0
      %1286 = vmatpush1.bf16.msra.mxu0 0
      %1287 = vmatprep.subr.bf16.mxu0 0
      %1288 = vmatpush1.bf16.msra.mxu0 0
      %1289 = vmatprep.subr.bf16.mxu0 0
      %1290 = vmatpush1.bf16.msra.mxu0 0
      %1291 = vmatprep.subr.bf16.mxu0 0
      %1292 = vmatpush1.bf16.msra.mxu0 0
      %1293 = vmatprep.subr.bf16.mxu0 0
      %1294 = vmatpush1.bf16.msra.mxu0 0
      %1295 = vmatprep.subr.bf16.mxu0 0
      %1296 = vmatpush1.bf16.msra.mxu0 0
      %1297 = vmatprep.subr.bf16.mxu0 0
      %1298 = vmatpush1.bf16.msra.mxu0 0
      %1299 = vmatprep.mubr.bf16.mxu0 0
      %1300 = vmatmul.mubr.bf16.gmra.mrb[0].mxu0 %v1235
      %v1301 = vpop.f32.mrb[0].mxu0
      %v1302 = vadd.f32 0.0, %v1301
      %v1303 = vpop.f32.mrb[0].mxu0
      %v1304 = vpop.f32.mrb[0].mxu0
      %v1305 = vadd.f32 0.0, %v1304
      %v1306 = vpop.f32.mrb[0].mxu0
      %1307 = vmatprep.mubr.bf16.mxu0 0
      %1308 = vmatmul.mubr.bf16.gmra.mrb[0].mxu0 %v1236
      %v1309 = vpop.f32.mrb[0].mxu0
      %v1310 = vadd.f32 0.0, %v1309
      %v1311 = vpop.f32.mrb[0].mxu0
      %v1312 = vpop.f32.mrb[0].mxu0
      %v1313 = vadd.f32 0.0, %v1312
      %v1314 = vpop.f32.mrb[0].mxu0
      %1315 = vmatprep.mubr.bf16.mxu0 0
      %1316 = vmatmul.mubr.bf16.gmra.mrb[0].mxu0 %v1237
      %v1317 = vpop.f32.mrb[0].mxu0
      %v1318 = vadd.f32 0.0, %v1317
      %v1319 = vpop.f32.mrb[0].mxu0
      %v1320 = vpop.f32.mrb[0].mxu0
      %v1321 = vadd.f32 0.0, %v1320
      %v1322 = vpop.f32.mrb[0].mxu0
      %1323 = vmatprep.mubr.bf16.mxu0 0
      %1324 = vmatmul.mubr.bf16.gmra.mrb[0].mxu0 %v1238
      %v1325 = vpop.f32.mrb[0].mxu0
      %v1326 = vadd.f32 0.0, %v1325
      %v1327 = vpop.f32.mrb[0].mxu0
      %v1328 = vpop.f32.mrb[0].mxu0
      %v1329 = vadd.f32 0.0, %v1328
      %v1330 = vpop.f32.mrb[0].mxu0
      %1331 = vmatprep.mubr.bf16.mxu0 0
      %1332 = vmatmul.mubr.bf16.gmra.mrb[0].mxu0 %v1239
      %v1333 = vpop.f32.mrb[0].mxu0
      %v1334 = vadd.f32 0.0, %v1333
      %v1335 = vpop.f32.mrb[0].mxu0
      %v1336 = vpop.f32.mrb[0].mxu0
      %v1337 = vadd.f32 0.0, %v1336
      %v1338 = vpop.f32.mrb[0].mxu0
      %1339 = vmatprep.mubr.bf16.mxu0 0
      %1340 = vmatmul.mubr.bf16.gmra.mrb[0].mxu0 %v1240
      %v1341 = vpop.f32.mrb[0].mxu0
      %v1342 = vadd.f32 0.0, %v1341
      %v1343 = vpop.f32.mrb[0].mxu0
      %v1344 = vpop.f32.mrb[0].mxu0
      %v1345 = vadd.f32 0.0, %v1344
      %v1346 = vpop.f32.mrb[0].mxu0
      %1347 = vmatprep.mubr.bf16.mxu0 0
      %1348 = vmatmul.mubr.bf16.gmra.mrb[0].mxu0 %v1241
      %v1349 = vpop.f32.mrb[0].mxu0
      %v1350 = vadd.f32 0.0, %v1349
      %v1351 = vpop.f32.mrb[0].mxu0
      %v1352 = vpop.f32.mrb[0].mxu0
      %v1353 = vadd.f32 0.0, %v1352
      %v1354 = vpop.f32.mrb[0].mxu0
      %1355 = vmatprep.mubr.bf16.mxu0 0
      %1356 = vmatmul.mubr.bf16.gmra.mrb[0].mxu0 %v1242
      %v1357 = vpop.f32.mrb[0].mxu0
      %v1358 = vadd.f32 0.0, %v1357
      %v1359 = vpop.f32.mrb[0].mxu0
      %v1360 = vpop.f32.mrb[0].mxu0
      %v1361 = vadd.f32 0.0, %v1360
      %v1362 = vpop.f32.mrb[0].mxu0
      %1363 = vdwg.mxu0
      %v1364 = vpack.c.bf16 %v1305, %v1302
      %v1365 = vpack.c.bf16 %v1313, %v1310
      %v1366 = vpack.c.bf16 %v1321, %v1318
      %v1367 = vpack.c.bf16 %v1329, %v1326
      %v1368 = vpack.c.bf16 %v1337, %v1334
      %v1369 = vpack.c.bf16 %v1345, %v1342
      %v1370 = vpack.c.bf16 %v1353, %v1350
      %v1371 = vpack.c.bf16 %v1361, %v1358
      %v1372 = vld [vmem:[%s637] sm:$0xf]
      %1381 = vrot.lane.b32.xlu0 %v898, 120
      %v1382 = vpop.permute.xlu0 %1381
      %1383 = vrot.lane.b32.xlu0 %v899, 120
      %v1384 = vpop.permute.xlu0 %1383
      %1385 = vrot.lane.b32.xlu0 %v900, 120
      %v1386 = vpop.permute.xlu0 %1385
      %1387 = vrot.lane.b32.xlu0 %v901, 120
      %v1388 = vpop.permute.xlu0 %1387
      %1389 = vrot.lane.b32.xlu0 %v902, 120
      %v1390 = vpop.permute.xlu0 %1389
      %1391 = vrot.lane.b32.xlu0 %v903, 120
      %v1392 = vpop.permute.xlu0 %1391
      %1393 = vrot.lane.b32.xlu0 %v904, 120
      %v1394 = vpop.permute.xlu0 %1393
      %1395 = vrot.lane.b32.xlu0 %v905, 120
      %v1396 = vpop.permute.xlu0 %1395
      %1397 = vrot.lane.b32.xlu0 %v906, 88
      %v1398 = vpop.permute.xlu0 %1397
      %1399 = vrot.lane.b32.xlu0 %v907, 88
      %v1400 = vpop.permute.xlu0 %1399
      %1401 = vrot.lane.b32.xlu0 %v908, 88
      %v1402 = vpop.permute.xlu0 %1401
      %1403 = vrot.lane.b32.xlu0 %v909, 88
      %v1404 = vpop.permute.xlu0 %1403
      %1405 = vrot.lane.b32.xlu0 %v910, 88
      %v1406 = vpop.permute.xlu0 %1405
      %1407 = vrot.lane.b32.xlu0 %v911, 88
      %v1408 = vpop.permute.xlu0 %1407
      %1409 = vrot.lane.b32.xlu0 %v912, 88
      %v1410 = vpop.permute.xlu0 %1409
      %1411 = vrot.lane.b32.xlu0 %v913, 88
      %v1412 = vpop.permute.xlu0 %1411
      %v1414 = vsel %vm945, %v1382, 0
      %v1417 = vsel %vm945, %v1384, 0
      %v1420 = vsel %vm945, %v1386, 0
      %v1423 = vsel %vm945, %v1388, 0
      %v1426 = vsel %vm945, %v1390, 0
      %v1429 = vsel %vm945, %v1392, 0
      %v1432 = vsel %vm945, %v1394, 0
      %v1435 = vsel %vm945, %v1396, 0
      %v1438 = vsel %vm945, %v1398, 0
      %v1441 = vsel %vm945, %v1400, 0
      %v1444 = vsel %vm945, %v1402, 0
      %v1447 = vsel %vm945, %v1404, 0
      %v1450 = vsel %vm945, %v1406, 0
      %v1453 = vsel %vm945, %v1408, 0
      %v1456 = vsel %vm945, %v1410, 0
      %v1459 = vsel %vm945, %v1412, 0
      %1461 = vmatprep.subr.bf16.mxu0 0
      %1462 = vmatpush1.bf16.xpose.msra.mxu0 %v1438
      %1463 = vmatprep.subr.bf16.mxu0 0
      %1464 = vmatpush1.bf16.xpose.msra.mxu0 %v1441
      %1465 = vmatprep.subr.bf16.mxu0 0
      %1466 = vmatpush1.bf16.xpose.msra.mxu0 %v1444
      %1467 = vmatprep.subr.bf16.mxu0 0
      %1468 = vmatpush1.bf16.xpose.msra.mxu0 %v1447
      %1469 = vmatprep.subr.bf16.mxu0 0
      %1470 = vmatpush1.bf16.xpose.msra.mxu0 %v1450
      %1471 = vmatprep.subr.bf16.mxu0 0
      %1472 = vmatpush1.bf16.xpose.msra.mxu0 %v1453
      %1473 = vmatprep.subr.bf16.mxu0 0
      %1474 = vmatpush1.bf16.xpose.msra.mxu0 %v1456
      %1475 = vmatprep.subr.bf16.mxu0 0
      %1476 = vmatpush1.bf16.xpose.msra.mxu0 %v1459
      %1477 = vmatprep.subr.bf16.mxu0 0
      %1478 = vmatpush1.bf16.xpose.msra.mxu0 0
      %1479 = vmatprep.subr.bf16.mxu0 0
      %1480 = vmatpush1.bf16.xpose.msra.mxu0 0
      %1481 = vmatprep.subr.bf16.mxu0 0
      %1482 = vmatpush1.bf16.xpose.msra.mxu0 0
      %1483 = vmatprep.subr.bf16.mxu0 0
      %1484 = vmatpush1.bf16.xpose.msra.mxu0 0
      %1485 = vmatprep.subr.bf16.mxu0 0
      %1486 = vmatpush1.bf16.xpose.msra.mxu0 0
      %1487 = vmatprep.subr.bf16.mxu0 0
      %1488 = vmatpush1.bf16.xpose.msra.mxu0 0
      %1489 = vmatprep.subr.bf16.mxu0 0
      %1490 = vmatpush1.bf16.xpose.msra.mxu0 0
      %1491 = vmatprep.subr.bf16.mxu0 0
      %1492 = vmatpush1.bf16.xpose.msra.mxu0 0
      %1493 = vmatprep.mubr.bf16.mxu0 0
      %1494 = vmatmul.mubr.bf16.gmra.mrb[0].mxu0 %v1414
      %v1495 = vpop.f32.mrb[0].mxu0
      %v1496 = vadd.f32 %v919, %v1495
      %v1497 = vpop.f32.mrb[0].mxu0
      %v1498 = vpop.f32.mrb[0].mxu0
      %v1499 = vadd.f32 %v919, %v1498
      %v1500 = vpop.f32.mrb[0].mxu0
      %1501 = vmatprep.mubr.bf16.mxu0 0
      %1502 = vmatmul.mubr.bf16.gmra.mrb[0].mxu0 %v1417
      %v1503 = vpop.f32.mrb[0].mxu0
      %v1504 = vadd.f32 %v919, %v1503
      %v1505 = vpop.f32.mrb[0].mxu0
      %v1506 = vpop.f32.mrb[0].mxu0
      %v1507 = vadd.f32 %v919, %v1506
      %v1508 = vpop.f32.mrb[0].mxu0
      %1509 = vmatprep.mubr.bf16.mxu0 0
      %1510 = vmatmul.mubr.bf16.gmra.mrb[0].mxu0 %v1420
      %v1511 = vpop.f32.mrb[0].mxu0
      %v1512 = vadd.f32 %v919, %v1511
      %v1513 = vpop.f32.mrb[0].mxu0
      %v1514 = vpop.f32.mrb[0].mxu0
      %v1515 = vadd.f32 %v919, %v1514
      %v1516 = vpop.f32.mrb[0].mxu0
      %1517 = vmatprep.mubr.bf16.mxu0 0
      %1518 = vmatmul.mubr.bf16.gmra.mrb[0].mxu0 %v1423
      %v1519 = vpop.f32.mrb[0].mxu0
      %v1520 = vadd.f32 %v919, %v1519
      %v1521 = vpop.f32.mrb[0].mxu0
      %v1522 = vpop.f32.mrb[0].mxu0
      %v1523 = vadd.f32 %v919, %v1522
      %v1524 = vpop.f32.mrb[0].mxu0
      %1525 = vmatprep.mubr.bf16.mxu0 0
      %1526 = vmatmul.mubr.bf16.gmra.mrb[0].mxu0 %v1426
      %v1527 = vpop.f32.mrb[0].mxu0
      %v1528 = vadd.f32 %v919, %v1527
      %v1529 = vpop.f32.mrb[0].mxu0
      %v1530 = vpop.f32.mrb[0].mxu0
      %v1531 = vadd.f32 %v919, %v1530
      %v1532 = vpop.f32.mrb[0].mxu0
      %1533 = vmatprep.mubr.bf16.mxu0 0
      %1534 = vmatmul.mubr.bf16.gmra.mrb[0].mxu0 %v1429
      %v1535 = vpop.f32.mrb[0].mxu0
      %v1536 = vadd.f32 %v919, %v1535
      %v1537 = vpop.f32.mrb[0].mxu0
      %v1538 = vpop.f32.mrb[0].mxu0
      %v1539 = vadd.f32 %v919, %v1538
      %v1540 = vpop.f32.mrb[0].mxu0
      %1541 = vmatprep.mubr.bf16.mxu0 0
      %1542 = vmatmul.mubr.bf16.gmra.mrb[0].mxu0 %v1432
      %v1543 = vpop.f32.mrb[0].mxu0
      %v1544 = vadd.f32 %v919, %v1543
      %v1545 = vpop.f32.mrb[0].mxu0
      %v1546 = vpop.f32.mrb[0].mxu0
      %v1547 = vadd.f32 %v919, %v1546
      %v1548 = vpop.f32.mrb[0].mxu0
      %1549 = vmatprep.mubr.bf16.mxu0 0
      %1550 = vmatmul.mubr.bf16.gmra.mrb[0].mxu0 %v1435
      %v1551 = vpop.f32.mrb[0].mxu0
      %v1552 = vadd.f32 %v919, %v1551
      %v1553 = vpop.f32.mrb[0].mxu0
      %v1554 = vpop.f32.mrb[0].mxu0
      %v1555 = vadd.f32 %v919, %v1554
      %v1556 = vpop.f32.mrb[0].mxu0
      %1557 = vdwg.mxu0
      %1558 = vmax.xlane.f32.xlu0 %v1496
      %v1559 = vpop.xlane.xlu0 %1558
      %1560 = vmax.xlane.f32.xlu0 %v1499
      %v1561 = vpop.xlane.xlu0 %1560
      %1562 = vmax.xlane.f32.xlu0 %v1504
      %v1563 = vpop.xlane.xlu0 %1562
      %1564 = vmax.xlane.f32.xlu0 %v1507
      %v1565 = vpop.xlane.xlu0 %1564
      %1566 = vmax.xlane.f32.xlu0 %v1512
      %v1567 = vpop.xlane.xlu0 %1566
      %1568 = vmax.xlane.f32.xlu0 %v1515
      %v1569 = vpop.xlane.xlu0 %1568
      %1570 = vmax.xlane.f32.xlu0 %v1520
      %v1571 = vpop.xlane.xlu0 %1570
      %1572 = vmax.xlane.f32.xlu0 %v1523
      %v1573 = vpop.xlane.xlu0 %1572
      %1574 = vmax.xlane.f32.xlu0 %v1528
      %v1575 = vpop.xlane.xlu0 %1574
      %1576 = vmax.xlane.f32.xlu0 %v1531
      %v1577 = vpop.xlane.xlu0 %1576
      %1578 = vmax.xlane.f32.xlu0 %v1536
      %v1579 = vpop.xlane.xlu0 %1578
      %1580 = vmax.xlane.f32.xlu0 %v1539
      %v1581 = vpop.xlane.xlu0 %1580
      %1582 = vmax.xlane.f32.xlu0 %v1544
      %v1583 = vpop.xlane.xlu0 %1582
      %1584 = vmax.xlane.f32.xlu0 %v1547
      %v1585 = vpop.xlane.xlu0 %1584
      %1586 = vmax.xlane.f32.xlu0 %v1552
      %v1587 = vpop.xlane.xlu0 %1586
      %1588 = vmax.xlane.f32.xlu0 %v1555
      %v1589 = vpop.xlane.xlu0 %1588
      %v1590 = vsub.f32 %v1496, %v1559
      %v1591 = vsub.f32 %v1499, %v1561
      %v1592 = vsub.f32 %v1504, %v1563
      %v1593 = vsub.f32 %v1507, %v1565
      %v1594 = vsub.f32 %v1512, %v1567
      %v1595 = vsub.f32 %v1515, %v1569
      %v1596 = vsub.f32 %v1520, %v1571
      %v1597 = vsub.f32 %v1523, %v1573
      %v1598 = vsub.f32 %v1528, %v1575
      %v1599 = vsub.f32 %v1531, %v1577
      %v1600 = vsub.f32 %v1536, %v1579
      %v1601 = vsub.f32 %v1539, %v1581
      %v1602 = vsub.f32 %v1544, %v1583
      %v1603 = vsub.f32 %v1547, %v1585
      %v1604 = vsub.f32 %v1552, %v1587
      %v1605 = vsub.f32 %v1555, %v1589
      %v1606 = vmul.f32 %v1590, 1.442695
      %v1607 = vpow.pop %v1606
      %v1608 = vmul.f32 %v1591, 1.442695
      %v1609 = vpow.pop %v1608
      %v1610 = vmul.f32 %v1592, 1.442695
      %v1611 = vpow.pop %v1610
      %v1612 = vmul.f32 %v1593, 1.442695
      %v1613 = vpow.pop %v1612
      %v1614 = vmul.f32 %v1594, 1.442695
      %v1615 = vpow.pop %v1614
      %v1616 = vmul.f32 %v1595, 1.442695
      %v1617 = vpow.pop %v1616
      %v1618 = vmul.f32 %v1596, 1.442695
      %v1619 = vpow.pop %v1618
      %v1620 = vmul.f32 %v1597, 1.442695
      %v1621 = vpow.pop %v1620
      %v1622 = vmul.f32 %v1598, 1.442695
      %v1623 = vpow.pop %v1622
      %v1624 = vmul.f32 %v1599, 1.442695
      %v1625 = vpow.pop %v1624
      %v1626 = vmul.f32 %v1600, 1.442695
      %v1627 = vpow.pop %v1626
      %v1628 = vmul.f32 %v1601, 1.442695
      %v1629 = vpow.pop %v1628
      %v1630 = vmul.f32 %v1602, 1.442695
      %v1631 = vpow.pop %v1630
      %v1632 = vmul.f32 %v1603, 1.442695
      %v1633 = vpow.pop %v1632
      %v1634 = vmul.f32 %v1604, 1.442695
      %v1635 = vpow.pop %v1634
      %v1636 = vmul.f32 %v1605, 1.442695
      %v1637 = vpow.pop %v1636
      %1638 = vadd.xlane.f32.xlu0 %v1607
      %v1639 = vpop.xlane.xlu0 %1638
      %1640 = vadd.xlane.f32.xlu0 %v1609
      %v1641 = vpop.xlane.xlu0 %1640
      %1642 = vadd.xlane.f32.xlu0 %v1611
      %v1643 = vpop.xlane.xlu0 %1642
      %1644 = vadd.xlane.f32.xlu0 %v1613
      %v1645 = vpop.xlane.xlu0 %1644
      %1646 = vadd.xlane.f32.xlu0 %v1615
      %v1647 = vpop.xlane.xlu0 %1646
      %1648 = vadd.xlane.f32.xlu0 %v1617
      %v1649 = vpop.xlane.xlu0 %1648
      %1650 = vadd.xlane.f32.xlu0 %v1619
      %v1651 = vpop.xlane.xlu0 %1650
      %1652 = vadd.xlane.f32.xlu0 %v1621
      %v1653 = vpop.xlane.xlu0 %1652
      %1654 = vadd.xlane.f32.xlu0 %v1623
      %v1655 = vpop.xlane.xlu0 %1654
      %1656 = vadd.xlane.f32.xlu0 %v1625
      %v1657 = vpop.xlane.xlu0 %1656
      %1658 = vadd.xlane.f32.xlu0 %v1627
      %v1659 = vpop.xlane.xlu0 %1658
      %1660 = vadd.xlane.f32.xlu0 %v1629
      %v1661 = vpop.xlane.xlu0 %1660
      %1662 = vadd.xlane.f32.xlu0 %v1631
      %v1663 = vpop.xlane.xlu0 %1662
      %1664 = vadd.xlane.f32.xlu0 %v1633
      %v1665 = vpop.xlane.xlu0 %1664
      %1666 = vadd.xlane.f32.xlu0 %v1635
      %v1667 = vpop.xlane.xlu0 %1666
      %1668 = vadd.xlane.f32.xlu0 %v1637
      %v1669 = vpop.xlane.xlu0 %1668
      %v1670 = vrcp.pop %v1639
      %v1671 = vrcp.pop %v1641
      %v1672 = vrcp.pop %v1643
      %v1673 = vrcp.pop %v1645
      %v1674 = vrcp.pop %v1647
      %v1675 = vrcp.pop %v1649
      %v1676 = vrcp.pop %v1651
      %v1677 = vrcp.pop %v1653
      %v1678 = vrcp.pop %v1655
      %v1679 = vrcp.pop %v1657
      %v1680 = vrcp.pop %v1659
      %v1681 = vrcp.pop %v1661
      %v1682 = vrcp.pop %v1663
      %v1683 = vrcp.pop %v1665
      %v1684 = vrcp.pop %v1667
      %v1685 = vrcp.pop %v1669
      %v1686 = vmul.f32 %v1607, %v1670
      %v1687 = vmul.f32 %v1609, %v1671
      %v1688 = vmul.f32 %v1611, %v1672
      %v1689 = vmul.f32 %v1613, %v1673
      %v1690 = vmul.f32 %v1615, %v1674
      %v1691 = vmul.f32 %v1617, %v1675
      %v1692 = vmul.f32 %v1619, %v1676
      %v1693 = vmul.f32 %v1621, %v1677
      %v1694 = vmul.f32 %v1623, %v1678
      %v1695 = vmul.f32 %v1625, %v1679
      %v1696 = vmul.f32 %v1627, %v1680
      %v1697 = vmul.f32 %v1629, %v1681
      %v1698 = vmul.f32 %v1631, %v1682
      %v1699 = vmul.f32 %v1633, %v1683
      %v1700 = vmul.f32 %v1635, %v1684
      %v1701 = vmul.f32 %v1637, %v1685
      %v1702 = vpack.c.bf16 %v1687, %v1686
      %v1703 = vpack.c.bf16 %v1689, %v1688
      %v1704 = vpack.c.bf16 %v1691, %v1690
      %v1705 = vpack.c.bf16 %v1693, %v1692
      %v1706 = vpack.c.bf16 %v1695, %v1694
      %v1707 = vpack.c.bf16 %v1697, %v1696
      %v1708 = vpack.c.bf16 %v1699, %v1698
      %v1709 = vpack.c.bf16 %v1701, %v1700
      %1710 = vrot.lane.b32.xlu0 %v906, 56
      %v1711 = vpop.permute.xlu0 %1710
      %1712 = vrot.lane.b32.xlu0 %v907, 56
      %v1713 = vpop.permute.xlu0 %1712
      %1714 = vrot.lane.b32.xlu0 %v908, 56
      %v1715 = vpop.permute.xlu0 %1714
      %1716 = vrot.lane.b32.xlu0 %v909, 56
      %v1717 = vpop.permute.xlu0 %1716
      %1718 = vrot.lane.b32.xlu0 %v910, 56
      %v1719 = vpop.permute.xlu0 %1718
      %1720 = vrot.lane.b32.xlu0 %v911, 56
      %v1721 = vpop.permute.xlu0 %1720
      %1722 = vrot.lane.b32.xlu0 %v912, 56
      %v1723 = vpop.permute.xlu0 %1722
      %1724 = vrot.lane.b32.xlu0 %v913, 56
      %v1725 = vpop.permute.xlu0 %1724
      %1734 = vmatprep.subr.bf16.mxu0 0
      %1735 = vmatpush1.bf16.msra.mxu0 %v1711
      %1736 = vmatprep.subr.bf16.mxu0 0
      %1737 = vmatpush1.bf16.msra.mxu0 %v1713
      %1738 = vmatprep.subr.bf16.mxu0 0
      %1739 = vmatpush1.bf16.msra.mxu0 %v1715
      %1740 = vmatprep.subr.bf16.mxu0 0
      %1741 = vmatpush1.bf16.msra.mxu0 %v1717
      %1742 = vmatprep.subr.bf16.mxu0 0
      %1743 = vmatpush1.bf16.msra.mxu0 %v1719
      %1744 = vmatprep.subr.bf16.mxu0 0
      %1745 = vmatpush1.bf16.msra.mxu0 %v1721
      %1746 = vmatprep.subr.bf16.mxu0 0
      %1747 = vmatpush1.bf16.msra.mxu0 %v1723
      %1748 = vmatprep.subr.bf16.mxu0 0
      %1749 = vmatpush1.bf16.msra.mxu0 %v1725
      %1750 = vmatprep.subr.bf16.mxu0 0
      %1751 = vmatpush1.bf16.msra.mxu0 0
      %1752 = vmatprep.subr.bf16.mxu0 0
      %1753 = vmatpush1.bf16.msra.mxu0 0
      %1754 = vmatprep.subr.bf16.mxu0 0
      %1755 = vmatpush1.bf16.msra.mxu0 0
      %1756 = vmatprep.subr.bf16.mxu0 0
      %1757 = vmatpush1.bf16.msra.mxu0 0
      %1758 = vmatprep.subr.bf16.mxu0 0
      %1759 = vmatpush1.bf16.msra.mxu0 0
      %1760 = vmatprep.subr.bf16.mxu0 0
      %1761 = vmatpush1.bf16.msra.mxu0 0
      %1762 = vmatprep.subr.bf16.mxu0 0
      %1763 = vmatpush1.bf16.msra.mxu0 0
      %1764 = vmatprep.subr.bf16.mxu0 0
      %1765 = vmatpush1.bf16.msra.mxu0 0
      %1766 = vmatprep.mubr.bf16.mxu0 0
      %1767 = vmatmul.mubr.bf16.gmra.mrb[0].mxu0 %v1702
      %v1768 = vpop.f32.mrb[0].mxu0
      %v1769 = vadd.f32 0.0, %v1768
      %v1770 = vpop.f32.mrb[0].mxu0
      %v1771 = vpop.f32.mrb[0].mxu0
      %v1772 = vadd.f32 0.0, %v1771
      %v1773 = vpop.f32.mrb[0].mxu0
      %1774 = vmatprep.mubr.bf16.mxu0 0
      %1775 = vmatmul.mubr.bf16.gmra.mrb[0].mxu0 %v1703
      %v1776 = vpop.f32.mrb[0].mxu0
      %v1777 = vadd.f32 0.0, %v1776
      %v1778 = vpop.f32.mrb[0].mxu0
      %v1779 = vpop.f32.mrb[0].mxu0
      %v1780 = vadd.f32 0.0, %v1779
      %v1781 = vpop.f32.mrb[0].mxu0
      %1782 = vmatprep.mubr.bf16.mxu0 0
      %1783 = vmatmul.mubr.bf16.gmra.mrb[0].mxu0 %v1704
      %v1784 = vpop.f32.mrb[0].mxu0
      %v1785 = vadd.f32 0.0, %v1784
      %v1786 = vpop.f32.mrb[0].mxu0
      %v1787 = vpop.f32.mrb[0].mxu0
      %v1788 = vadd.f32 0.0, %v1787
      %v1789 = vpop.f32.mrb[0].mxu0
      %1790 = vmatprep.mubr.bf16.mxu0 0
      %1791 = vmatmul.mubr.bf16.gmra.mrb[0].mxu0 %v1705
      %v1792 = vpop.f32.mrb[0].mxu0
      %v1793 = vadd.f32 0.0, %v1792
      %v1794 = vpop.f32.mrb[0].mxu0
      %v1795 = vpop.f32.mrb[0].mxu0
      %v1796 = vadd.f32 0.0, %v1795
      %v1797 = vpop.f32.mrb[0].mxu0
      %1798 = vmatprep.mubr.bf16.mxu0 0
      %1799 = vmatmul.mubr.bf16.gmra.mrb[0].mxu0 %v1706
      %v1800 = vpop.f32.mrb[0].mxu0
      %v1801 = vadd.f32 0.0, %v1800
      %v1802 = vpop.f32.mrb[0].mxu0
      %v1803 = vpop.f32.mrb[0].mxu0
      %v1804 = vadd.f32 0.0, %v1803
      %v1805 = vpop.f32.mrb[0].mxu0
      %1806 = vmatprep.mubr.bf16.mxu0 0
      %1807 = vmatmul.mubr.bf16.gmra.mrb[0].mxu0 %v1707
      %v1808 = vpop.f32.mrb[0].mxu0
      %v1809 = vadd.f32 0.0, %v1808
      %v1810 = vpop.f32.mrb[0].mxu0
      %v1811 = vpop.f32.mrb[0].mxu0
      %v1812 = vadd.f32 0.0, %v1811
      %v1813 = vpop.f32.mrb[0].mxu0
      %1814 = vmatprep.mubr.bf16.mxu0 0
      %1815 = vmatmul.mubr.bf16.gmra.mrb[0].mxu0 %v1708
      %v1816 = vpop.f32.mrb[0].mxu0
      %v1817 = vadd.f32 0.0, %v1816
      %v1818 = vpop.f32.mrb[0].mxu0
      %v1819 = vpop.f32.mrb[0].mxu0
      %v1820 = vadd.f32 0.0, %v1819
      %v1821 = vpop.f32.mrb[0].mxu0
      %1822 = vmatprep.mubr.bf16.mxu0 0
      %1823 = vmatmul.mubr.bf16.gmra.mrb[0].mxu0 %v1709
      %v1824 = vpop.f32.mrb[0].mxu0
      %v1825 = vadd.f32 0.0, %v1824
      %v1826 = vpop.f32.mrb[0].mxu0
      %v1827 = vpop.f32.mrb[0].mxu0
      %v1828 = vadd.f32 0.0, %v1827
      %v1829 = vpop.f32.mrb[0].mxu0
      %1830 = vdwg.mxu0
      %v1831 = vpack.c.bf16 %v1772, %v1769
      %v1832 = vpack.c.bf16 %v1780, %v1777
      %v1833 = vpack.c.bf16 %v1788, %v1785
      %v1834 = vpack.c.bf16 %v1796, %v1793
      %v1835 = vpack.c.bf16 %v1804, %v1801
      %v1836 = vpack.c.bf16 %v1812, %v1809
      %v1837 = vpack.c.bf16 %v1820, %v1817
      %v1838 = vpack.c.bf16 %v1828, %v1825
      %v1839 = vld [vmem:[%s637 + $0x4] sm:$0xf]
      %v1841 = vsel %vm945, %v1831, 0
      %v1844 = vsel %vm945, %v1832, 0
      %v1847 = vsel %vm945, %v1833, 0
      %v1850 = vsel %vm945, %v1834, 0
      %v1853 = vsel %vm945, %v1835, 0
      %v1856 = vsel %vm945, %v1836, 0
      %v1859 = vsel %vm945, %v1837, 0
      %v1862 = vsel %vm945, %v1838, 0
      %vm1864 = vcmask 1043456
      %v1866 = vsel %vm1864, %v1839, 0
      %1868 = vmatprep.subr.bf16.mxu0 0
      %1869 = vmatpush1.bf16.msra.mxu0 %v1866
      %1870 = vmatprep.subr.bf16.mxu0 0
      %1871 = vmatpush1.bf16.msra.mxu0 0
      %1872 = vmatprep.subr.bf16.mxu0 0
      %1873 = vmatpush1.bf16.msra.mxu0 0
      %1874 = vmatprep.subr.bf16.mxu0 0
      %1875 = vmatpush1.bf16.msra.mxu0 0
      %1876 = vmatprep.subr.bf16.mxu0 0
      %1877 = vmatpush1.bf16.msra.mxu0 0
      %1878 = vmatprep.subr.bf16.mxu0 0
      %1879 = vmatpush1.bf16.msra.mxu0 0
      %1880 = vmatprep.subr.bf16.mxu0 0
      %1881 = vmatpush1.bf16.msra.mxu0 0
      %1882 = vmatprep.subr.bf16.mxu0 0
      %1883 = vmatpush1.bf16.msra.mxu0 0
      %1884 = vmatprep.subr.bf16.mxu0 0
      %1885 = vmatpush1.bf16.msra.mxu0 0
      %1886 = vmatprep.subr.bf16.mxu0 0
      %1887 = vmatpush1.bf16.msra.mxu0 0
      %1888 = vmatprep.subr.bf16.mxu0 0
      %1889 = vmatpush1.bf16.msra.mxu0 0
      %1890 = vmatprep.subr.bf16.mxu0 0
      %1891 = vmatpush1.bf16.msra.mxu0 0
      %1892 = vmatprep.subr.bf16.mxu0 0
      %1893 = vmatpush1.bf16.msra.mxu0 0
      %1894 = vmatprep.subr.bf16.mxu0 0
      %1895 = vmatpush1.bf16.msra.mxu0 0
      %1896 = vmatprep.subr.bf16.mxu0 0
      %1897 = vmatpush1.bf16.msra.mxu0 0
      %1898 = vmatprep.subr.bf16.mxu0 0
      %1899 = vmatpush1.bf16.msra.mxu0 0
      %1900 = vmatprep.mubr.bf16.mxu0 0
      %1901 = vmatmul.mubr.bf16.gmra.mrb[0].mxu0 %v1841
      %v1902 = vpop.f32.mrb[0].mxu0
      %v1903 = vadd.f32 0.0, %v1902
      %v1904 = vpop.f32.mrb[0].mxu0
      %v1905 = vpop.f32.mrb[0].mxu0
      %v1906 = vadd.f32 0.0, %v1905
      %v1907 = vpop.f32.mrb[0].mxu0
      %1908 = vmatprep.mubr.bf16.mxu0 0
      %1909 = vmatmul.mubr.bf16.gmra.mrb[0].mxu0 %v1844
      %v1910 = vpop.f32.mrb[0].mxu0
      %v1911 = vadd.f32 0.0, %v1910
      %v1912 = vpop.f32.mrb[0].mxu0
      %v1913 = vpop.f32.mrb[0].mxu0
      %v1914 = vadd.f32 0.0, %v1913
      %v1915 = vpop.f32.mrb[0].mxu0
      %1916 = vmatprep.mubr.bf16.mxu0 0
      %1917 = vmatmul.mubr.bf16.gmra.mrb[0].mxu0 %v1847
      %v1918 = vpop.f32.mrb[0].mxu0
      %v1919 = vadd.f32 0.0, %v1918
      %v1920 = vpop.f32.mrb[0].mxu0
      %v1921 = vpop.f32.mrb[0].mxu0
      %v1922 = vadd.f32 0.0, %v1921
      %v1923 = vpop.f32.mrb[0].mxu0
      %1924 = vmatprep.mubr.bf16.mxu0 0
      %1925 = vmatmul.mubr.bf16.gmra.mrb[0].mxu0 %v1850
      %v1926 = vpop.f32.mrb[0].mxu0
      %v1927 = vadd.f32 0.0, %v1926
      %v1928 = vpop.f32.mrb[0].mxu0
      %v1929 = vpop.f32.mrb[0].mxu0
      %v1930 = vadd.f32 0.0, %v1929
      %v1931 = vpop.f32.mrb[0].mxu0
      %1932 = vmatprep.mubr.bf16.mxu0 0
      %1933 = vmatmul.mubr.bf16.gmra.mrb[0].mxu0 %v1853
      %v1934 = vpop.f32.mrb[0].mxu0
      %v1935 = vadd.f32 0.0, %v1934
      %v1936 = vpop.f32.mrb[0].mxu0
      %v1937 = vpop.f32.mrb[0].mxu0
      %v1938 = vadd.f32 0.0, %v1937
      %v1939 = vpop.f32.mrb[0].mxu0
      %1940 = vmatprep.mubr.bf16.mxu0 0
      %1941 = vmatmul.mubr.bf16.gmra.mrb[0].mxu0 %v1856
      %v1942 = vpop.f32.mrb[0].mxu0
      %v1943 = vadd.f32 0.0, %v1942
      %v1944 = vpop.f32.mrb[0].mxu0
      %v1945 = vpop.f32.mrb[0].mxu0
      %v1946 = vadd.f32 0.0, %v1945
      %v1947 = vpop.f32.mrb[0].mxu0
      %1948 = vmatprep.mubr.bf16.mxu0 0
      %1949 = vmatmul.mubr.bf16.gmra.mrb[0].mxu0 %v1859
      %v1950 = vpop.f32.mrb[0].mxu0
      %v1951 = vadd.f32 0.0, %v1950
      %v1952 = vpop.f32.mrb[0].mxu0
      %v1953 = vpop.f32.mrb[0].mxu0
      %v1954 = vadd.f32 0.0, %v1953
      %v1955 = vpop.f32.mrb[0].mxu0
      %1956 = vmatprep.mubr.bf16.mxu0 0
      %1957 = vmatmul.mubr.bf16.gmra.mrb[0].mxu0 %v1862
      %v1958 = vpop.f32.mrb[0].mxu0
      %v1959 = vadd.f32 0.0, %v1958
      %v1960 = vpop.f32.mrb[0].mxu0
      %v1961 = vpop.f32.mrb[0].mxu0
      %v1962 = vadd.f32 0.0, %v1961
      %v1963 = vpop.f32.mrb[0].mxu0
      %1964 = vdwg.mxu0
      %v1966 = vsel %vm945, %v1364, 0
      %v1969 = vsel %vm945, %v1365, 0
      %v1972 = vsel %vm945, %v1366, 0
      %v1975 = vsel %vm945, %v1367, 0
      %v1978 = vsel %vm945, %v1368, 0
      %v1981 = vsel %vm945, %v1369, 0
      %v1984 = vsel %vm945, %v1370, 0
      %v1987 = vsel %vm945, %v1371, 0
      %v1990 = vsel %vm1864, %v1372, 0
      %1992 = vmatprep.subr.bf16.mxu0 0
      %1993 = vmatpush1.bf16.msra.mxu0 %v1990
      %1994 = vmatprep.subr.bf16.mxu0 0
      %1995 = vmatpush1.bf16.msra.mxu0 0
      %1996 = vmatprep.subr.bf16.mxu0 0
      %1997 = vmatpush1.bf16.msra.mxu0 0
      %1998 = vmatprep.subr.bf16.mxu0 0
      %1999 = vmatpush1.bf16.msra.mxu0 0
      %2000 = vmatprep.subr.bf16.mxu0 0
      %2001 = vmatpush1.bf16.msra.mxu0 0
      %2002 = vmatprep.subr.bf16.mxu0 0
      %2003 = vmatpush1.bf16.msra.mxu0 0
      %2004 = vmatprep.subr.bf16.mxu0 0
      %2005 = vmatpush1.bf16.msra.mxu0 0
      %2006 = vmatprep.subr.bf16.mxu0 0
      %2007 = vmatpush1.bf16.msra.mxu0 0
      %2008 = vmatprep.subr.bf16.mxu0 0
      %2009 = vmatpush1.bf16.msra.mxu0 0
      %2010 = vmatprep.subr.bf16.mxu0 0
      %2011 = vmatpush1.bf16.msra.mxu0 0
      %2012 = vmatprep.subr.bf16.mxu0 0
      %2013 = vmatpush1.bf16.msra.mxu0 0
      %2014 = vmatprep.subr.bf16.mxu0 0
      %2015 = vmatpush1.bf16.msra.mxu0 0
      %2016 = vmatprep.subr.bf16.mxu0 0
      %2017 = vmatpush1.bf16.msra.mxu0 0
      %2018 = vmatprep.subr.bf16.mxu0 0
      %2019 = vmatpush1.bf16.msra.mxu0 0
      %2020 = vmatprep.subr.bf16.mxu0 0
      %2021 = vmatpush1.bf16.msra.mxu0 0
      %2022 = vmatprep.subr.bf16.mxu0 0
      %2023 = vmatpush1.bf16.msra.mxu0 0
      %2024 = vmatprep.mubr.bf16.mxu0 0
      %2025 = vmatmul.mubr.bf16.gmra.mrb[0].mxu0 %v1966
      %v2026 = vpop.f32.mrb[0].mxu0
      %v2027 = vadd.f32 %v1903, %v2026
      %v2028 = vpop.f32.mrb[0].mxu0
      %v2029 = vpop.f32.mrb[0].mxu0
      %v2030 = vadd.f32 %v1906, %v2029
      %v2031 = vpop.f32.mrb[0].mxu0
      %2032 = vmatprep.mubr.bf16.mxu0 0
      %2033 = vmatmul.mubr.bf16.gmra.mrb[0].mxu0 %v1969
      %v2034 = vpop.f32.mrb[0].mxu0
      %v2035 = vadd.f32 %v1911, %v2034
      %v2036 = vpop.f32.mrb[0].mxu0
      %v2037 = vpop.f32.mrb[0].mxu0
      %v2038 = vadd.f32 %v1914, %v2037
      %v2039 = vpop.f32.mrb[0].mxu0
      %2040 = vmatprep.mubr.bf16.mxu0 0
      %2041 = vmatmul.mubr.bf16.gmra.mrb[0].mxu0 %v1972
      %v2042 = vpop.f32.mrb[0].mxu0
      %v2043 = vadd.f32 %v1919, %v2042
      %v2044 = vpop.f32.mrb[0].mxu0
      %v2045 = vpop.f32.mrb[0].mxu0
      %v2046 = vadd.f32 %v1922, %v2045
      %v2047 = vpop.f32.mrb[0].mxu0
      %2048 = vmatprep.mubr.bf16.mxu0 0
      %2049 = vmatmul.mubr.bf16.gmra.mrb[0].mxu0 %v1975
      %v2050 = vpop.f32.mrb[0].mxu0
      %v2051 = vadd.f32 %v1927, %v2050
      %v2052 = vpop.f32.mrb[0].mxu0
      %v2053 = vpop.f32.mrb[0].mxu0
      %v2054 = vadd.f32 %v1930, %v2053
      %v2055 = vpop.f32.mrb[0].mxu0
      %2056 = vmatprep.mubr.bf16.mxu0 0
      %2057 = vmatmul.mubr.bf16.gmra.mrb[0].mxu0 %v1978
      %v2058 = vpop.f32.mrb[0].mxu0
      %v2059 = vadd.f32 %v1935, %v2058
      %v2060 = vpop.f32.mrb[0].mxu0
      %v2061 = vpop.f32.mrb[0].mxu0
      %v2062 = vadd.f32 %v1938, %v2061
      %v2063 = vpop.f32.mrb[0].mxu0
      %2064 = vmatprep.mubr.bf16.mxu0 0
      %2065 = vmatmul.mubr.bf16.gmra.mrb[0].mxu0 %v1981
      %v2066 = vpop.f32.mrb[0].mxu0
      %v2067 = vadd.f32 %v1943, %v2066
      %v2068 = vpop.f32.mrb[0].mxu0
      %v2069 = vpop.f32.mrb[0].mxu0
      %v2070 = vadd.f32 %v1946, %v2069
      %v2071 = vpop.f32.mrb[0].mxu0
      %2072 = vmatprep.mubr.bf16.mxu0 0
      %2073 = vmatmul.mubr.bf16.gmra.mrb[0].mxu0 %v1984
      %v2074 = vpop.f32.mrb[0].mxu0
      %v2075 = vadd.f32 %v1951, %v2074
      %v2076 = vpop.f32.mrb[0].mxu0
      %v2077 = vpop.f32.mrb[0].mxu0
      %v2078 = vadd.f32 %v1954, %v2077
      %v2079 = vpop.f32.mrb[0].mxu0
      %2080 = vmatprep.mubr.bf16.mxu0 0
      %2081 = vmatmul.mubr.bf16.gmra.mrb[0].mxu0 %v1987
      %v2082 = vpop.f32.mrb[0].mxu0
      %v2083 = vadd.f32 %v1959, %v2082
      %v2084 = vpop.f32.mrb[0].mxu0
      %v2085 = vpop.f32.mrb[0].mxu0
      %v2086 = vadd.f32 %v1962, %v2085
      %v2087 = vpop.f32.mrb[0].mxu0
      %2088 = vdwg.mxu0
      %2089 = vrot.lane.b32.xlu0 %v898, 112
      %v2090 = vpop.permute.xlu0 %2089
      %2091 = vrot.lane.b32.xlu0 %v899, 112
      %v2092 = vpop.permute.xlu0 %2091
      %2093 = vrot.lane.b32.xlu0 %v900, 112
      %v2094 = vpop.permute.xlu0 %2093
      %2095 = vrot.lane.b32.xlu0 %v901, 112
      %v2096 = vpop.permute.xlu0 %2095
      %2097 = vrot.lane.b32.xlu0 %v902, 112
      %v2098 = vpop.permute.xlu0 %2097
      %2099 = vrot.lane.b32.xlu0 %v903, 112
      %v2100 = vpop.permute.xlu0 %2099
      %2101 = vrot.lane.b32.xlu0 %v904, 112
      %v2102 = vpop.permute.xlu0 %2101
      %2103 = vrot.lane.b32.xlu0 %v905, 112
      %v2104 = vpop.permute.xlu0 %2103
      %2105 = vrot.lane.b32.xlu0 %v906, 80
      %v2106 = vpop.permute.xlu0 %2105
      %2107 = vrot.lane.b32.xlu0 %v907, 80
      %v2108 = vpop.permute.xlu0 %2107
      %2109 = vrot.lane.b32.xlu0 %v908, 80
      %v2110 = vpop.permute.xlu0 %2109
      %2111 = vrot.lane.b32.xlu0 %v909, 80
      %v2112 = vpop.permute.xlu0 %2111
      %2113 = vrot.lane.b32.xlu0 %v910, 80
      %v2114 = vpop.permute.xlu0 %2113
      %2115 = vrot.lane.b32.xlu0 %v911, 80
      %v2116 = vpop.permute.xlu0 %2115
      %2117 = vrot.lane.b32.xlu0 %v912, 80
      %v2118 = vpop.permute.xlu0 %2117
      %2119 = vrot.lane.b32.xlu0 %v913, 80
      %v2120 = vpop.permute.xlu0 %2119
      %v2122 = vsel %vm945, %v2090, 0
      %v2125 = vsel %vm945, %v2092, 0
      %v2128 = vsel %vm945, %v2094, 0
      %v2131 = vsel %vm945, %v2096, 0
      %v2134 = vsel %vm945, %v2098, 0
      %v2137 = vsel %vm945, %v2100, 0
      %v2140 = vsel %vm945, %v2102, 0
      %v2143 = vsel %vm945, %v2104, 0
      %v2146 = vsel %vm945, %v2106, 0
      %v2149 = vsel %vm945, %v2108, 0
      %v2152 = vsel %vm945, %v2110, 0
      %v2155 = vsel %vm945, %v2112, 0
      %v2158 = vsel %vm945, %v2114, 0
      %v2161 = vsel %vm945, %v2116, 0
      %v2164 = vsel %vm945, %v2118, 0
      %v2167 = vsel %vm945, %v2120, 0
      %2169 = vmatprep.subr.bf16.mxu0 0
      %2170 = vmatpush1.bf16.xpose.msra.mxu0 %v2146
      %2171 = vmatprep.subr.bf16.mxu0 0
      %2172 = vmatpush1.bf16.xpose.msra.mxu0 %v2149
      %2173 = vmatprep.subr.bf16.mxu0 0
      %2174 = vmatpush1.bf16.xpose.msra.mxu0 %v2152
      %2175 = vmatprep.subr.bf16.mxu0 0
      %2176 = vmatpush1.bf16.xpose.msra.mxu0 %v2155
      %2177 = vmatprep.subr.bf16.mxu0 0
      %2178 = vmatpush1.bf16.xpose.msra.mxu0 %v2158
      %2179 = vmatprep.subr.bf16.mxu0 0
      %2180 = vmatpush1.bf16.xpose.msra.mxu0 %v2161
      %2181 = vmatprep.subr.bf16.mxu0 0
      %2182 = vmatpush1.bf16.xpose.msra.mxu0 %v2164
      %2183 = vmatprep.subr.bf16.mxu0 0
      %2184 = vmatpush1.bf16.xpose.msra.mxu0 %v2167
      %2185 = vmatprep.subr.bf16.mxu0 0
      %2186 = vmatpush1.bf16.xpose.msra.mxu0 0
      %2187 = vmatprep.subr.bf16.mxu0 0
      %2188 = vmatpush1.bf16.xpose.msra.mxu0 0
      %2189 = vmatprep.subr.bf16.mxu0 0
      %2190 = vmatpush1.bf16.xpose.msra.mxu0 0
      %2191 = vmatprep.subr.bf16.mxu0 0
      %2192 = vmatpush1.bf16.xpose.msra.mxu0 0
      %2193 = vmatprep.subr.bf16.mxu0 0
      %2194 = vmatpush1.bf16.xpose.msra.mxu0 0
      %2195 = vmatprep.subr.bf16.mxu0 0
      %2196 = vmatpush1.bf16.xpose.msra.mxu0 0
      %2197 = vmatprep.subr.bf16.mxu0 0
      %2198 = vmatpush1.bf16.xpose.msra.mxu0 0
      %2199 = vmatprep.subr.bf16.mxu0 0
      %2200 = vmatpush1.bf16.xpose.msra.mxu0 0
      %2201 = vmatprep.mubr.bf16.mxu0 0
      %2202 = vmatmul.mubr.bf16.gmra.mrb[0].mxu0 %v2122
      %v2203 = vpop.f32.mrb[0].mxu0
      %v2204 = vadd.f32 %v919, %v2203
      %v2205 = vpop.f32.mrb[0].mxu0
      %v2206 = vpop.f32.mrb[0].mxu0
      %v2207 = vadd.f32 %v919, %v2206
      %v2208 = vpop.f32.mrb[0].mxu0
      %2209 = vmatprep.mubr.bf16.mxu0 0
      %2210 = vmatmul.mubr.bf16.gmra.mrb[0].mxu0 %v2125
      %v2211 = vpop.f32.mrb[0].mxu0
      %v2212 = vadd.f32 %v919, %v2211
      %v2213 = vpop.f32.mrb[0].mxu0
      %v2214 = vpop.f32.mrb[0].mxu0
      %v2215 = vadd.f32 %v919, %v2214
      %v2216 = vpop.f32.mrb[0].mxu0
      %2217 = vmatprep.mubr.bf16.mxu0 0
      %2218 = vmatmul.mubr.bf16.gmra.mrb[0].mxu0 %v2128
      %v2219 = vpop.f32.mrb[0].mxu0
      %v2220 = vadd.f32 %v919, %v2219
      %v2221 = vpop.f32.mrb[0].mxu0
      %v2222 = vpop.f32.mrb[0].mxu0
      %v2223 = vadd.f32 %v919, %v2222
      %v2224 = vpop.f32.mrb[0].mxu0
      %2225 = vmatprep.mubr.bf16.mxu0 0
      %2226 = vmatmul.mubr.bf16.gmra.mrb[0].mxu0 %v2131
      %v2227 = vpop.f32.mrb[0].mxu0
      %v2228 = vadd.f32 %v919, %v2227
      %v2229 = vpop.f32.mrb[0].mxu0
      %v2230 = vpop.f32.mrb[0].mxu0
      %v2231 = vadd.f32 %v919, %v2230
      %v2232 = vpop.f32.mrb[0].mxu0
      %2233 = vmatprep.mubr.bf16.mxu0 0
      %2234 = vmatmul.mubr.bf16.gmra.mrb[0].mxu0 %v2134
      %v2235 = vpop.f32.mrb[0].mxu0
      %v2236 = vadd.f32 %v919, %v2235
      %v2237 = vpop.f32.mrb[0].mxu0
      %v2238 = vpop.f32.mrb[0].mxu0
      %v2239 = vadd.f32 %v919, %v2238
      %v2240 = vpop.f32.mrb[0].mxu0
      %2241 = vmatprep.mubr.bf16.mxu0 0
      %2242 = vmatmul.mubr.bf16.gmra.mrb[0].mxu0 %v2137
      %v2243 = vpop.f32.mrb[0].mxu0
      %v2244 = vadd.f32 %v919, %v2243
      %v2245 = vpop.f32.mrb[0].mxu0
      %v2246 = vpop.f32.mrb[0].mxu0
      %v2247 = vadd.f32 %v919, %v2246
      %v2248 = vpop.f32.mrb[0].mxu0
      %2249 = vmatprep.mubr.bf16.mxu0 0
      %2250 = vmatmul.mubr.bf16.gmra.mrb[0].mxu0 %v2140
      %v2251 = vpop.f32.mrb[0].mxu0
      %v2252 = vadd.f32 %v919, %v2251
      %v2253 = vpop.f32.mrb[0].mxu0
      %v2254 = vpop.f32.mrb[0].mxu0
      %v2255 = vadd.f32 %v919, %v2254
      %v2256 = vpop.f32.mrb[0].mxu0
      %2257 = vmatprep.mubr.bf16.mxu0 0
      %2258 = vmatmul.mubr.bf16.gmra.mrb[0].mxu0 %v2143
      %v2259 = vpop.f32.mrb[0].mxu0
      %v2260 = vadd.f32 %v919, %v2259
      %v2261 = vpop.f32.mrb[0].mxu0
      %v2262 = vpop.f32.mrb[0].mxu0
      %v2263 = vadd.f32 %v919, %v2262
      %v2264 = vpop.f32.mrb[0].mxu0
      %2265 = vdwg.mxu0
      %2266 = vmax.xlane.f32.xlu0 %v2204
      %v2267 = vpop.xlane.xlu0 %2266
      %2268 = vmax.xlane.f32.xlu0 %v2207
      %v2269 = vpop.xlane.xlu0 %2268
      %2270 = vmax.xlane.f32.xlu0 %v2212
      %v2271 = vpop.xlane.xlu0 %2270
      %2272 = vmax.xlane.f32.xlu0 %v2215
      %v2273 = vpop.xlane.xlu0 %2272
      %2274 = vmax.xlane.f32.xlu0 %v2220
      %v2275 = vpop.xlane.xlu0 %2274
      %2276 = vmax.xlane.f32.xlu0 %v2223
      %v2277 = vpop.xlane.xlu0 %2276
      %2278 = vmax.xlane.f32.xlu0 %v2228
      %v2279 = vpop.xlane.xlu0 %2278
      %2280 = vmax.xlane.f32.xlu0 %v2231
      %v2281 = vpop.xlane.xlu0 %2280
      %2282 = vmax.xlane.f32.xlu0 %v2236
      %v2283 = vpop.xlane.xlu0 %2282
      %2284 = vmax.xlane.f32.xlu0 %v2239
      %v2285 = vpop.xlane.xlu0 %2284
      %2286 = vmax.xlane.f32.xlu0 %v2244
      %v2287 = vpop.xlane.xlu0 %2286
      %2288 = vmax.xlane.f32.xlu0 %v2247
      %v2289 = vpop.xlane.xlu0 %2288
      %2290 = vmax.xlane.f32.xlu0 %v2252
      %v2291 = vpop.xlane.xlu0 %2290
      %2292 = vmax.xlane.f32.xlu0 %v2255
      %v2293 = vpop.xlane.xlu0 %2292
      %2294 = vmax.xlane.f32.xlu0 %v2260
      %v2295 = vpop.xlane.xlu0 %2294
      %2296 = vmax.xlane.f32.xlu0 %v2263
      %v2297 = vpop.xlane.xlu0 %2296
      %v2298 = vsub.f32 %v2204, %v2267
      %v2299 = vsub.f32 %v2207, %v2269
      %v2300 = vsub.f32 %v2212, %v2271
      %v2301 = vsub.f32 %v2215, %v2273
      %v2302 = vsub.f32 %v2220, %v2275
      %v2303 = vsub.f32 %v2223, %v2277
      %v2304 = vsub.f32 %v2228, %v2279
      %v2305 = vsub.f32 %v2231, %v2281
      %v2306 = vsub.f32 %v2236, %v2283
      %v2307 = vsub.f32 %v2239, %v2285
      %v2308 = vsub.f32 %v2244, %v2287
      %v2309 = vsub.f32 %v2247, %v2289
      %v2310 = vsub.f32 %v2252, %v2291
      %v2311 = vsub.f32 %v2255, %v2293
      %v2312 = vsub.f32 %v2260, %v2295
      %v2313 = vsub.f32 %v2263, %v2297
      %v2314 = vmul.f32 %v2298, 1.442695
      %v2315 = vpow.pop %v2314
      %v2316 = vmul.f32 %v2299, 1.442695
      %v2317 = vpow.pop %v2316
      %v2318 = vmul.f32 %v2300, 1.442695
      %v2319 = vpow.pop %v2318
      %v2320 = vmul.f32 %v2301, 1.442695
      %v2321 = vpow.pop %v2320
      %v2322 = vmul.f32 %v2302, 1.442695
      %v2323 = vpow.pop %v2322
      %v2324 = vmul.f32 %v2303, 1.442695
      %v2325 = vpow.pop %v2324
      %v2326 = vmul.f32 %v2304, 1.442695
      %v2327 = vpow.pop %v2326
      %v2328 = vmul.f32 %v2305, 1.442695
      %v2329 = vpow.pop %v2328
      %v2330 = vmul.f32 %v2306, 1.442695
      %v2331 = vpow.pop %v2330
      %v2332 = vmul.f32 %v2307, 1.442695
      %v2333 = vpow.pop %v2332
      %v2334 = vmul.f32 %v2308, 1.442695
      %v2335 = vpow.pop %v2334
      %v2336 = vmul.f32 %v2309, 1.442695
      %v2337 = vpow.pop %v2336
      %v2338 = vmul.f32 %v2310, 1.442695
      %v2339 = vpow.pop %v2338
      %v2340 = vmul.f32 %v2311, 1.442695
      %v2341 = vpow.pop %v2340
      %v2342 = vmul.f32 %v2312, 1.442695
      %v2343 = vpow.pop %v2342
      %v2344 = vmul.f32 %v2313, 1.442695
      %v2345 = vpow.pop %v2344
      %2346 = vadd.xlane.f32.xlu0 %v2315
      %v2347 = vpop.xlane.xlu0 %2346
      %2348 = vadd.xlane.f32.xlu0 %v2317
      %v2349 = vpop.xlane.xlu0 %2348
      %2350 = vadd.xlane.f32.xlu0 %v2319
      %v2351 = vpop.xlane.xlu0 %2350
      %2352 = vadd.xlane.f32.xlu0 %v2321
      %v2353 = vpop.xlane.xlu0 %2352
      %2354 = vadd.xlane.f32.xlu0 %v2323
      %v2355 = vpop.xlane.xlu0 %2354
      %2356 = vadd.xlane.f32.xlu0 %v2325
      %v2357 = vpop.xlane.xlu0 %2356
      %2358 = vadd.xlane.f32.xlu0 %v2327
      %v2359 = vpop.xlane.xlu0 %2358
      %2360 = vadd.xlane.f32.xlu0 %v2329
      %v2361 = vpop.xlane.xlu0 %2360
      %2362 = vadd.xlane.f32.xlu0 %v2331
      %v2363 = vpop.xlane.xlu0 %2362
      %2364 = vadd.xlane.f32.xlu0 %v2333
      %v2365 = vpop.xlane.xlu0 %2364
      %2366 = vadd.xlane.f32.xlu0 %v2335
      %v2367 = vpop.xlane.xlu0 %2366
      %2368 = vadd.xlane.f32.xlu0 %v2337
      %v2369 = vpop.xlane.xlu0 %2368
      %2370 = vadd.xlane.f32.xlu0 %v2339
      %v2371 = vpop.xlane.xlu0 %2370
      %2372 = vadd.xlane.f32.xlu0 %v2341
      %v2373 = vpop.xlane.xlu0 %2372
      %2374 = vadd.xlane.f32.xlu0 %v2343
      %v2375 = vpop.xlane.xlu0 %2374
      %2376 = vadd.xlane.f32.xlu0 %v2345
      %v2377 = vpop.xlane.xlu0 %2376
      %v2378 = vrcp.pop %v2347
      %v2379 = vrcp.pop %v2349
      %v2380 = vrcp.pop %v2351
      %v2381 = vrcp.pop %v2353
      %v2382 = vrcp.pop %v2355
      %v2383 = vrcp.pop %v2357
      %v2384 = vrcp.pop %v2359
      %v2385 = vrcp.pop %v2361
      %v2386 = vrcp.pop %v2363
      %v2387 = vrcp.pop %v2365
      %v2388 = vrcp.pop %v2367
      %v2389 = vrcp.pop %v2369
      %v2390 = vrcp.pop %v2371
      %v2391 = vrcp.pop %v2373
      %v2392 = vrcp.pop %v2375
      %v2393 = vrcp.pop %v2377
      %v2394 = vmul.f32 %v2315, %v2378
      %v2395 = vmul.f32 %v2317, %v2379
      %v2396 = vmul.f32 %v2319, %v2380
      %v2397 = vmul.f32 %v2321, %v2381
      %v2398 = vmul.f32 %v2323, %v2382
      %v2399 = vmul.f32 %v2325, %v2383
      %v2400 = vmul.f32 %v2327, %v2384
      %v2401 = vmul.f32 %v2329, %v2385
      %v2402 = vmul.f32 %v2331, %v2386
      %v2403 = vmul.f32 %v2333, %v2387
      %v2404 = vmul.f32 %v2335, %v2388
      %v2405 = vmul.f32 %v2337, %v2389
      %v2406 = vmul.f32 %v2339, %v2390
      %v2407 = vmul.f32 %v2341, %v2391
      %v2408 = vmul.f32 %v2343, %v2392
      %v2409 = vmul.f32 %v2345, %v2393
      %v2410 = vpack.c.bf16 %v2395, %v2394
      %v2411 = vpack.c.bf16 %v2397, %v2396
      %v2412 = vpack.c.bf16 %v2399, %v2398
      %v2413 = vpack.c.bf16 %v2401, %v2400
      %v2414 = vpack.c.bf16 %v2403, %v2402
      %v2415 = vpack.c.bf16 %v2405, %v2404
      %v2416 = vpack.c.bf16 %v2407, %v2406
      %v2417 = vpack.c.bf16 %v2409, %v2408
      %2418 = vrot.lane.b32.xlu0 %v906, 48
      %v2419 = vpop.permute.xlu0 %2418
      %2420 = vrot.lane.b32.xlu0 %v907, 48
      %v2421 = vpop.permute.xlu0 %2420
      %2422 = vrot.lane.b32.xlu0 %v908, 48
      %v2423 = vpop.permute.xlu0 %2422
      %2424 = vrot.lane.b32.xlu0 %v909, 48
      %v2425 = vpop.permute.xlu0 %2424
      %2426 = vrot.lane.b32.xlu0 %v910, 48
      %v2427 = vpop.permute.xlu0 %2426
      %2428 = vrot.lane.b32.xlu0 %v911, 48
      %v2429 = vpop.permute.xlu0 %2428
      %2430 = vrot.lane.b32.xlu0 %v912, 48
      %v2431 = vpop.permute.xlu0 %2430
      %2432 = vrot.lane.b32.xlu0 %v913, 48
      %v2433 = vpop.permute.xlu0 %2432
      %2442 = vmatprep.subr.bf16.mxu0 0
      %2443 = vmatpush1.bf16.msra.mxu0 %v2419
      %2444 = vmatprep.subr.bf16.mxu0 0
      %2445 = vmatpush1.bf16.msra.mxu0 %v2421
      %2446 = vmatprep.subr.bf16.mxu0 0
      %2447 = vmatpush1.bf16.msra.mxu0 %v2423
      %2448 = vmatprep.subr.bf16.mxu0 0
      %2449 = vmatpush1.bf16.msra.mxu0 %v2425
      %2450 = vmatprep.subr.bf16.mxu0 0
      %2451 = vmatpush1.bf16.msra.mxu0 %v2427
      %2452 = vmatprep.subr.bf16.mxu0 0
      %2453 = vmatpush1.bf16.msra.mxu0 %v2429
      %2454 = vmatprep.subr.bf16.mxu0 0
      %2455 = vmatpush1.bf16.msra.mxu0 %v2431
      %2456 = vmatprep.subr.bf16.mxu0 0
      %2457 = vmatpush1.bf16.msra.mxu0 %v2433
      %2458 = vmatprep.subr.bf16.mxu0 0
      %2459 = vmatpush1.bf16.msra.mxu0 0
      %2460 = vmatprep.subr.bf16.mxu0 0
      %2461 = vmatpush1.bf16.msra.mxu0 0
      %2462 = vmatprep.subr.bf16.mxu0 0
      %2463 = vmatpush1.bf16.msra.mxu0 0
      %2464 = vmatprep.subr.bf16.mxu0 0
      %2465 = vmatpush1.bf16.msra.mxu0 0
      %2466 = vmatprep.subr.bf16.mxu0 0
      %2467 = vmatpush1.bf16.msra.mxu0 0
      %2468 = vmatprep.subr.bf16.mxu0 0
      %2469 = vmatpush1.bf16.msra.mxu0 0
      %2470 = vmatprep.subr.bf16.mxu0 0
      %2471 = vmatpush1.bf16.msra.mxu0 0
      %2472 = vmatprep.subr.bf16.mxu0 0
      %2473 = vmatpush1.bf16.msra.mxu0 0
      %2474 = vmatprep.mubr.bf16.mxu0 0
      %2475 = vmatmul.mubr.bf16.gmra.mrb[0].mxu0 %v2410
      %v2476 = vpop.f32.mrb[0].mxu0
      %v2477 = vadd.f32 0.0, %v2476
      %v2478 = vpop.f32.mrb[0].mxu0
      %v2479 = vpop.f32.mrb[0].mxu0
      %v2480 = vadd.f32 0.0, %v2479
      %v2481 = vpop.f32.mrb[0].mxu0
      %2482 = vmatprep.mubr.bf16.mxu0 0
      %2483 = vmatmul.mubr.bf16.gmra.mrb[0].mxu0 %v2411
      %v2484 = vpop.f32.mrb[0].mxu0
      %v2485 = vadd.f32 0.0, %v2484
      %v2486 = vpop.f32.mrb[0].mxu0
      %v2487 = vpop.f32.mrb[0].mxu0
      %v2488 = vadd.f32 0.0, %v2487
      %v2489 = vpop.f32.mrb[0].mxu0
      %2490 = vmatprep.mubr.bf16.mxu0 0
      %2491 = vmatmul.mubr.bf16.gmra.mrb[0].mxu0 %v2412
      %v2492 = vpop.f32.mrb[0].mxu0
      %v2493 = vadd.f32 0.0, %v2492
      %v2494 = vpop.f32.mrb[0].mxu0
      %v2495 = vpop.f32.mrb[0].mxu0
      %v2496 = vadd.f32 0.0, %v2495
      %v2497 = vpop.f32.mrb[0].mxu0
      %2498 = vmatprep.mubr.bf16.mxu0 0
      %2499 = vmatmul.mubr.bf16.gmra.mrb[0].mxu0 %v2413
      %v2500 = vpop.f32.mrb[0].mxu0
      %v2501 = vadd.f32 0.0, %v2500
      %v2502 = vpop.f32.mrb[0].mxu0
      %v2503 = vpop.f32.mrb[0].mxu0
      %v2504 = vadd.f32 0.0, %v2503
      %v2505 = vpop.f32.mrb[0].mxu0
      %2506 = vmatprep.mubr.bf16.mxu0 0
      %2507 = vmatmul.mubr.bf16.gmra.mrb[0].mxu0 %v2414
      %v2508 = vpop.f32.mrb[0].mxu0
      %v2509 = vadd.f32 0.0, %v2508
      %v2510 = vpop.f32.mrb[0].mxu0
      %v2511 = vpop.f32.mrb[0].mxu0
      %v2512 = vadd.f32 0.0, %v2511
      %v2513 = vpop.f32.mrb[0].mxu0
      %2514 = vmatprep.mubr.bf16.mxu0 0
      %2515 = vmatmul.mubr.bf16.gmra.mrb[0].mxu0 %v2415
      %v2516 = vpop.f32.mrb[0].mxu0
      %v2517 = vadd.f32 0.0, %v2516
      %v2518 = vpop.f32.mrb[0].mxu0
      %v2519 = vpop.f32.mrb[0].mxu0
      %v2520 = vadd.f32 0.0, %v2519
      %v2521 = vpop.f32.mrb[0].mxu0
      %2522 = vmatprep.mubr.bf16.mxu0 0
      %2523 = vmatmul.mubr.bf16.gmra.mrb[0].mxu0 %v2416
      %v2524 = vpop.f32.mrb[0].mxu0
      %v2525 = vadd.f32 0.0, %v2524
      %v2526 = vpop.f32.mrb[0].mxu0
      %v2527 = vpop.f32.mrb[0].mxu0
      %v2528 = vadd.f32 0.0, %v2527
      %v2529 = vpop.f32.mrb[0].mxu0
      %2530 = vmatprep.mubr.bf16.mxu0 0
      %2531 = vmatmul.mubr.bf16.gmra.mrb[0].mxu0 %v2417
      %v2532 = vpop.f32.mrb[0].mxu0
      %v2533 = vadd.f32 0.0, %v2532
      %v2534 = vpop.f32.mrb[0].mxu0
      %v2535 = vpop.f32.mrb[0].mxu0
      %v2536 = vadd.f32 0.0, %v2535
      %v2537 = vpop.f32.mrb[0].mxu0
      %2538 = vdwg.mxu0
      %v2539 = vpack.c.bf16 %v2480, %v2477
      %v2540 = vpack.c.bf16 %v2488, %v2485
      %v2541 = vpack.c.bf16 %v2496, %v2493
      %v2542 = vpack.c.bf16 %v2504, %v2501
      %v2543 = vpack.c.bf16 %v2512, %v2509
      %v2544 = vpack.c.bf16 %v2520, %v2517
      %v2545 = vpack.c.bf16 %v2528, %v2525
      %v2546 = vpack.c.bf16 %v2536, %v2533
      %v2547 = vld [vmem:[%s637 + $0x8] sm:$0xf]
      %v2549 = vsel %vm945, %v2539, 0
      %v2552 = vsel %vm945, %v2540, 0
      %v2555 = vsel %vm945, %v2541, 0
      %v2558 = vsel %vm945, %v2542, 0
      %v2561 = vsel %vm945, %v2543, 0
      %v2564 = vsel %vm945, %v2544, 0
      %v2567 = vsel %vm945, %v2545, 0
      %v2570 = vsel %vm945, %v2546, 0
      %v2573 = vsel %vm1864, %v2547, 0
      %2575 = vmatprep.subr.bf16.mxu0 0
      %2576 = vmatpush1.bf16.msra.mxu0 %v2573
      %2577 = vmatprep.subr.bf16.mxu0 0
      %2578 = vmatpush1.bf16.msra.mxu0 0
      %2579 = vmatprep.subr.bf16.mxu0 0
      %2580 = vmatpush1.bf16.msra.mxu0 0
      %2581 = vmatprep.subr.bf16.mxu0 0
      %2582 = vmatpush1.bf16.msra.mxu0 0
      %2583 = vmatprep.subr.bf16.mxu0 0
      %2584 = vmatpush1.bf16.msra.mxu0 0
      %2585 = vmatprep.subr.bf16.mxu0 0
      %2586 = vmatpush1.bf16.msra.mxu0 0
      %2587 = vmatprep.subr.bf16.mxu0 0
      %2588 = vmatpush1.bf16.msra.mxu0 0
      %2589 = vmatprep.subr.bf16.mxu0 0
      %2590 = vmatpush1.bf16.msra.mxu0 0
      %2591 = vmatprep.subr.bf16.mxu0 0
      %2592 = vmatpush1.bf16.msra.mxu0 0
      %2593 = vmatprep.subr.bf16.mxu0 0
      %2594 = vmatpush1.bf16.msra.mxu0 0
      %2595 = vmatprep.subr.bf16.mxu0 0
      %2596 = vmatpush1.bf16.msra.mxu0 0
      %2597 = vmatprep.subr.bf16.mxu0 0
      %2598 = vmatpush1.bf16.msra.mxu0 0
      %2599 = vmatprep.subr.bf16.mxu0 0
      %2600 = vmatpush1.bf16.msra.mxu0 0
      %2601 = vmatprep.subr.bf16.mxu0 0
      %2602 = vmatpush1.bf16.msra.mxu0 0
      %2603 = vmatprep.subr.bf16.mxu0 0
      %2604 = vmatpush1.bf16.msra.mxu0 0
      %2605 = vmatprep.subr.bf16.mxu0 0
      %2606 = vmatpush1.bf16.msra.mxu0 0
      %2607 = vmatprep.mubr.bf16.mxu0 0
      %2608 = vmatmul.mubr.bf16.gmra.mrb[0].mxu0 %v2549
      %v2609 = vpop.f32.mrb[0].mxu0
      %v2610 = vadd.f32 0.0, %v2609
      %v2611 = vpop.f32.mrb[0].mxu0
      %v2612 = vpop.f32.mrb[0].mxu0
      %v2613 = vadd.f32 0.0, %v2612
      %v2614 = vpop.f32.mrb[0].mxu0
      %2615 = vmatprep.mubr.bf16.mxu0 0
      %2616 = vmatmul.mubr.bf16.gmra.mrb[0].mxu0 %v2552
      %v2617 = vpop.f32.mrb[0].mxu0
      %v2618 = vadd.f32 0.0, %v2617
      %v2619 = vpop.f32.mrb[0].mxu0
      %v2620 = vpop.f32.mrb[0].mxu0
      %v2621 = vadd.f32 0.0, %v2620
      %v2622 = vpop.f32.mrb[0].mxu0
      %2623 = vmatprep.mubr.bf16.mxu0 0
      %2624 = vmatmul.mubr.bf16.gmra.mrb[0].mxu0 %v2555
      %v2625 = vpop.f32.mrb[0].mxu0
      %v2626 = vadd.f32 0.0, %v2625
      %v2627 = vpop.f32.mrb[0].mxu0
      %v2628 = vpop.f32.mrb[0].mxu0
      %v2629 = vadd.f32 0.0, %v2628
      %v2630 = vpop.f32.mrb[0].mxu0
      %2631 = vmatprep.mubr.bf16.mxu0 0
      %2632 = vmatmul.mubr.bf16.gmra.mrb[0].mxu0 %v2558
      %v2633 = vpop.f32.mrb[0].mxu0
      %v2634 = vadd.f32 0.0, %v2633
      %v2635 = vpop.f32.mrb[0].mxu0
      %v2636 = vpop.f32.mrb[0].mxu0
      %v2637 = vadd.f32 0.0, %v2636
      %v2638 = vpop.f32.mrb[0].mxu0
      %2639 = vmatprep.mubr.bf16.mxu0 0
      %2640 = vmatmul.mubr.bf16.gmra.mrb[0].mxu0 %v2561
      %v2641 = vpop.f32.mrb[0].mxu0
      %v2642 = vadd.f32 0.0, %v2641
      %v2643 = vpop.f32.mrb[0].mxu0
      %v2644 = vpop.f32.mrb[0].mxu0
      %v2645 = vadd.f32 0.0, %v2644
      %v2646 = vpop.f32.mrb[0].mxu0
      %2647 = vmatprep.mubr.bf16.mxu0 0
      %2648 = vmatmul.mubr.bf16.gmra.mrb[0].mxu0 %v2564
      %v2649 = vpop.f32.mrb[0].mxu0
      %v2650 = vadd.f32 0.0, %v2649
      %v2651 = vpop.f32.mrb[0].mxu0
      %v2652 = vpop.f32.mrb[0].mxu0
      %v2653 = vadd.f32 0.0, %v2652
      %v2654 = vpop.f32.mrb[0].mxu0
      %2655 = vmatprep.mubr.bf16.mxu0 0
      %2656 = vmatmul.mubr.bf16.gmra.mrb[0].mxu0 %v2567
      %v2657 = vpop.f32.mrb[0].mxu0
      %v2658 = vadd.f32 0.0, %v2657
      %v2659 = vpop.f32.mrb[0].mxu0
      %v2660 = vpop.f32.mrb[0].mxu0
      %v2661 = vadd.f32 0.0, %v2660
      %v2662 = vpop.f32.mrb[0].mxu0
      %2663 = vmatprep.mubr.bf16.mxu0 0
      %2664 = vmatmul.mubr.bf16.gmra.mrb[0].mxu0 %v2570
      %v2665 = vpop.f32.mrb[0].mxu0
      %v2666 = vadd.f32 0.0, %v2665
      %v2667 = vpop.f32.mrb[0].mxu0
      %v2668 = vpop.f32.mrb[0].mxu0
      %v2669 = vadd.f32 0.0, %v2668
      %v2670 = vpop.f32.mrb[0].mxu0
      %2671 = vdwg.mxu0
      %v2672 = vadd.f32 %v2027, %v2610
      %v2673 = vadd.f32 %v2030, %v2613
      %v2674 = vadd.f32 %v2035, %v2618
      %v2675 = vadd.f32 %v2038, %v2621
      %v2676 = vadd.f32 %v2043, %v2626
      %v2677 = vadd.f32 %v2046, %v2629
      %v2678 = vadd.f32 %v2051, %v2634
      %v2679 = vadd.f32 %v2054, %v2637
      %v2680 = vadd.f32 %v2059, %v2642
      %v2681 = vadd.f32 %v2062, %v2645
      %v2682 = vadd.f32 %v2067, %v2650
      %v2683 = vadd.f32 %v2070, %v2653
      %v2684 = vadd.f32 %v2075, %v2658
      %v2685 = vadd.f32 %v2078, %v2661
      %v2686 = vadd.f32 %v2083, %v2666
      %v2687 = vadd.f32 %v2086, %v2669
      %2688 = vrot.lane.b32.xlu0 %v898, 104
      %v2689 = vpop.permute.xlu0 %2688
      %2690 = vrot.lane.b32.xlu0 %v899, 104
      %v2691 = vpop.permute.xlu0 %2690
      %2692 = vrot.lane.b32.xlu0 %v900, 104
      %v2693 = vpop.permute.xlu0 %2692
      %2694 = vrot.lane.b32.xlu0 %v901, 104
      %v2695 = vpop.permute.xlu0 %2694
      %2696 = vrot.lane.b32.xlu0 %v902, 104
      %v2697 = vpop.permute.xlu0 %2696
      %2698 = vrot.lane.b32.xlu0 %v903, 104
      %v2699 = vpop.permute.xlu0 %2698
      %2700 = vrot.lane.b32.xlu0 %v904, 104
      %v2701 = vpop.permute.xlu0 %2700
      %2702 = vrot.lane.b32.xlu0 %v905, 104
      %v2703 = vpop.permute.xlu0 %2702
      %2704 = vrot.lane.b32.xlu0 %v906, 72
      %v2705 = vpop.permute.xlu0 %2704
      %2706 = vrot.lane.b32.xlu0 %v907, 72
      %v2707 = vpop.permute.xlu0 %2706
      %2708 = vrot.lane.b32.xlu0 %v908, 72
      %v2709 = vpop.permute.xlu0 %2708
      %2710 = vrot.lane.b32.xlu0 %v909, 72
      %v2711 = vpop.permute.xlu0 %2710
      %2712 = vrot.lane.b32.xlu0 %v910, 72
      %v2713 = vpop.permute.xlu0 %2712
      %2714 = vrot.lane.b32.xlu0 %v911, 72
      %v2715 = vpop.permute.xlu0 %2714
      %2716 = vrot.lane.b32.xlu0 %v912, 72
      %v2717 = vpop.permute.xlu0 %2716
      %2718 = vrot.lane.b32.xlu0 %v913, 72
      %v2719 = vpop.permute.xlu0 %2718
      %v2721 = vsel %vm945, %v2689, 0
      %v2724 = vsel %vm945, %v2691, 0
      %v2727 = vsel %vm945, %v2693, 0
      %v2730 = vsel %vm945, %v2695, 0
      %v2733 = vsel %vm945, %v2697, 0
      %v2736 = vsel %vm945, %v2699, 0
      %v2739 = vsel %vm945, %v2701, 0
      %v2742 = vsel %vm945, %v2703, 0
      %v2745 = vsel %vm945, %v2705, 0
      %v2748 = vsel %vm945, %v2707, 0
      %v2751 = vsel %vm945, %v2709, 0
      %v2754 = vsel %vm945, %v2711, 0
      %v2757 = vsel %vm945, %v2713, 0
      %v2760 = vsel %vm945, %v2715, 0
      %v2763 = vsel %vm945, %v2717, 0
      %v2766 = vsel %vm945, %v2719, 0
      %2768 = vmatprep.subr.bf16.mxu0 0
      %2769 = vmatpush1.bf16.xpose.msra.mxu0 %v2745
      %2770 = vmatprep.subr.bf16.mxu0 0
      %2771 = vmatpush1.bf16.xpose.msra.mxu0 %v2748
      %2772 = vmatprep.subr.bf16.mxu0 0
      %2773 = vmatpush1.bf16.xpose.msra.mxu0 %v2751
      %2774 = vmatprep.subr.bf16.mxu0 0
      %2775 = vmatpush1.bf16.xpose.msra.mxu0 %v2754
      %2776 = vmatprep.subr.bf16.mxu0 0
      %2777 = vmatpush1.bf16.xpose.msra.mxu0 %v2757
      %2778 = vmatprep.subr.bf16.mxu0 0
      %2779 = vmatpush1.bf16.xpose.msra.mxu0 %v2760
      %2780 = vmatprep.subr.bf16.mxu0 0
      %2781 = vmatpush1.bf16.xpose.msra.mxu0 %v2763
      %2782 = vmatprep.subr.bf16.mxu0 0
      %2783 = vmatpush1.bf16.xpose.msra.mxu0 %v2766
      %2784 = vmatprep.subr.bf16.mxu0 0
      %2785 = vmatpush1.bf16.xpose.msra.mxu0 0
      %2786 = vmatprep.subr.bf16.mxu0 0
      %2787 = vmatpush1.bf16.xpose.msra.mxu0 0
      %2788 = vmatprep.subr.bf16.mxu0 0
      %2789 = vmatpush1.bf16.xpose.msra.mxu0 0
      %2790 = vmatprep.subr.bf16.mxu0 0
      %2791 = vmatpush1.bf16.xpose.msra.mxu0 0
      %2792 = vmatprep.subr.bf16.mxu0 0
      %2793 = vmatpush1.bf16.xpose.msra.mxu0 0
      %2794 = vmatprep.subr.bf16.mxu0 0
      %2795 = vmatpush1.bf16.xpose.msra.mxu0 0
      %2796 = vmatprep.subr.bf16.mxu0 0
      %2797 = vmatpush1.bf16.xpose.msra.mxu0 0
      %2798 = vmatprep.subr.bf16.mxu0 0
      %2799 = vmatpush1.bf16.xpose.msra.mxu0 0
      %2800 = vmatprep.mubr.bf16.mxu0 0
      %2801 = vmatmul.mubr.bf16.gmra.mrb[0].mxu0 %v2721
      %v2802 = vpop.f32.mrb[0].mxu0
      %v2803 = vadd.f32 %v919, %v2802
      %v2804 = vpop.f32.mrb[0].mxu0
      %v2805 = vpop.f32.mrb[0].mxu0
      %v2806 = vadd.f32 %v919, %v2805
      %v2807 = vpop.f32.mrb[0].mxu0
      %2808 = vmatprep.mubr.bf16.mxu0 0
      %2809 = vmatmul.mubr.bf16.gmra.mrb[0].mxu0 %v2724
      %v2810 = vpop.f32.mrb[0].mxu0
      %v2811 = vadd.f32 %v919, %v2810
      %v2812 = vpop.f32.mrb[0].mxu0
      %v2813 = vpop.f32.mrb[0].mxu0
      %v2814 = vadd.f32 %v919, %v2813
      %v2815 = vpop.f32.mrb[0].mxu0
      %2816 = vmatprep.mubr.bf16.mxu0 0
      %2817 = vmatmul.mubr.bf16.gmra.mrb[0].mxu0 %v2727
      %v2818 = vpop.f32.mrb[0].mxu0
      %v2819 = vadd.f32 %v919, %v2818
      %v2820 = vpop.f32.mrb[0].mxu0
      %v2821 = vpop.f32.mrb[0].mxu0
      %v2822 = vadd.f32 %v919, %v2821
      %v2823 = vpop.f32.mrb[0].mxu0
      %2824 = vmatprep.mubr.bf16.mxu0 0
      %2825 = vmatmul.mubr.bf16.gmra.mrb[0].mxu0 %v2730
      %v2826 = vpop.f32.mrb[0].mxu0
      %v2827 = vadd.f32 %v919, %v2826
      %v2828 = vpop.f32.mrb[0].mxu0
      %v2829 = vpop.f32.mrb[0].mxu0
      %v2830 = vadd.f32 %v919, %v2829
      %v2831 = vpop.f32.mrb[0].mxu0
      %2832 = vmatprep.mubr.bf16.mxu0 0
      %2833 = vmatmul.mubr.bf16.gmra.mrb[0].mxu0 %v2733
      %v2834 = vpop.f32.mrb[0].mxu0
      %v2835 = vadd.f32 %v919, %v2834
      %v2836 = vpop.f32.mrb[0].mxu0
      %v2837 = vpop.f32.mrb[0].mxu0
      %v2838 = vadd.f32 %v919, %v2837
      %v2839 = vpop.f32.mrb[0].mxu0
      %2840 = vmatprep.mubr.bf16.mxu0 0
      %2841 = vmatmul.mubr.bf16.gmra.mrb[0].mxu0 %v2736
      %v2842 = vpop.f32.mrb[0].mxu0
      %v2843 = vadd.f32 %v919, %v2842
      %v2844 = vpop.f32.mrb[0].mxu0
      %v2845 = vpop.f32.mrb[0].mxu0
      %v2846 = vadd.f32 %v919, %v2845
      %v2847 = vpop.f32.mrb[0].mxu0
      %2848 = vmatprep.mubr.bf16.mxu0 0
      %2849 = vmatmul.mubr.bf16.gmra.mrb[0].mxu0 %v2739
      %v2850 = vpop.f32.mrb[0].mxu0
      %v2851 = vadd.f32 %v919, %v2850
      %v2852 = vpop.f32.mrb[0].mxu0
      %v2853 = vpop.f32.mrb[0].mxu0
      %v2854 = vadd.f32 %v919, %v2853
      %v2855 = vpop.f32.mrb[0].mxu0
      %2856 = vmatprep.mubr.bf16.mxu0 0
      %2857 = vmatmul.mubr.bf16.gmra.mrb[0].mxu0 %v2742
      %v2858 = vpop.f32.mrb[0].mxu0
      %v2859 = vadd.f32 %v919, %v2858
      %v2860 = vpop.f32.mrb[0].mxu0
      %v2861 = vpop.f32.mrb[0].mxu0
      %v2862 = vadd.f32 %v919, %v2861
      %v2863 = vpop.f32.mrb[0].mxu0
      %2864 = vdwg.mxu0
      %2865 = vmax.xlane.f32.xlu0 %v2803
      %v2866 = vpop.xlane.xlu0 %2865
      %2867 = vmax.xlane.f32.xlu0 %v2806
      %v2868 = vpop.xlane.xlu0 %2867
      %2869 = vmax.xlane.f32.xlu0 %v2811
      %v2870 = vpop.xlane.xlu0 %2869
      %2871 = vmax.xlane.f32.xlu0 %v2814
      %v2872 = vpop.xlane.xlu0 %2871
      %2873 = vmax.xlane.f32.xlu0 %v2819
      %v2874 = vpop.xlane.xlu0 %2873
      %2875 = vmax.xlane.f32.xlu0 %v2822
      %v2876 = vpop.xlane.xlu0 %2875
      %2877 = vmax.xlane.f32.xlu0 %v2827
      %v2878 = vpop.xlane.xlu0 %2877
      %2879 = vmax.xlane.f32.xlu0 %v2830
      %v2880 = vpop.xlane.xlu0 %2879
      %2881 = vmax.xlane.f32.xlu0 %v2835
      %v2882 = vpop.xlane.xlu0 %2881
      %2883 = vmax.xlane.f32.xlu0 %v2838
      %v2884 = vpop.xlane.xlu0 %2883
      %2885 = vmax.xlane.f32.xlu0 %v2843
      %v2886 = vpop.xlane.xlu0 %2885
      %2887 = vmax.xlane.f32.xlu0 %v2846
      %v2888 = vpop.xlane.xlu0 %2887
      %2889 = vmax.xlane.f32.xlu0 %v2851
      %v2890 = vpop.xlane.xlu0 %2889
      %2891 = vmax.xlane.f32.xlu0 %v2854
      %v2892 = vpop.xlane.xlu0 %2891
      %2893 = vmax.xlane.f32.xlu0 %v2859
      %v2894 = vpop.xlane.xlu0 %2893
      %2895 = vmax.xlane.f32.xlu0 %v2862
      %v2896 = vpop.xlane.xlu0 %2895
      %v2897 = vsub.f32 %v2803, %v2866
      %v2898 = vsub.f32 %v2806, %v2868
      %v2899 = vsub.f32 %v2811, %v2870
      %v2900 = vsub.f32 %v2814, %v2872
      %v2901 = vsub.f32 %v2819, %v2874
      %v2902 = vsub.f32 %v2822, %v2876
      %v2903 = vsub.f32 %v2827, %v2878
      %v2904 = vsub.f32 %v2830, %v2880
      %v2905 = vsub.f32 %v2835, %v2882
      %v2906 = vsub.f32 %v2838, %v2884
      %v2907 = vsub.f32 %v2843, %v2886
      %v2908 = vsub.f32 %v2846, %v2888
      %v2909 = vsub.f32 %v2851, %v2890
      %v2910 = vsub.f32 %v2854, %v2892
      %v2911 = vsub.f32 %v2859, %v2894
      %v2912 = vsub.f32 %v2862, %v2896
      %v2913 = vmul.f32 %v2897, 1.442695
      %v2914 = vpow.pop %v2913
      %v2915 = vmul.f32 %v2898, 1.442695
      %v2916 = vpow.pop %v2915
      %v2917 = vmul.f32 %v2899, 1.442695
      %v2918 = vpow.pop %v2917
      %v2919 = vmul.f32 %v2900, 1.442695
      %v2920 = vpow.pop %v2919
      %v2921 = vmul.f32 %v2901, 1.442695
      %v2922 = vpow.pop %v2921
      %v2923 = vmul.f32 %v2902, 1.442695
      %v2924 = vpow.pop %v2923
      %v2925 = vmul.f32 %v2903, 1.442695
      %v2926 = vpow.pop %v2925
      %v2927 = vmul.f32 %v2904, 1.442695
      %v2928 = vpow.pop %v2927
      %v2929 = vmul.f32 %v2905, 1.442695
      %v2930 = vpow.pop %v2929
      %v2931 = vmul.f32 %v2906, 1.442695
      %v2932 = vpow.pop %v2931
      %v2933 = vmul.f32 %v2907, 1.442695
      %v2934 = vpow.pop %v2933
      %v2935 = vmul.f32 %v2908, 1.442695
      %v2936 = vpow.pop %v2935
      %v2937 = vmul.f32 %v2909, 1.442695
      %v2938 = vpow.pop %v2937
      %v2939 = vmul.f32 %v2910, 1.442695
      %v2940 = vpow.pop %v2939
      %v2941 = vmul.f32 %v2911, 1.442695
      %v2942 = vpow.pop %v2941
      %v2943 = vmul.f32 %v2912, 1.442695
      %v2944 = vpow.pop %v2943
      %2945 = vadd.xlane.f32.xlu0 %v2914
      %v2946 = vpop.xlane.xlu0 %2945
      %2947 = vadd.xlane.f32.xlu0 %v2916
      %v2948 = vpop.xlane.xlu0 %2947
      %2949 = vadd.xlane.f32.xlu0 %v2918
      %v2950 = vpop.xlane.xlu0 %2949
      %2951 = vadd.xlane.f32.xlu0 %v2920
      %v2952 = vpop.xlane.xlu0 %2951
      %2953 = vadd.xlane.f32.xlu0 %v2922
      %v2954 = vpop.xlane.xlu0 %2953
      %2955 = vadd.xlane.f32.xlu0 %v2924
      %v2956 = vpop.xlane.xlu0 %2955
      %2957 = vadd.xlane.f32.xlu0 %v2926
      %v2958 = vpop.xlane.xlu0 %2957
      %2959 = vadd.xlane.f32.xlu0 %v2928
      %v2960 = vpop.xlane.xlu0 %2959
      %2961 = vadd.xlane.f32.xlu0 %v2930
      %v2962 = vpop.xlane.xlu0 %2961
      %2963 = vadd.xlane.f32.xlu0 %v2932
      %v2964 = vpop.xlane.xlu0 %2963
      %2965 = vadd.xlane.f32.xlu0 %v2934
      %v2966 = vpop.xlane.xlu0 %2965
      %2967 = vadd.xlane.f32.xlu0 %v2936
      %v2968 = vpop.xlane.xlu0 %2967
      %2969 = vadd.xlane.f32.xlu0 %v2938
      %v2970 = vpop.xlane.xlu0 %2969
      %2971 = vadd.xlane.f32.xlu0 %v2940
      %v2972 = vpop.xlane.xlu0 %2971
      %2973 = vadd.xlane.f32.xlu0 %v2942
      %v2974 = vpop.xlane.xlu0 %2973
      %2975 = vadd.xlane.f32.xlu0 %v2944
      %v2976 = vpop.xlane.xlu0 %2975
      %v2977 = vrcp.pop %v2946
      %v2978 = vrcp.pop %v2948
      %v2979 = vrcp.pop %v2950
      %v2980 = vrcp.pop %v2952
      %v2981 = vrcp.pop %v2954
      %v2982 = vrcp.pop %v2956
      %v2983 = vrcp.pop %v2958
      %v2984 = vrcp.pop %v2960
      %v2985 = vrcp.pop %v2962
      %v2986 = vrcp.pop %v2964
      %v2987 = vrcp.pop %v2966
      %v2988 = vrcp.pop %v2968
      %v2989 = vrcp.pop %v2970
      %v2990 = vrcp.pop %v2972
      %v2991 = vrcp.pop %v2974
      %v2992 = vrcp.pop %v2976
      %v2993 = vmul.f32 %v2914, %v2977
      %v2994 = vmul.f32 %v2916, %v2978
      %v2995 = vmul.f32 %v2918, %v2979
      %v2996 = vmul.f32 %v2920, %v2980
      %v2997 = vmul.f32 %v2922, %v2981
      %v2998 = vmul.f32 %v2924, %v2982
      %v2999 = vmul.f32 %v2926, %v2983
      %v3000 = vmul.f32 %v2928, %v2984
      %v3001 = vmul.f32 %v2930, %v2985
      %v3002 = vmul.f32 %v2932, %v2986
      %v3003 = vmul.f32 %v2934, %v2987
      %v3004 = vmul.f32 %v2936, %v2988
      %v3005 = vmul.f32 %v2938, %v2989
      %v3006 = vmul.f32 %v2940, %v2990
      %v3007 = vmul.f32 %v2942, %v2991
      %v3008 = vmul.f32 %v2944, %v2992
      %v3009 = vpack.c.bf16 %v2994, %v2993
      %v3010 = vpack.c.bf16 %v2996, %v2995
      %v3011 = vpack.c.bf16 %v2998, %v2997
      %v3012 = vpack.c.bf16 %v3000, %v2999
      %v3013 = vpack.c.bf16 %v3002, %v3001
      %v3014 = vpack.c.bf16 %v3004, %v3003
      %v3015 = vpack.c.bf16 %v3006, %v3005
      %v3016 = vpack.c.bf16 %v3008, %v3007
      %3017 = vrot.lane.b32.xlu0 %v906, 40
      %v3018 = vpop.permute.xlu0 %3017
      %3019 = vrot.lane.b32.xlu0 %v907, 40
      %v3020 = vpop.permute.xlu0 %3019
      %3021 = vrot.lane.b32.xlu0 %v908, 40
      %v3022 = vpop.permute.xlu0 %3021
      %3023 = vrot.lane.b32.xlu0 %v909, 40
      %v3024 = vpop.permute.xlu0 %3023
      %3025 = vrot.lane.b32.xlu0 %v910, 40
      %v3026 = vpop.permute.xlu0 %3025
      %3027 = vrot.lane.b32.xlu0 %v911, 40
      %v3028 = vpop.permute.xlu0 %3027
      %3029 = vrot.lane.b32.xlu0 %v912, 40
      %v3030 = vpop.permute.xlu0 %3029
      %3031 = vrot.lane.b32.xlu0 %v913, 40
      %v3032 = vpop.permute.xlu0 %3031
      %3041 = vmatprep.subr.bf16.mxu0 0
      %3042 = vmatpush1.bf16.msra.mxu0 %v3018
      %3043 = vmatprep.subr.bf16.mxu0 0
      %3044 = vmatpush1.bf16.msra.mxu0 %v3020
      %3045 = vmatprep.subr.bf16.mxu0 0
      %3046 = vmatpush1.bf16.msra.mxu0 %v3022
      %3047 = vmatprep.subr.bf16.mxu0 0
      %3048 = vmatpush1.bf16.msra.mxu0 %v3024
      %3049 = vmatprep.subr.bf16.mxu0 0
      %3050 = vmatpush1.bf16.msra.mxu0 %v3026
      %3051 = vmatprep.subr.bf16.mxu0 0
      %3052 = vmatpush1.bf16.msra.mxu0 %v3028
      %3053 = vmatprep.subr.bf16.mxu0 0
      %3054 = vmatpush1.bf16.msra.mxu0 %v3030
      %3055 = vmatprep.subr.bf16.mxu0 0
      %3056 = vmatpush1.bf16.msra.mxu0 %v3032
      %3057 = vmatprep.subr.bf16.mxu0 0
      %3058 = vmatpush1.bf16.msra.mxu0 0
      %3059 = vmatprep.subr.bf16.mxu0 0
      %3060 = vmatpush1.bf16.msra.mxu0 0
      %3061 = vmatprep.subr.bf16.mxu0 0
      %3062 = vmatpush1.bf16.msra.mxu0 0
      %3063 = vmatprep.subr.bf16.mxu0 0
      %3064 = vmatpush1.bf16.msra.mxu0 0
      %3065 = vmatprep.subr.bf16.mxu0 0
      %3066 = vmatpush1.bf16.msra.mxu0 0
      %3067 = vmatprep.subr.bf16.mxu0 0
      %3068 = vmatpush1.bf16.msra.mxu0 0
      %3069 = vmatprep.subr.bf16.mxu0 0
      %3070 = vmatpush1.bf16.msra.mxu0 0
      %3071 = vmatprep.subr.bf16.mxu0 0
      %3072 = vmatpush1.bf16.msra.mxu0 0
      %3073 = vmatprep.mubr.bf16.mxu0 0
      %3074 = vmatmul.mubr.bf16.gmra.mrb[0].mxu0 %v3009
      %v3075 = vpop.f32.mrb[0].mxu0
      %v3076 = vadd.f32 0.0, %v3075
      %v3077 = vpop.f32.mrb[0].mxu0
      %v3078 = vpop.f32.mrb[0].mxu0
      %v3079 = vadd.f32 0.0, %v3078
      %v3080 = vpop.f32.mrb[0].mxu0
      %3081 = vmatprep.mubr.bf16.mxu0 0
      %3082 = vmatmul.mubr.bf16.gmra.mrb[0].mxu0 %v3010
      %v3083 = vpop.f32.mrb[0].mxu0
      %v3084 = vadd.f32 0.0, %v3083
      %v3085 = vpop.f32.mrb[0].mxu0
      %v3086 = vpop.f32.mrb[0].mxu0
      %v3087 = vadd.f32 0.0, %v3086
      %v3088 = vpop.f32.mrb[0].mxu0
      %3089 = vmatprep.mubr.bf16.mxu0 0
      %3090 = vmatmul.mubr.bf16.gmra.mrb[0].mxu0 %v3011
      %v3091 = vpop.f32.mrb[0].mxu0
      %v3092 = vadd.f32 0.0, %v3091
      %v3093 = vpop.f32.mrb[0].mxu0
      %v3094 = vpop.f32.mrb[0].mxu0
      %v3095 = vadd.f32 0.0, %v3094
      %v3096 = vpop.f32.mrb[0].mxu0
      %3097 = vmatprep.mubr.bf16.mxu0 0
      %3098 = vmatmul.mubr.bf16.gmra.mrb[0].mxu0 %v3012
      %v3099 = vpop.f32.mrb[0].mxu0
      %v3100 = vadd.f32 0.0, %v3099
      %v3101 = vpop.f32.mrb[0].mxu0
      %v3102 = vpop.f32.mrb[0].mxu0
      %v3103 = vadd.f32 0.0, %v3102
      %v3104 = vpop.f32.mrb[0].mxu0
      %3105 = vmatprep.mubr.bf16.mxu0 0
      %3106 = vmatmul.mubr.bf16.gmra.mrb[0].mxu0 %v3013
      %v3107 = vpop.f32.mrb[0].mxu0
      %v3108 = vadd.f32 0.0, %v3107
      %v3109 = vpop.f32.mrb[0].mxu0
      %v3110 = vpop.f32.mrb[0].mxu0
      %v3111 = vadd.f32 0.0, %v3110
      %v3112 = vpop.f32.mrb[0].mxu0
      %3113 = vmatprep.mubr.bf16.mxu0 0
      %3114 = vmatmul.mubr.bf16.gmra.mrb[0].mxu0 %v3014
      %v3115 = vpop.f32.mrb[0].mxu0
      %v3116 = vadd.f32 0.0, %v3115
      %v3117 = vpop.f32.mrb[0].mxu0
      %v3118 = vpop.f32.mrb[0].mxu0
      %v3119 = vadd.f32 0.0, %v3118
      %v3120 = vpop.f32.mrb[0].mxu0
      %3121 = vmatprep.mubr.bf16.mxu0 0
      %3122 = vmatmul.mubr.bf16.gmra.mrb[0].mxu0 %v3015
      %v3123 = vpop.f32.mrb[0].mxu0
      %v3124 = vadd.f32 0.0, %v3123
      %v3125 = vpop.f32.mrb[0].mxu0
      %v3126 = vpop.f32.mrb[0].mxu0
      %v3127 = vadd.f32 0.0, %v3126
      %v3128 = vpop.f32.mrb[0].mxu0
      %3129 = vmatprep.mubr.bf16.mxu0 0
      %3130 = vmatmul.mubr.bf16.gmra.mrb[0].mxu0 %v3016
      %v3131 = vpop.f32.mrb[0].mxu0
      %v3132 = vadd.f32 0.0, %v3131
      %v3133 = vpop.f32.mrb[0].mxu0
      %v3134 = vpop.f32.mrb[0].mxu0
      %v3135 = vadd.f32 0.0, %v3134
      %v3136 = vpop.f32.mrb[0].mxu0
      %3137 = vdwg.mxu0
      %v3138 = vpack.c.bf16 %v3079, %v3076
      %v3139 = vpack.c.bf16 %v3087, %v3084
      %v3140 = vpack.c.bf16 %v3095, %v3092
      %v3141 = vpack.c.bf16 %v3103, %v3100
      %v3142 = vpack.c.bf16 %v3111, %v3108
      %v3143 = vpack.c.bf16 %v3119, %v3116
      %v3144 = vpack.c.bf16 %v3127, %v3124
      %v3145 = vpack.c.bf16 %v3135, %v3132
      %v3146 = vld [vmem:[%s637 + $0xc] sm:$0xf]
      %v3148 = vsel %vm945, %v3138, 0
      %v3151 = vsel %vm945, %v3139, 0
      %v3154 = vsel %vm945, %v3140, 0
      %v3157 = vsel %vm945, %v3141, 0
      %v3160 = vsel %vm945, %v3142, 0
      %v3163 = vsel %vm945, %v3143, 0
      %v3166 = vsel %vm945, %v3144, 0
      %v3169 = vsel %vm945, %v3145, 0
      %v3172 = vsel %vm1864, %v3146, 0
      %3174 = vmatprep.subr.bf16.mxu0 0
      %3175 = vmatpush1.bf16.msra.mxu0 %v3172
      %3176 = vmatprep.subr.bf16.mxu0 0
      %3177 = vmatpush1.bf16.msra.mxu0 0
      %3178 = vmatprep.subr.bf16.mxu0 0
      %3179 = vmatpush1.bf16.msra.mxu0 0
      %3180 = vmatprep.subr.bf16.mxu0 0
      %3181 = vmatpush1.bf16.msra.mxu0 0
      %3182 = vmatprep.subr.bf16.mxu0 0
      %3183 = vmatpush1.bf16.msra.mxu0 0
      %3184 = vmatprep.subr.bf16.mxu0 0
      %3185 = vmatpush1.bf16.msra.mxu0 0
      %3186 = vmatprep.subr.bf16.mxu0 0
      %3187 = vmatpush1.bf16.msra.mxu0 0
      %3188 = vmatprep.subr.bf16.mxu0 0
      %3189 = vmatpush1.bf16.msra.mxu0 0
      %3190 = vmatprep.subr.bf16.mxu0 0
      %3191 = vmatpush1.bf16.msra.mxu0 0
      %3192 = vmatprep.subr.bf16.mxu0 0
      %3193 = vmatpush1.bf16.msra.mxu0 0
      %3194 = vmatprep.subr.bf16.mxu0 0
      %3195 = vmatpush1.bf16.msra.mxu0 0
      %3196 = vmatprep.subr.bf16.mxu0 0
      %3197 = vmatpush1.bf16.msra.mxu0 0
      %3198 = vmatprep.subr.bf16.mxu0 0
      %3199 = vmatpush1.bf16.msra.mxu0 0
      %3200 = vmatprep.subr.bf16.mxu0 0
      %3201 = vmatpush1.bf16.msra.mxu0 0
      %3202 = vmatprep.subr.bf16.mxu0 0
      %3203 = vmatpush1.bf16.msra.mxu0 0
      %3204 = vmatprep.subr.bf16.mxu0 0
      %3205 = vmatpush1.bf16.msra.mxu0 0
      %3206 = vmatprep.mubr.bf16.mxu0 0
      %3207 = vmatmul.mubr.bf16.gmra.mrb[0].mxu0 %v3148
      %v3208 = vpop.f32.mrb[0].mxu0
      %v3209 = vadd.f32 0.0, %v3208
      %v3210 = vpop.f32.mrb[0].mxu0
      %v3211 = vpop.f32.mrb[0].mxu0
      %v3212 = vadd.f32 0.0, %v3211
      %v3213 = vpop.f32.mrb[0].mxu0
      %3214 = vmatprep.mubr.bf16.mxu0 0
      %3215 = vmatmul.mubr.bf16.gmra.mrb[0].mxu0 %v3151
      %v3216 = vpop.f32.mrb[0].mxu0
      %v3217 = vadd.f32 0.0, %v3216
      %v3218 = vpop.f32.mrb[0].mxu0
      %v3219 = vpop.f32.mrb[0].mxu0
      %v3220 = vadd.f32 0.0, %v3219
      %v3221 = vpop.f32.mrb[0].mxu0
      %3222 = vmatprep.mubr.bf16.mxu0 0
      %3223 = vmatmul.mubr.bf16.gmra.mrb[0].mxu0 %v3154
      %v3224 = vpop.f32.mrb[0].mxu0
      %v3225 = vadd.f32 0.0, %v3224
      %v3226 = vpop.f32.mrb[0].mxu0
      %v3227 = vpop.f32.mrb[0].mxu0
      %v3228 = vadd.f32 0.0, %v3227
      %v3229 = vpop.f32.mrb[0].mxu0
      %3230 = vmatprep.mubr.bf16.mxu0 0
      %3231 = vmatmul.mubr.bf16.gmra.mrb[0].mxu0 %v3157
      %v3232 = vpop.f32.mrb[0].mxu0
      %v3233 = vadd.f32 0.0, %v3232
      %v3234 = vpop.f32.mrb[0].mxu0
      %v3235 = vpop.f32.mrb[0].mxu0
      %v3236 = vadd.f32 0.0, %v3235
      %v3237 = vpop.f32.mrb[0].mxu0
      %3238 = vmatprep.mubr.bf16.mxu0 0
      %3239 = vmatmul.mubr.bf16.gmra.mrb[0].mxu0 %v3160
      %v3240 = vpop.f32.mrb[0].mxu0
      %v3241 = vadd.f32 0.0, %v3240
      %v3242 = vpop.f32.mrb[0].mxu0
      %v3243 = vpop.f32.mrb[0].mxu0
      %v3244 = vadd.f32 0.0, %v3243
      %v3245 = vpop.f32.mrb[0].mxu0
      %3246 = vmatprep.mubr.bf16.mxu0 0
      %3247 = vmatmul.mubr.bf16.gmra.mrb[0].mxu0 %v3163
      %v3248 = vpop.f32.mrb[0].mxu0
      %v3249 = vadd.f32 0.0, %v3248
      %v3250 = vpop.f32.mrb[0].mxu0
      %v3251 = vpop.f32.mrb[0].mxu0
      %v3252 = vadd.f32 0.0, %v3251
      %v3253 = vpop.f32.mrb[0].mxu0
      %3254 = vmatprep.mubr.bf16.mxu0 0
      %3255 = vmatmul.mubr.bf16.gmra.mrb[0].mxu0 %v3166
      %v3256 = vpop.f32.mrb[0].mxu0
      %v3257 = vadd.f32 0.0, %v3256
      %v3258 = vpop.f32.mrb[0].mxu0
      %v3259 = vpop.f32.mrb[0].mxu0
      %v3260 = vadd.f32 0.0, %v3259
      %v3261 = vpop.f32.mrb[0].mxu0
      %3262 = vmatprep.mubr.bf16.mxu0 0
      %3263 = vmatmul.mubr.bf16.gmra.mrb[0].mxu0 %v3169
      %v3264 = vpop.f32.mrb[0].mxu0
      %v3265 = vadd.f32 0.0, %v3264
      %v3266 = vpop.f32.mrb[0].mxu0
      %v3267 = vpop.f32.mrb[0].mxu0
      %v3268 = vadd.f32 0.0, %v3267
      %v3269 = vpop.f32.mrb[0].mxu0
      %3270 = vdwg.mxu0
      %v3271 = vadd.f32 %v2672, %v3209
      %v3272 = vadd.f32 %v2673, %v3212
      %v3273 = vadd.f32 %v2674, %v3217
      %v3274 = vadd.f32 %v2675, %v3220
      %v3275 = vadd.f32 %v2676, %v3225
      %v3276 = vadd.f32 %v2677, %v3228
      %v3277 = vadd.f32 %v2678, %v3233
      %v3278 = vadd.f32 %v2679, %v3236
      %v3279 = vadd.f32 %v2680, %v3241
      %v3280 = vadd.f32 %v2681, %v3244
      %v3281 = vadd.f32 %v2682, %v3249
      %v3282 = vadd.f32 %v2683, %v3252
      %v3283 = vadd.f32 %v2684, %v3257
      %v3284 = vadd.f32 %v2685, %v3260
      %v3285 = vadd.f32 %v2686, %v3265
      %v3286 = vadd.f32 %v2687, %v3268
      %v3287 = vld [vmem:[%s640] sm:$0x1]
      %v3289 = vlaneseq
      %v3290 = vshrl.u32 %v3289, 7
      %v3291 = vsub.s32 0, %v3290
      %v3292 = vrot.slane %v3287, %v3291
      %v3294 = vadd.f32 %v3271, %v3292
      %v3295 = vadd.f32 %v3272, %v3292
      %v3296 = vadd.f32 %v3273, %v3292
      %v3297 = vadd.f32 %v3274, %v3292
      %v3298 = vadd.f32 %v3275, %v3292
      %v3299 = vadd.f32 %v3276, %v3292
      %v3300 = vadd.f32 %v3277, %v3292
      %v3301 = vadd.f32 %v3278, %v3292
      %v3302 = vadd.f32 %v3279, %v3292
      %v3303 = vadd.f32 %v3280, %v3292
      %v3304 = vadd.f32 %v3281, %v3292
      %v3305 = vadd.f32 %v3282, %v3292
      %v3306 = vadd.f32 %v3283, %v3292
      %v3307 = vadd.f32 %v3284, %v3292
      %v3308 = vadd.f32 %v3285, %v3292
      %v3309 = vadd.f32 %v3286, %v3292
      %v3310 = vadd.f32 %v713, %v3294
      %v3311 = vadd.f32 %v714, %v3295
      %v3312 = vadd.f32 %v715, %v3296
      %v3313 = vadd.f32 %v716, %v3297
      %v3314 = vadd.f32 %v717, %v3298
      %v3315 = vadd.f32 %v718, %v3299
      %v3316 = vadd.f32 %v719, %v3300
      %v3317 = vadd.f32 %v720, %v3301
      %v3318 = vadd.f32 %v721, %v3302
      %v3319 = vadd.f32 %v722, %v3303
      %v3320 = vadd.f32 %v723, %v3304
      %v3321 = vadd.f32 %v724, %v3305
      %v3322 = vadd.f32 %v725, %v3306
      %v3323 = vadd.f32 %v726, %v3307
      %v3324 = vadd.f32 %v727, %v3308
      %v3325 = vadd.f32 %v728, %v3309
      %v3326 = vld [vmem:[%s643] sm:$0x1]
      %v3327 = vld [vmem:[%s646] sm:$0x1]
      %v3328 = vsel %vm760, %v3310, 0.0
      %3329 = vadd.xlane.f32.xlu0 %v3328
      %v3330 = vpop.xlane.xlu0 %3329
      %v3331 = vsel %vm760, %v3311, 0.0
      %3332 = vadd.xlane.f32.xlu0 %v3331
      %v3333 = vpop.xlane.xlu0 %3332
      %v3334 = vsel %vm760, %v3312, 0.0
      %3335 = vadd.xlane.f32.xlu0 %v3334
      %v3336 = vpop.xlane.xlu0 %3335
      %v3337 = vsel %vm760, %v3313, 0.0
      %3338 = vadd.xlane.f32.xlu0 %v3337
      %v3339 = vpop.xlane.xlu0 %3338
      %v3340 = vsel %vm760, %v3314, 0.0
      %3341 = vadd.xlane.f32.xlu0 %v3340
      %v3342 = vpop.xlane.xlu0 %3341
      %v3343 = vsel %vm760, %v3315, 0.0
      %3344 = vadd.xlane.f32.xlu0 %v3343
      %v3345 = vpop.xlane.xlu0 %3344
      %v3346 = vsel %vm760, %v3316, 0.0
      %3347 = vadd.xlane.f32.xlu0 %v3346
      %v3348 = vpop.xlane.xlu0 %3347
      %v3349 = vsel %vm760, %v3317, 0.0
      %3350 = vadd.xlane.f32.xlu0 %v3349
      %v3351 = vpop.xlane.xlu0 %3350
      %v3352 = vsel %vm760, %v3318, 0.0
      %3353 = vadd.xlane.f32.xlu0 %v3352
      %v3354 = vpop.xlane.xlu0 %3353
      %v3355 = vsel %vm760, %v3319, 0.0
      %3356 = vadd.xlane.f32.xlu0 %v3355
      %v3357 = vpop.xlane.xlu0 %3356
      %v3358 = vsel %vm760, %v3320, 0.0
      %3359 = vadd.xlane.f32.xlu0 %v3358
      %v3360 = vpop.xlane.xlu0 %3359
      %v3361 = vsel %vm760, %v3321, 0.0
      %3362 = vadd.xlane.f32.xlu0 %v3361
      %v3363 = vpop.xlane.xlu0 %3362
      %v3364 = vsel %vm760, %v3322, 0.0
      %3365 = vadd.xlane.f32.xlu0 %v3364
      %v3366 = vpop.xlane.xlu0 %3365
      %v3367 = vsel %vm760, %v3323, 0.0
      %3368 = vadd.xlane.f32.xlu0 %v3367
      %v3369 = vpop.xlane.xlu0 %3368
      %v3370 = vsel %vm760, %v3324, 0.0
      %3371 = vadd.xlane.f32.xlu0 %v3370
      %v3372 = vpop.xlane.xlu0 %3371
      %v3373 = vsel %vm760, %v3325, 0.0
      %3374 = vadd.xlane.f32.xlu0 %v3373
      %v3375 = vpop.xlane.xlu0 %3374
      %v3376 = vrcp.pop 32.0
      %v3377 = vmul.f32 %v3330, %v3376
      %v3378 = vmul.f32 %v3333, %v3376
      %v3379 = vmul.f32 %v3336, %v3376
      %v3380 = vmul.f32 %v3339, %v3376
      %v3381 = vmul.f32 %v3342, %v3376
      %v3382 = vmul.f32 %v3345, %v3376
      %v3383 = vmul.f32 %v3348, %v3376
      %v3384 = vmul.f32 %v3351, %v3376
      %v3385 = vmul.f32 %v3354, %v3376
      %v3386 = vmul.f32 %v3357, %v3376
      %v3387 = vmul.f32 %v3360, %v3376
      %v3388 = vmul.f32 %v3363, %v3376
      %v3389 = vmul.f32 %v3366, %v3376
      %v3390 = vmul.f32 %v3369, %v3376
      %v3391 = vmul.f32 %v3372, %v3376
      %v3392 = vmul.f32 %v3375, %v3376
      %v3393 = vsub.f32 %v3310, %v3377
      %v3394 = vsub.f32 %v3311, %v3378
      %v3395 = vsub.f32 %v3312, %v3379
      %v3396 = vsub.f32 %v3313, %v3380
      %v3397 = vsub.f32 %v3314, %v3381
      %v3398 = vsub.f32 %v3315, %v3382
      %v3399 = vsub.f32 %v3316, %v3383
      %v3400 = vsub.f32 %v3317, %v3384
      %v3401 = vsub.f32 %v3318, %v3385
      %v3402 = vsub.f32 %v3319, %v3386
      %v3403 = vsub.f32 %v3320, %v3387
      %v3404 = vsub.f32 %v3321, %v3388
      %v3405 = vsub.f32 %v3322, %v3389
      %v3406 = vsub.f32 %v3323, %v3390
      %v3407 = vsub.f32 %v3324, %v3391
      %v3408 = vsub.f32 %v3325, %v3392
      %v3409 = vmul.f32 %v3393, %v3393
      %v3410 = vmul.f32 %v3394, %v3394
      %v3411 = vmul.f32 %v3395, %v3395
      %v3412 = vmul.f32 %v3396, %v3396
      %v3413 = vmul.f32 %v3397, %v3397
      %v3414 = vmul.f32 %v3398, %v3398
      %v3415 = vmul.f32 %v3399, %v3399
      %v3416 = vmul.f32 %v3400, %v3400
      %v3417 = vmul.f32 %v3401, %v3401
      %v3418 = vmul.f32 %v3402, %v3402
      %v3419 = vmul.f32 %v3403, %v3403
      %v3420 = vmul.f32 %v3404, %v3404
      %v3421 = vmul.f32 %v3405, %v3405
      %v3422 = vmul.f32 %v3406, %v3406
      %v3423 = vmul.f32 %v3407, %v3407
      %v3424 = vmul.f32 %v3408, %v3408
      %v3425 = vsel %vm760, %v3409, 0.0
      %3426 = vadd.xlane.f32.xlu0 %v3425
      %v3427 = vpop.xlane.xlu0 %3426
      %v3428 = vsel %vm760, %v3410, 0.0
      %3429 = vadd.xlane.f32.xlu0 %v3428
      %v3430 = vpop.xlane.xlu0 %3429
      %v3431 = vsel %vm760, %v3411, 0.0
      %3432 = vadd.xlane.f32.xlu0 %v3431
      %v3433 = vpop.xlane.xlu0 %3432
      %v3434 = vsel %vm760, %v3412, 0.0
      %3435 = vadd.xlane.f32.xlu0 %v3434
      %v3436 = vpop.xlane.xlu0 %3435
      %v3437 = vsel %vm760, %v3413, 0.0
      %3438 = vadd.xlane.f32.xlu0 %v3437
      %v3439 = vpop.xlane.xlu0 %3438
      %v3440 = vsel %vm760, %v3414, 0.0
      %3441 = vadd.xlane.f32.xlu0 %v3440
      %v3442 = vpop.xlane.xlu0 %3441
      %v3443 = vsel %vm760, %v3415, 0.0
      %3444 = vadd.xlane.f32.xlu0 %v3443
      %v3445 = vpop.xlane.xlu0 %3444
      %v3446 = vsel %vm760, %v3416, 0.0
      %3447 = vadd.xlane.f32.xlu0 %v3446
      %v3448 = vpop.xlane.xlu0 %3447
      %v3449 = vsel %vm760, %v3417, 0.0
      %3450 = vadd.xlane.f32.xlu0 %v3449
      %v3451 = vpop.xlane.xlu0 %3450
      %v3452 = vsel %vm760, %v3418, 0.0
      %3453 = vadd.xlane.f32.xlu0 %v3452
      %v3454 = vpop.xlane.xlu0 %3453
      %v3455 = vsel %vm760, %v3419, 0.0
      %3456 = vadd.xlane.f32.xlu0 %v3455
      %v3457 = vpop.xlane.xlu0 %3456
      %v3458 = vsel %vm760, %v3420, 0.0
      %3459 = vadd.xlane.f32.xlu0 %v3458
      %v3460 = vpop.xlane.xlu0 %3459
      %v3461 = vsel %vm760, %v3421, 0.0
      %3462 = vadd.xlane.f32.xlu0 %v3461
      %v3463 = vpop.xlane.xlu0 %3462
      %v3464 = vsel %vm760, %v3422, 0.0
      %3465 = vadd.xlane.f32.xlu0 %v3464
      %v3466 = vpop.xlane.xlu0 %3465
      %v3467 = vsel %vm760, %v3423, 0.0
      %3468 = vadd.xlane.f32.xlu0 %v3467
      %v3469 = vpop.xlane.xlu0 %3468
      %v3470 = vsel %vm760, %v3424, 0.0
      %3471 = vadd.xlane.f32.xlu0 %v3470
      %v3472 = vpop.xlane.xlu0 %3471
      %v3473 = vmul.f32 %v3427, %v3376
      %v3474 = vmul.f32 %v3430, %v3376
      %v3475 = vmul.f32 %v3433, %v3376
      %v3476 = vmul.f32 %v3436, %v3376
      %v3477 = vmul.f32 %v3439, %v3376
      %v3478 = vmul.f32 %v3442, %v3376
      %v3479 = vmul.f32 %v3445, %v3376
      %v3480 = vmul.f32 %v3448, %v3376
      %v3481 = vmul.f32 %v3451, %v3376
      %v3482 = vmul.f32 %v3454, %v3376
      %v3483 = vmul.f32 %v3457, %v3376
      %v3484 = vmul.f32 %v3460, %v3376
      %v3485 = vmul.f32 %v3463, %v3376
      %v3486 = vmul.f32 %v3466, %v3376
      %v3487 = vmul.f32 %v3469, %v3376
      %v3488 = vmul.f32 %v3472, %v3376
      %v3489 = vadd.f32 %v3473, 1e-05
      %v3490 = vadd.f32 %v3474, 1e-05
      %v3491 = vadd.f32 %v3475, 1e-05
      %v3492 = vadd.f32 %v3476, 1e-05
      %v3493 = vadd.f32 %v3477, 1e-05
      %v3494 = vadd.f32 %v3478, 1e-05
      %v3495 = vadd.f32 %v3479, 1e-05
      %v3496 = vadd.f32 %v3480, 1e-05
      %v3497 = vadd.f32 %v3481, 1e-05
      %v3498 = vadd.f32 %v3482, 1e-05
      %v3499 = vadd.f32 %v3483, 1e-05
      %v3500 = vadd.f32 %v3484, 1e-05
      %v3501 = vadd.f32 %v3485, 1e-05
      %v3502 = vadd.f32 %v3486, 1e-05
      %v3503 = vadd.f32 %v3487, 1e-05
      %v3504 = vadd.f32 %v3488, 1e-05
      %v3505 = vrsqrt.pop %v3489
      %v3506 = vrsqrt.pop %v3490
      %v3507 = vrsqrt.pop %v3491
      %v3508 = vrsqrt.pop %v3492
      %v3509 = vrsqrt.pop %v3493
      %v3510 = vrsqrt.pop %v3494
      %v3511 = vrsqrt.pop %v3495
      %v3512 = vrsqrt.pop %v3496
      %v3513 = vrsqrt.pop %v3497
      %v3514 = vrsqrt.pop %v3498
      %v3515 = vrsqrt.pop %v3499
      %v3516 = vrsqrt.pop %v3500
      %v3517 = vrsqrt.pop %v3501
      %v3518 = vrsqrt.pop %v3502
      %v3519 = vrsqrt.pop %v3503
      %v3520 = vrsqrt.pop %v3504
      %v3521 = vmul.f32 %v3393, %v3505
      %v3522 = vmul.f32 %v3394, %v3506
      %v3523 = vmul.f32 %v3395, %v3507
      %v3524 = vmul.f32 %v3396, %v3508
      %v3525 = vmul.f32 %v3397, %v3509
      %v3526 = vmul.f32 %v3398, %v3510
      %v3527 = vmul.f32 %v3399, %v3511
      %v3528 = vmul.f32 %v3400, %v3512
      %v3529 = vmul.f32 %v3401, %v3513
      %v3530 = vmul.f32 %v3402, %v3514
      %v3531 = vmul.f32 %v3403, %v3515
      %v3532 = vmul.f32 %v3404, %v3516
      %v3533 = vmul.f32 %v3405, %v3517
      %v3534 = vmul.f32 %v3406, %v3518
      %v3535 = vmul.f32 %v3407, %v3519
      %v3536 = vmul.f32 %v3408, %v3520
      %v3538 = vlaneseq
      %v3539 = vshrl.u32 %v3538, 7
      %v3540 = vsub.s32 0, %v3539
      %v3541 = vrot.slane %v3326, %v3540
      %v3543 = vmul.f32 %v3521, %v3541
      %v3544 = vmul.f32 %v3522, %v3541
      %v3545 = vmul.f32 %v3523, %v3541
      %v3546 = vmul.f32 %v3524, %v3541
      %v3547 = vmul.f32 %v3525, %v3541
      %v3548 = vmul.f32 %v3526, %v3541
      %v3549 = vmul.f32 %v3527, %v3541
      %v3550 = vmul.f32 %v3528, %v3541
      %v3551 = vmul.f32 %v3529, %v3541
      %v3552 = vmul.f32 %v3530, %v3541
      %v3553 = vmul.f32 %v3531, %v3541
      %v3554 = vmul.f32 %v3532, %v3541
      %v3555 = vmul.f32 %v3533, %v3541
      %v3556 = vmul.f32 %v3534, %v3541
      %v3557 = vmul.f32 %v3535, %v3541
      %v3558 = vmul.f32 %v3536, %v3541
      %v3560 = vlaneseq
      %v3561 = vshrl.u32 %v3560, 7
      %v3562 = vsub.s32 0, %v3561
      %v3563 = vrot.slane %v3327, %v3562
      %v3565 = vadd.f32 %v3543, %v3563
      %v3566 = vadd.f32 %v3544, %v3563
      %v3567 = vadd.f32 %v3545, %v3563
      %v3568 = vadd.f32 %v3546, %v3563
      %v3569 = vadd.f32 %v3547, %v3563
      %v3570 = vadd.f32 %v3548, %v3563
      %v3571 = vadd.f32 %v3549, %v3563
      %v3572 = vadd.f32 %v3550, %v3563
      %v3573 = vadd.f32 %v3551, %v3563
      %v3574 = vadd.f32 %v3552, %v3563
      %v3575 = vadd.f32 %v3553, %v3563
      %v3576 = vadd.f32 %v3554, %v3563
      %v3577 = vadd.f32 %v3555, %v3563
      %v3578 = vadd.f32 %v3556, %v3563
      %v3579 = vadd.f32 %v3557, %v3563
      %v3580 = vadd.f32 %v3558, %v3563
      %v3581 = vpack.c.bf16 %v3566, %v3565
      %v3582 = vpack.c.bf16 %v3568, %v3567
      %v3583 = vpack.c.bf16 %v3570, %v3569
      %v3584 = vpack.c.bf16 %v3572, %v3571
      %v3585 = vpack.c.bf16 %v3574, %v3573
      %v3586 = vpack.c.bf16 %v3576, %v3575
      %v3587 = vpack.c.bf16 %v3578, %v3577
      %v3588 = vpack.c.bf16 %v3580, %v3579
      %v3589 = vld [vmem:[%s651] sm:$0xf]
      %v3590 = vld [vmem:[%s651 + $0x4] sm:$0xf]
      %v3591 = vld [vmem:[%s651 + $0x8] sm:$0xf]
      %v3592 = vld [vmem:[%s651 + $0xc] sm:$0xf]
      %v3593 = vld [vmem:[%s654] sm:$0x1]
      %v3595 = vlaneseq
      %v3596 = vshrl.u32 %v3595, 7
      %v3597 = vsub.s32 0, %v3596
      %v3598 = vrot.slane %v3593, %v3597
      %v3604 = vunpack.c.l.b16 %v3589
      %v3605 = vunpack.c.l.b16 %v3590
      %v3606 = vunpack.c.l.b16 %v3591
      %v3607 = vunpack.c.l.b16 %v3592
      %v3608 = vpack.c.b16 %v3605, %v3604
      %v3609 = vpack.c.b16 %v3607, %v3606
      %v3613 = vsel %vm760, %v3581, 0
      %v3616 = vsel %vm760, %v3582, 0
      %v3619 = vsel %vm760, %v3583, 0
      %v3622 = vsel %vm760, %v3584, 0
      %v3625 = vsel %vm760, %v3585, 0
      %v3628 = vsel %vm760, %v3586, 0
      %v3631 = vsel %vm760, %v3587, 0
      %v3634 = vsel %vm760, %v3588, 0
      %3636 = vmatprep.subr.bf16.mxu0 0
      %3637 = vmatpush1.bf16.msra.mxu0 %v3608
      %3638 = vmatprep.subr.bf16.mxu0 0
      %3639 = vmatpush1.bf16.msra.mxu0 %v3609
      %3640 = vmatprep.subr.bf16.mxu0 0
      %3641 = vmatpush1.bf16.msra.mxu0 0
      %3642 = vmatprep.subr.bf16.mxu0 0
      %3643 = vmatpush1.bf16.msra.mxu0 0
      %3644 = vmatprep.subr.bf16.mxu0 0
      %3645 = vmatpush1.bf16.msra.mxu0 0
      %3646 = vmatprep.subr.bf16.mxu0 0
      %3647 = vmatpush1.bf16.msra.mxu0 0
      %3648 = vmatprep.subr.bf16.mxu0 0
      %3649 = vmatpush1.bf16.msra.mxu0 0
      %3650 = vmatprep.subr.bf16.mxu0 0
      %3651 = vmatpush1.bf16.msra.mxu0 0
      %3652 = vmatprep.subr.bf16.mxu0 0
      %3653 = vmatpush1.bf16.msra.mxu0 0
      %3654 = vmatprep.subr.bf16.mxu0 0
      %3655 = vmatpush1.bf16.msra.mxu0 0
      %3656 = vmatprep.subr.bf16.mxu0 0
      %3657 = vmatpush1.bf16.msra.mxu0 0
      %3658 = vmatprep.subr.bf16.mxu0 0
      %3659 = vmatpush1.bf16.msra.mxu0 0
      %3660 = vmatprep.subr.bf16.mxu0 0
      %3661 = vmatpush1.bf16.msra.mxu0 0
      %3662 = vmatprep.subr.bf16.mxu0 0
      %3663 = vmatpush1.bf16.msra.mxu0 0
      %3664 = vmatprep.subr.bf16.mxu0 0
      %3665 = vmatpush1.bf16.msra.mxu0 0
      %3666 = vmatprep.subr.bf16.mxu0 0
      %3667 = vmatpush1.bf16.msra.mxu0 0
      %3668 = vmatprep.mubr.bf16.mxu0 0
      %3669 = vmatmul.mubr.bf16.gmra.mrb[0].mxu0 %v3613
      %v3670 = vpop.f32.mrb[0].mxu0
      %v3671 = vadd.f32 %v3598, %v3670
      %v3672 = vpop.f32.mrb[0].mxu0
      %v3673 = vpop.f32.mrb[0].mxu0
      %v3674 = vadd.f32 %v3598, %v3673
      %v3675 = vpop.f32.mrb[0].mxu0
      %3676 = vmatprep.mubr.bf16.mxu0 0
      %3677 = vmatmul.mubr.bf16.gmra.mrb[0].mxu0 %v3616
      %v3678 = vpop.f32.mrb[0].mxu0
      %v3679 = vadd.f32 %v3598, %v3678
      %v3680 = vpop.f32.mrb[0].mxu0
      %v3681 = vpop.f32.mrb[0].mxu0
      %v3682 = vadd.f32 %v3598, %v3681
      %v3683 = vpop.f32.mrb[0].mxu0
      %3684 = vmatprep.mubr.bf16.mxu0 0
      %3685 = vmatmul.mubr.bf16.gmra.mrb[0].mxu0 %v3619
      %v3686 = vpop.f32.mrb[0].mxu0
      %v3687 = vadd.f32 %v3598, %v3686
      %v3688 = vpop.f32.mrb[0].mxu0
      %v3689 = vpop.f32.mrb[0].mxu0
      %v3690 = vadd.f32 %v3598, %v3689
      %v3691 = vpop.f32.mrb[0].mxu0
      %3692 = vmatprep.mubr.bf16.mxu0 0
      %3693 = vmatmul.mubr.bf16.gmra.mrb[0].mxu0 %v3622
      %v3694 = vpop.f32.mrb[0].mxu0
      %v3695 = vadd.f32 %v3598, %v3694
      %v3696 = vpop.f32.mrb[0].mxu0
      %v3697 = vpop.f32.mrb[0].mxu0
      %v3698 = vadd.f32 %v3598, %v3697
      %v3699 = vpop.f32.mrb[0].mxu0
      %3700 = vmatprep.mubr.bf16.mxu0 0
      %3701 = vmatmul.mubr.bf16.gmra.mrb[0].mxu0 %v3625
      %v3702 = vpop.f32.mrb[0].mxu0
      %v3703 = vadd.f32 %v3598, %v3702
      %v3704 = vpop.f32.mrb[0].mxu0
      %v3705 = vpop.f32.mrb[0].mxu0
      %v3706 = vadd.f32 %v3598, %v3705
      %v3707 = vpop.f32.mrb[0].mxu0
      %3708 = vmatprep.mubr.bf16.mxu0 0
      %3709 = vmatmul.mubr.bf16.gmra.mrb[0].mxu0 %v3628
      %v3710 = vpop.f32.mrb[0].mxu0
      %v3711 = vadd.f32 %v3598, %v3710
      %v3712 = vpop.f32.mrb[0].mxu0
      %v3713 = vpop.f32.mrb[0].mxu0
      %v3714 = vadd.f32 %v3598, %v3713
      %v3715 = vpop.f32.mrb[0].mxu0
      %3716 = vmatprep.mubr.bf16.mxu0 0
      %3717 = vmatmul.mubr.bf16.gmra.mrb[0].mxu0 %v3631
      %v3718 = vpop.f32.mrb[0].mxu0
      %v3719 = vadd.f32 %v3598, %v3718
      %v3720 = vpop.f32.mrb[0].mxu0
      %v3721 = vpop.f32.mrb[0].mxu0
      %v3722 = vadd.f32 %v3598, %v3721
      %v3723 = vpop.f32.mrb[0].mxu0
      %3724 = vmatprep.mubr.bf16.mxu0 0
      %3725 = vmatmul.mubr.bf16.gmra.mrb[0].mxu0 %v3634
      %v3726 = vpop.f32.mrb[0].mxu0
      %v3727 = vadd.f32 %v3598, %v3726
      %v3728 = vpop.f32.mrb[0].mxu0
      %v3729 = vpop.f32.mrb[0].mxu0
      %v3730 = vadd.f32 %v3598, %v3729
      %v3731 = vpop.f32.mrb[0].mxu0
      %3732 = vdwg.mxu0
      %v3733 = vmax.f32 %v3671, 0.0
      %v3734 = vmax.f32 %v3674, 0.0
      %v3735 = vmax.f32 %v3679, 0.0
      %v3736 = vmax.f32 %v3682, 0.0
      %v3737 = vmax.f32 %v3687, 0.0
      %v3738 = vmax.f32 %v3690, 0.0
      %v3739 = vmax.f32 %v3695, 0.0
      %v3740 = vmax.f32 %v3698, 0.0
      %v3741 = vmax.f32 %v3703, 0.0
      %v3742 = vmax.f32 %v3706, 0.0
      %v3743 = vmax.f32 %v3711, 0.0
      %v3744 = vmax.f32 %v3714, 0.0
      %v3745 = vmax.f32 %v3719, 0.0
      %v3746 = vmax.f32 %v3722, 0.0
      %v3747 = vmax.f32 %v3727, 0.0
      %v3748 = vmax.f32 %v3730, 0.0
      %v3749 = vpack.c.bf16 %v3734, %v3733
      %v3750 = vpack.c.bf16 %v3736, %v3735
      %v3751 = vpack.c.bf16 %v3738, %v3737
      %v3752 = vpack.c.bf16 %v3740, %v3739
      %v3753 = vpack.c.bf16 %v3742, %v3741
      %v3754 = vpack.c.bf16 %v3744, %v3743
      %v3755 = vpack.c.bf16 %v3746, %v3745
      %v3756 = vpack.c.bf16 %v3748, %v3747
      %v3757 = vld [vmem:[%s659] sm:$0xf]
      %v3758 = vld [vmem:[%s659 + $0x4] sm:$0xf]
      %v3759 = vld [vmem:[%s659 + $0x8] sm:$0xf]
      %v3760 = vld [vmem:[%s659 + $0xc] sm:$0xf]
      %v3761 = vld [vmem:[%s659 + $0x10] sm:$0xf]
      %v3762 = vld [vmem:[%s659 + $0x14] sm:$0xf]
      %v3763 = vld [vmem:[%s659 + $0x18] sm:$0xf]
      %v3764 = vld [vmem:[%s659 + $0x1c] sm:$0xf]
      %v3765 = vld [vmem:[%s662] sm:$0x1]
      %v3767 = vlaneseq
      %v3768 = vshrl.u32 %v3767, 7
      %v3769 = vsub.s32 0, %v3768
      %v3770 = vrot.slane %v3765, %v3769
      %v3780 = vunpack.c.l.b16 %v3757
      %v3781 = vunpack.c.l.b16 %v3758
      %v3782 = vunpack.c.l.b16 %v3759
      %v3783 = vunpack.c.l.b16 %v3760
      %v3784 = vunpack.c.l.b16 %v3761
      %v3785 = vunpack.c.l.b16 %v3762
      %v3786 = vunpack.c.l.b16 %v3763
      %v3787 = vunpack.c.l.b16 %v3764
      %v3788 = vpack.c.b16 %v3781, %v3780
      %v3789 = vpack.c.b16 %v3783, %v3782
      %v3790 = vpack.c.b16 %v3785, %v3784
      %v3791 = vpack.c.b16 %v3787, %v3786
      %vm3796 = vcmask 523264
      %v3798 = vsel %vm3796, %v3749, 0
      %v3801 = vsel %vm3796, %v3750, 0
      %v3804 = vsel %vm3796, %v3751, 0
      %v3807 = vsel %vm3796, %v3752, 0
      %v3810 = vsel %vm3796, %v3753, 0
      %v3813 = vsel %vm3796, %v3754, 0
      %v3816 = vsel %vm3796, %v3755, 0
      %v3819 = vsel %vm3796, %v3756, 0
      %3821 = vmatprep.subr.bf16.mxu0 0
      %3822 = vmatpush1.bf16.msra.mxu0 %v3788
      %3823 = vmatprep.subr.bf16.mxu0 0
      %3824 = vmatpush1.bf16.msra.mxu0 %v3789
      %3825 = vmatprep.subr.bf16.mxu0 0
      %3826 = vmatpush1.bf16.msra.mxu0 %v3790
      %3827 = vmatprep.subr.bf16.mxu0 0
      %3828 = vmatpush1.bf16.msra.mxu0 %v3791
      %3829 = vmatprep.subr.bf16.mxu0 0
      %3830 = vmatpush1.bf16.msra.mxu0 0
      %3831 = vmatprep.subr.bf16.mxu0 0
      %3832 = vmatpush1.bf16.msra.mxu0 0
      %3833 = vmatprep.subr.bf16.mxu0 0
      %3834 = vmatpush1.bf16.msra.mxu0 0
      %3835 = vmatprep.subr.bf16.mxu0 0
      %3836 = vmatpush1.bf16.msra.mxu0 0
      %3837 = vmatprep.subr.bf16.mxu0 0
      %3838 = vmatpush1.bf16.msra.mxu0 0
      %3839 = vmatprep.subr.bf16.mxu0 0
      %3840 = vmatpush1.bf16.msra.mxu0 0
      %3841 = vmatprep.subr.bf16.mxu0 0
      %3842 = vmatpush1.bf16.msra.mxu0 0
      %3843 = vmatprep.subr.bf16.mxu0 0
      %3844 = vmatpush1.bf16.msra.mxu0 0
      %3845 = vmatprep.subr.bf16.mxu0 0
      %3846 = vmatpush1.bf16.msra.mxu0 0
      %3847 = vmatprep.subr.bf16.mxu0 0
      %3848 = vmatpush1.bf16.msra.mxu0 0
      %3849 = vmatprep.subr.bf16.mxu0 0
      %3850 = vmatpush1.bf16.msra.mxu0 0
      %3851 = vmatprep.subr.bf16.mxu0 0
      %3852 = vmatpush1.bf16.msra.mxu0 0
      %3853 = vmatprep.mubr.bf16.mxu0 0
      %3854 = vmatmul.mubr.bf16.gmra.mrb[0].mxu0 %v3798
      %v3855 = vpop.f32.mrb[0].mxu0
      %v3856 = vadd.f32 %v3770, %v3855
      %v3857 = vpop.f32.mrb[0].mxu0
      %v3858 = vpop.f32.mrb[0].mxu0
      %v3859 = vadd.f32 %v3770, %v3858
      %v3860 = vpop.f32.mrb[0].mxu0
      %3861 = vmatprep.mubr.bf16.mxu0 0
      %3862 = vmatmul.mubr.bf16.gmra.mrb[0].mxu0 %v3801
      %v3863 = vpop.f32.mrb[0].mxu0
      %v3864 = vadd.f32 %v3770, %v3863
      %v3865 = vpop.f32.mrb[0].mxu0
      %v3866 = vpop.f32.mrb[0].mxu0
      %v3867 = vadd.f32 %v3770, %v3866
      %v3868 = vpop.f32.mrb[0].mxu0
      %3869 = vmatprep.mubr.bf16.mxu0 0
      %3870 = vmatmul.mubr.bf16.gmra.mrb[0].mxu0 %v3804
      %v3871 = vpop.f32.mrb[0].mxu0
      %v3872 = vadd.f32 %v3770, %v3871
      %v3873 = vpop.f32.mrb[0].mxu0
      %v3874 = vpop.f32.mrb[0].mxu0
      %v3875 = vadd.f32 %v3770, %v3874
      %v3876 = vpop.f32.mrb[0].mxu0
      %3877 = vmatprep.mubr.bf16.mxu0 0
      %3878 = vmatmul.mubr.bf16.gmra.mrb[0].mxu0 %v3807
      %v3879 = vpop.f32.mrb[0].mxu0
      %v3880 = vadd.f32 %v3770, %v3879
      %v3881 = vpop.f32.mrb[0].mxu0
      %v3882 = vpop.f32.mrb[0].mxu0
      %v3883 = vadd.f32 %v3770, %v3882
      %v3884 = vpop.f32.mrb[0].mxu0
      %3885 = vmatprep.mubr.bf16.mxu0 0
      %3886 = vmatmul.mubr.bf16.gmra.mrb[0].mxu0 %v3810
      %v3887 = vpop.f32.mrb[0].mxu0
      %v3888 = vadd.f32 %v3770, %v3887
      %v3889 = vpop.f32.mrb[0].mxu0
      %v3890 = vpop.f32.mrb[0].mxu0
      %v3891 = vadd.f32 %v3770, %v3890
      %v3892 = vpop.f32.mrb[0].mxu0
      %3893 = vmatprep.mubr.bf16.mxu0 0
      %3894 = vmatmul.mubr.bf16.gmra.mrb[0].mxu0 %v3813
      %v3895 = vpop.f32.mrb[0].mxu0
      %v3896 = vadd.f32 %v3770, %v3895
      %v3897 = vpop.f32.mrb[0].mxu0
      %v3898 = vpop.f32.mrb[0].mxu0
      %v3899 = vadd.f32 %v3770, %v3898
      %v3900 = vpop.f32.mrb[0].mxu0
      %3901 = vmatprep.mubr.bf16.mxu0 0
      %3902 = vmatmul.mubr.bf16.gmra.mrb[0].mxu0 %v3816
      %v3903 = vpop.f32.mrb[0].mxu0
      %v3904 = vadd.f32 %v3770, %v3903
      %v3905 = vpop.f32.mrb[0].mxu0
      %v3906 = vpop.f32.mrb[0].mxu0
      %v3907 = vadd.f32 %v3770, %v3906
      %v3908 = vpop.f32.mrb[0].mxu0
      %3909 = vmatprep.mubr.bf16.mxu0 0
      %3910 = vmatmul.mubr.bf16.gmra.mrb[0].mxu0 %v3819
      %v3911 = vpop.f32.mrb[0].mxu0
      %v3912 = vadd.f32 %v3770, %v3911
      %v3913 = vpop.f32.mrb[0].mxu0
      %v3914 = vpop.f32.mrb[0].mxu0
      %v3915 = vadd.f32 %v3770, %v3914
      %v3916 = vpop.f32.mrb[0].mxu0
      %3917 = vdwg.mxu0
      %v3918 = vadd.f32 %v3565, %v3856
      %v3919 = vadd.f32 %v3566, %v3859
      %v3920 = vadd.f32 %v3567, %v3864
      %v3921 = vadd.f32 %v3568, %v3867
      %v3922 = vadd.f32 %v3569, %v3872
      %v3923 = vadd.f32 %v3570, %v3875
      %v3924 = vadd.f32 %v3571, %v3880
      %v3925 = vadd.f32 %v3572, %v3883
      %v3926 = vadd.f32 %v3573, %v3888
      %v3927 = vadd.f32 %v3574, %v3891
      %v3928 = vadd.f32 %v3575, %v3896
      %v3929 = vadd.f32 %v3576, %v3899
      %v3930 = vadd.f32 %v3577, %v3904
      %v3931 = vadd.f32 %v3578, %v3907
      %v3932 = vadd.f32 %v3579, %v3912
      %v3933 = vadd.f32 %v3580, %v3915
      %v3934 = vld [vmem:[%s665] sm:$0x1]
      %v3935 = vld [vmem:[%s668] sm:$0x1]
      %v3936 = vsel %vm760, %v3918, 0.0
      %3937 = vadd.xlane.f32.xlu0 %v3936
      %v3938 = vpop.xlane.xlu0 %3937
      %v3939 = vsel %vm760, %v3919, 0.0
      %3940 = vadd.xlane.f32.xlu0 %v3939
      %v3941 = vpop.xlane.xlu0 %3940
      %v3942 = vsel %vm760, %v3920, 0.0
      %3943 = vadd.xlane.f32.xlu0 %v3942
      %v3944 = vpop.xlane.xlu0 %3943
      %v3945 = vsel %vm760, %v3921, 0.0
      %3946 = vadd.xlane.f32.xlu0 %v3945
      %v3947 = vpop.xlane.xlu0 %3946
      %v3948 = vsel %vm760, %v3922, 0.0
      %3949 = vadd.xlane.f32.xlu0 %v3948
      %v3950 = vpop.xlane.xlu0 %3949
      %v3951 = vsel %vm760, %v3923, 0.0
      %3952 = vadd.xlane.f32.xlu0 %v3951
      %v3953 = vpop.xlane.xlu0 %3952
      %v3954 = vsel %vm760, %v3924, 0.0
      %3955 = vadd.xlane.f32.xlu0 %v3954
      %v3956 = vpop.xlane.xlu0 %3955
      %v3957 = vsel %vm760, %v3925, 0.0
      %3958 = vadd.xlane.f32.xlu0 %v3957
      %v3959 = vpop.xlane.xlu0 %3958
      %v3960 = vsel %vm760, %v3926, 0.0
      %3961 = vadd.xlane.f32.xlu0 %v3960
      %v3962 = vpop.xlane.xlu0 %3961
      %v3963 = vsel %vm760, %v3927, 0.0
      %3964 = vadd.xlane.f32.xlu0 %v3963
      %v3965 = vpop.xlane.xlu0 %3964
      %v3966 = vsel %vm760, %v3928, 0.0
      %3967 = vadd.xlane.f32.xlu0 %v3966
      %v3968 = vpop.xlane.xlu0 %3967
      %v3969 = vsel %vm760, %v3929, 0.0
      %3970 = vadd.xlane.f32.xlu0 %v3969
      %v3971 = vpop.xlane.xlu0 %3970
      %v3972 = vsel %vm760, %v3930, 0.0
      %3973 = vadd.xlane.f32.xlu0 %v3972
      %v3974 = vpop.xlane.xlu0 %3973
      %v3975 = vsel %vm760, %v3931, 0.0
      %3976 = vadd.xlane.f32.xlu0 %v3975
      %v3977 = vpop.xlane.xlu0 %3976
      %v3978 = vsel %vm760, %v3932, 0.0
      %3979 = vadd.xlane.f32.xlu0 %v3978
      %v3980 = vpop.xlane.xlu0 %3979
      %v3981 = vsel %vm760, %v3933, 0.0
      %3982 = vadd.xlane.f32.xlu0 %v3981
      %v3983 = vpop.xlane.xlu0 %3982
      %v3984 = vmul.f32 %v3938, %v3376
      %v3985 = vmul.f32 %v3941, %v3376
      %v3986 = vmul.f32 %v3944, %v3376
      %v3987 = vmul.f32 %v3947, %v3376
      %v3988 = vmul.f32 %v3950, %v3376
      %v3989 = vmul.f32 %v3953, %v3376
      %v3990 = vmul.f32 %v3956, %v3376
      %v3991 = vmul.f32 %v3959, %v3376
      %v3992 = vmul.f32 %v3962, %v3376
      %v3993 = vmul.f32 %v3965, %v3376
      %v3994 = vmul.f32 %v3968, %v3376
      %v3995 = vmul.f32 %v3971, %v3376
      %v3996 = vmul.f32 %v3974, %v3376
      %v3997 = vmul.f32 %v3977, %v3376
      %v3998 = vmul.f32 %v3980, %v3376
      %v3999 = vmul.f32 %v3983, %v3376
      %v4000 = vsub.f32 %v3918, %v3984
      %v4001 = vsub.f32 %v3919, %v3985
      %v4002 = vsub.f32 %v3920, %v3986
      %v4003 = vsub.f32 %v3921, %v3987
      %v4004 = vsub.f32 %v3922, %v3988
      %v4005 = vsub.f32 %v3923, %v3989
      %v4006 = vsub.f32 %v3924, %v3990
      %v4007 = vsub.f32 %v3925, %v3991
      %v4008 = vsub.f32 %v3926, %v3992
      %v4009 = vsub.f32 %v3927, %v3993
      %v4010 = vsub.f32 %v3928, %v3994
      %v4011 = vsub.f32 %v3929, %v3995
      %v4012 = vsub.f32 %v3930, %v3996
      %v4013 = vsub.f32 %v3931, %v3997
      %v4014 = vsub.f32 %v3932, %v3998
      %v4015 = vsub.f32 %v3933, %v3999
      %v4016 = vmul.f32 %v4000, %v4000
      %v4017 = vmul.f32 %v4001, %v4001
      %v4018 = vmul.f32 %v4002, %v4002
      %v4019 = vmul.f32 %v4003, %v4003
      %v4020 = vmul.f32 %v4004, %v4004
      %v4021 = vmul.f32 %v4005, %v4005
      %v4022 = vmul.f32 %v4006, %v4006
      %v4023 = vmul.f32 %v4007, %v4007
      %v4024 = vmul.f32 %v4008, %v4008
      %v4025 = vmul.f32 %v4009, %v4009
      %v4026 = vmul.f32 %v4010, %v4010
      %v4027 = vmul.f32 %v4011, %v4011
      %v4028 = vmul.f32 %v4012, %v4012
      %v4029 = vmul.f32 %v4013, %v4013
      %v4030 = vmul.f32 %v4014, %v4014
      %v4031 = vmul.f32 %v4015, %v4015
      %v4032 = vsel %vm760, %v4016, 0.0
      %4033 = vadd.xlane.f32.xlu0 %v4032
      %v4034 = vpop.xlane.xlu0 %4033
      %v4035 = vsel %vm760, %v4017, 0.0
      %4036 = vadd.xlane.f32.xlu0 %v4035
      %v4037 = vpop.xlane.xlu0 %4036
      %v4038 = vsel %vm760, %v4018, 0.0
      %4039 = vadd.xlane.f32.xlu0 %v4038
      %v4040 = vpop.xlane.xlu0 %4039
      %v4041 = vsel %vm760, %v4019, 0.0
      %4042 = vadd.xlane.f32.xlu0 %v4041
      %v4043 = vpop.xlane.xlu0 %4042
      %v4044 = vsel %vm760, %v4020, 0.0
      %4045 = vadd.xlane.f32.xlu0 %v4044
      %v4046 = vpop.xlane.xlu0 %4045
      %v4047 = vsel %vm760, %v4021, 0.0
      %4048 = vadd.xlane.f32.xlu0 %v4047
      %v4049 = vpop.xlane.xlu0 %4048
      %v4050 = vsel %vm760, %v4022, 0.0
      %4051 = vadd.xlane.f32.xlu0 %v4050
      %v4052 = vpop.xlane.xlu0 %4051
      %v4053 = vsel %vm760, %v4023, 0.0
      %4054 = vadd.xlane.f32.xlu0 %v4053
      %v4055 = vpop.xlane.xlu0 %4054
      %v4056 = vsel %vm760, %v4024, 0.0
      %4057 = vadd.xlane.f32.xlu0 %v4056
      %v4058 = vpop.xlane.xlu0 %4057
      %v4059 = vsel %vm760, %v4025, 0.0
      %4060 = vadd.xlane.f32.xlu0 %v4059
      %v4061 = vpop.xlane.xlu0 %4060
      %v4062 = vsel %vm760, %v4026, 0.0
      %4063 = vadd.xlane.f32.xlu0 %v4062
      %v4064 = vpop.xlane.xlu0 %4063
      %v4065 = vsel %vm760, %v4027, 0.0
      %4066 = vadd.xlane.f32.xlu0 %v4065
      %v4067 = vpop.xlane.xlu0 %4066
      %v4068 = vsel %vm760, %v4028, 0.0
      %4069 = vadd.xlane.f32.xlu0 %v4068
      %v4070 = vpop.xlane.xlu0 %4069
      %v4071 = vsel %vm760, %v4029, 0.0
      %4072 = vadd.xlane.f32.xlu0 %v4071
      %v4073 = vpop.xlane.xlu0 %4072
      %v4074 = vsel %vm760, %v4030, 0.0
      %4075 = vadd.xlane.f32.xlu0 %v4074
      %v4076 = vpop.xlane.xlu0 %4075
      %v4077 = vsel %vm760, %v4031, 0.0
      %4078 = vadd.xlane.f32.xlu0 %v4077
      %v4079 = vpop.xlane.xlu0 %4078
      %v4080 = vmul.f32 %v4034, %v3376
      %v4081 = vmul.f32 %v4037, %v3376
      %v4082 = vmul.f32 %v4040, %v3376
      %v4083 = vmul.f32 %v4043, %v3376
      %v4084 = vmul.f32 %v4046, %v3376
      %v4085 = vmul.f32 %v4049, %v3376
      %v4086 = vmul.f32 %v4052, %v3376
      %v4087 = vmul.f32 %v4055, %v3376
      %v4088 = vmul.f32 %v4058, %v3376
      %v4089 = vmul.f32 %v4061, %v3376
      %v4090 = vmul.f32 %v4064, %v3376
      %v4091 = vmul.f32 %v4067, %v3376
      %v4092 = vmul.f32 %v4070, %v3376
      %v4093 = vmul.f32 %v4073, %v3376
      %v4094 = vmul.f32 %v4076, %v3376
      %v4095 = vmul.f32 %v4079, %v3376
      %v4096 = vadd.f32 %v4080, 1e-05
      %v4097 = vadd.f32 %v4081, 1e-05
      %v4098 = vadd.f32 %v4082, 1e-05
      %v4099 = vadd.f32 %v4083, 1e-05
      %v4100 = vadd.f32 %v4084, 1e-05
      %v4101 = vadd.f32 %v4085, 1e-05
      %v4102 = vadd.f32 %v4086, 1e-05
      %v4103 = vadd.f32 %v4087, 1e-05
      %v4104 = vadd.f32 %v4088, 1e-05
      %v4105 = vadd.f32 %v4089, 1e-05
      %v4106 = vadd.f32 %v4090, 1e-05
      %v4107 = vadd.f32 %v4091, 1e-05
      %v4108 = vadd.f32 %v4092, 1e-05
      %v4109 = vadd.f32 %v4093, 1e-05
      %v4110 = vadd.f32 %v4094, 1e-05
      %v4111 = vadd.f32 %v4095, 1e-05
      %v4112 = vrsqrt.pop %v4096
      %v4113 = vrsqrt.pop %v4097
      %v4114 = vrsqrt.pop %v4098
      %v4115 = vrsqrt.pop %v4099
      %v4116 = vrsqrt.pop %v4100
      %v4117 = vrsqrt.pop %v4101
      %v4118 = vrsqrt.pop %v4102
      %v4119 = vrsqrt.pop %v4103
      %v4120 = vrsqrt.pop %v4104
      %v4121 = vrsqrt.pop %v4105
      %v4122 = vrsqrt.pop %v4106
      %v4123 = vrsqrt.pop %v4107
      %v4124 = vrsqrt.pop %v4108
      %v4125 = vrsqrt.pop %v4109
      %v4126 = vrsqrt.pop %v4110
      %v4127 = vrsqrt.pop %v4111
      %v4128 = vmul.f32 %v4000, %v4112
      %v4129 = vmul.f32 %v4001, %v4113
      %v4130 = vmul.f32 %v4002, %v4114
      %v4131 = vmul.f32 %v4003, %v4115
      %v4132 = vmul.f32 %v4004, %v4116
      %v4133 = vmul.f32 %v4005, %v4117
      %v4134 = vmul.f32 %v4006, %v4118
      %v4135 = vmul.f32 %v4007, %v4119
      %v4136 = vmul.f32 %v4008, %v4120
      %v4137 = vmul.f32 %v4009, %v4121
      %v4138 = vmul.f32 %v4010, %v4122
      %v4139 = vmul.f32 %v4011, %v4123
      %v4140 = vmul.f32 %v4012, %v4124
      %v4141 = vmul.f32 %v4013, %v4125
      %v4142 = vmul.f32 %v4014, %v4126
      %v4143 = vmul.f32 %v4015, %v4127
      %v4145 = vlaneseq
      %v4146 = vshrl.u32 %v4145, 7
      %v4147 = vsub.s32 0, %v4146
      %v4148 = vrot.slane %v3934, %v4147
      %v4150 = vmul.f32 %v4128, %v4148
      %v4151 = vmul.f32 %v4129, %v4148
      %v4152 = vmul.f32 %v4130, %v4148
      %v4153 = vmul.f32 %v4131, %v4148
      %v4154 = vmul.f32 %v4132, %v4148
      %v4155 = vmul.f32 %v4133, %v4148
      %v4156 = vmul.f32 %v4134, %v4148
      %v4157 = vmul.f32 %v4135, %v4148
      %v4158 = vmul.f32 %v4136, %v4148
      %v4159 = vmul.f32 %v4137, %v4148
      %v4160 = vmul.f32 %v4138, %v4148
      %v4161 = vmul.f32 %v4139, %v4148
      %v4162 = vmul.f32 %v4140, %v4148
      %v4163 = vmul.f32 %v4141, %v4148
      %v4164 = vmul.f32 %v4142, %v4148
      %v4165 = vmul.f32 %v4143, %v4148
      %v4167 = vlaneseq
      %v4168 = vshrl.u32 %v4167, 7
      %v4169 = vsub.s32 0, %v4168
      %v4170 = vrot.slane %v3935, %v4169
      %v4172 = vadd.f32 %v4150, %v4170
      %v4173 = vadd.f32 %v4151, %v4170
      %v4174 = vadd.f32 %v4152, %v4170
      %v4175 = vadd.f32 %v4153, %v4170
      %v4176 = vadd.f32 %v4154, %v4170
      %v4177 = vadd.f32 %v4155, %v4170
      %v4178 = vadd.f32 %v4156, %v4170
      %v4179 = vadd.f32 %v4157, %v4170
      %v4180 = vadd.f32 %v4158, %v4170
      %v4181 = vadd.f32 %v4159, %v4170
      %v4182 = vadd.f32 %v4160, %v4170
      %v4183 = vadd.f32 %v4161, %v4170
      %v4184 = vadd.f32 %v4162, %v4170
      %v4185 = vadd.f32 %v4163, %v4170
      %v4186 = vadd.f32 %v4164, %v4170
      %v4187 = vadd.f32 %v4165, %v4170
      %4188 = vst.msk [vmem:[#allocation2] sm:$0xff] %vm760, %v4172
      %4189 = vst.msk [vmem:[#allocation2 + $0x8] sm:$0xff] %vm760, %v4173
      %4190 = vst.msk [vmem:[#allocation2 + $0x10] sm:$0xff] %vm760, %v4174
      %4191 = vst.msk [vmem:[#allocation2 + $0x18] sm:$0xff] %vm760, %v4175
      %4192 = vst.msk [vmem:[#allocation2 + $0x20] sm:$0xff] %vm760, %v4176
      %4193 = vst.msk [vmem:[#allocation2 + $0x28] sm:$0xff] %vm760, %v4177
      %4194 = vst.msk [vmem:[#allocation2 + $0x30] sm:$0xff] %vm760, %v4178
      %4195 = vst.msk [vmem:[#allocation2 + $0x38] sm:$0xff] %vm760, %v4179
      %4196 = vst.msk [vmem:[#allocation2 + $0x40] sm:$0xff] %vm760, %v4180
      %4197 = vst.msk [vmem:[#allocation2 + $0x48] sm:$0xff] %vm760, %v4181
      %4198 = vst.msk [vmem:[#allocation2 + $0x50] sm:$0xff] %vm760, %v4182
      %4199 = vst.msk [vmem:[#allocation2 + $0x58] sm:$0xff] %vm760, %v4183
      %4200 = vst.msk [vmem:[#allocation2 + $0x60] sm:$0xff] %vm760, %v4184
      %4201 = vst.msk [vmem:[#allocation2 + $0x68] sm:$0xff] %vm760, %v4185
      %4202 = vst.msk [vmem:[#allocation2 + $0x70] sm:$0xff] %vm760, %v4186
      %4203 = vst.msk [vmem:[#allocation2 + $0x78] sm:$0xff] %vm760, %v4187
      %p4204 = scmp.eq.s32.totalorder %s30, 1
      // Predicated region
      $region81: #{context_transformer_forward.3} parent=75 // pred_check
        %p4205 = pneg %p4204
      $region82: #{context_transformer_forward.3} parent=75 // pred_check_branch
        %4207 = sbr.rel (%p4205) target = $region84
      $region83: #{context_transformer_forward.3} parent=75 // pred_region
        %4208 = vst.msk [vmem:[%s673] sm:$0xff] %vm760, %v4172
        %4209 = vst.msk [vmem:[%s673 + $0x8] sm:$0xff] %vm760, %v4173
        %4210 = vst.msk [vmem:[%s673 + $0x10] sm:$0xff] %vm760, %v4174
        %4211 = vst.msk [vmem:[%s673 + $0x18] sm:$0xff] %vm760, %v4175
        %4212 = vst.msk [vmem:[%s673 + $0x20] sm:$0xff] %vm760, %v4176
        %4213 = vst.msk [vmem:[%s673 + $0x28] sm:$0xff] %vm760, %v4177
        %4214 = vst.msk [vmem:[%s673 + $0x30] sm:$0xff] %vm760, %v4178
        %4215 = vst.msk [vmem:[%s673 + $0x38] sm:$0xff] %vm760, %v4179
        %4216 = vst.msk [vmem:[%s673 + $0x40] sm:$0xff] %vm760, %v4180
        %4217 = vst.msk [vmem:[%s673 + $0x48] sm:$0xff] %vm760, %v4181
        %4218 = vst.msk [vmem:[%s673 + $0x50] sm:$0xff] %vm760, %v4182
        %4219 = vst.msk [vmem:[%s673 + $0x58] sm:$0xff] %vm760, %v4183
        %4220 = vst.msk [vmem:[%s673 + $0x60] sm:$0xff] %vm760, %v4184
        %4221 = vst.msk [vmem:[%s673 + $0x68] sm:$0xff] %vm760, %v4185
        %4222 = vst.msk [vmem:[%s673 + $0x70] sm:$0xff] %vm760, %v4186
        %4223 = vst.msk [vmem:[%s673 + $0x78] sm:$0xff] %vm760, %v4187
      $region84: #{context_transformer_forward.3} parent=75 // pred_fallthru
        _
      %s4224 = smul.u32 16, %s29
      %p4225 = scmp.lt.s32.totalorder %s4224, 31
      %s4226 = scalar_select %p4225, %s4224, 31
      %s4227 = smul.addr %s4226, 8
      %s4228 = scalar_lea.vmem %s14, %s4227
      // Predicated region
      $region85: #{context_transformer_forward.3} parent=75 // pred_check
        %p4229 = pneg %p414
      $region86: #{context_transformer_forward.3} parent=75 // pred_check_branch
        %4231 = sbr.rel (%p4229) target = $region88
      $region87: #{context_transformer_forward.3} parent=75 // pred_region
        %s4232 = smul.u32 16, %s29
      $region88: #{context_transformer_forward.3} parent=75 // pred_fallthru
        _
    $region76: #{context_transformer_forward.3} parent=5 // pred_fallthru
      _
    %p4233 = scmp.le.s32.totalorder 2, %s20
    // Predicated region
    $region89: #{context_transformer_forward.3} parent=5 // pred_check
      %p4234 = pneg %p4233
    $region90: #{context_transformer_forward.3} parent=5 // pred_check_branch
      %4236 = sbr.rel (%p4234) target = $region92
    $region91: #{context_transformer_forward.3} parent=5 // pred_region
      %s4237 = ssub.s32 %s20, 2
      // Predicated region
      $region93: #{context_transformer_forward.3} parent=91 // pred_check
        %p4238 = pneg %p420
      $region94: #{context_transformer_forward.3} parent=91 // pred_check_branch
        %4240 = sbr.rel (%p4238) target = $region96
      $region95: #{context_transformer_forward.3} parent=91 // pred_region
        %s4241 = smul.u32 16, %s31
        %p4242 = scmp.lt.s32.totalorder %s4241, 31
        %s4243 = scalar_select %p4242, %s4241, 31
        %s4244 = smul.addr %s4243, 8
        %s4245 = scalar_lea.vmem %s14, %s4244
      $region96: #{context_transformer_forward.3} parent=91 // pred_fallthru
        _
    $region92: #{context_transformer_forward.3} parent=5 // pred_fallthru
      _
  $region6: #{context_transformer_forward.3} parent=0 // loop_footer
    %s24 = sadd.s32 1, %s20
  $region7: #{context_transformer_forward.3} parent=0 // loop_footer_branch
    %19 = sbr.rel target = $region3
  $region8: #{context_transformer_forward.3} parent=0 // loop_exit
    _

</llo_original>
